<compile_context>
chip_gen: v5e
topology: v5e:2x2
jax: 0.10.0
libtpu: 0.0.40
codegen_flags: <defaults>
</compile_context>

<pallas_src>
import math

import jax
import jax.numpy as jnp
from jax.experimental import pallas as pl
from jax.experimental.pallas import tpu as pltpu

# ----------------------------- small configs --------------------------------
B = 2                          # batch
C_IN = 3                       # image channels
IMG = 16                       # image H = W
PATCH = 4                      # latent "downsample" -> 4x4 = 16 tokens
S = (IMG // PATCH) ** 2        # num_image_tokens = 16
BS = B * S                     # rows processed per kernel invocation = 32
P = C_IN * PATCH * PATCH       # flattened patch features = 48
D = 32                         # codebook / transformer hidden dim
K = 1024                       # num_codebook_vectors
MASK_TOKEN = 1024              # literal 1024 used in MaskGit.forward
NUM_CLASSES = K + 1            # transformer vocab (codebook + mask token) = 1025
V_PAD = 1152                   # 9*128: lane-dense padded head / embedding width
HEADS = 4
HEAD_DIM = D // HEADS
MLP = 4 * D
LAYERS = 2
LN_EPS = 1e-5
VQ_CHUNK = 256                 # lane chunk for the VQ argmin loop

# packed per-layer params: (L, 8, 128), one parameter per sublane row, lane 0.
ROW_LN1G, ROW_LN1B, ROW_BQKV, ROW_BO = 0, 1, 2, 3
ROW_LN2G, ROW_LN2B, ROW_B1, ROW_B2 = 4, 5, 6, 7


# ----------------------------- fused Pallas kernel ---------------------------
def maskgit_kernel(patches_ref, pw_ref, pb_ref, cbt_ref, e2_ref,
                   rand_ref, ratio_ref, emb_ref, pos_ref, amask_ref,
                   wqkv_ref, wo_ref, w1_ref, w2_ref, vecs_ref,
                   lnf_ref, wh_ref, bh_ref,
                   idx_ref, logits_ref):
    # patches: (BS, P) f32      pw: (P, D) f32      pb: (1, D) f32
    # cbt:     (D, K) bf16 (pre-transposed codebook)
    # e2:      (1, K) f32 (||e_k||^2 of the bf16-rounded codebook)
    # rand:    (BS, 1) f32 uniforms   ratio: (1, 1) f32
    # emb:     (V_PAD, D) bf16 (token + mask embeddings, zero padded)
    # pos:     (BS, D) f32 (positional embedding, pre-tiled over batch)
    # amask:   (BS, BS) f32 additive block-diagonal mask (0 / -1e30)
    # wqkv/wo/w1/w2: (L, ...) bf16 weights
    # vecs:    (L, 8, 128) f32 packed LN params + biases (one per sublane row)
    # lnf:     (2, D) f32 (gamma, beta)   wh: (D, V_PAD) bf16   bh: (1, V_PAD) f32
    # outputs: idx (BS, 1) int32, logits (BS, V_PAD) f32 (lane-dense)

    # ---------------- VQ encode: patch embed + nearest codebook entry --------
    z = jnp.dot(patches_ref[...], pw_ref[...],
                preferred_element_type=jnp.float32) + pb_ref[...]       # (BS, D)
    zb = z.astype(jnp.bfloat16)

    # ||z||^2 is constant per row -> dropped; argmin(||e||^2 - 2 z.e) == argmin dist.
    run_min = jnp.full((BS, 1), jnp.inf, jnp.float32)
    run_idx = jnp.zeros((BS, 1), jnp.int32)
    for c in range(K // VQ_CHUNK):                    # static unroll, 256-lane chunks
        lo = c * VQ_CHUNK
        cross = jnp.dot(zb, cbt_ref[:, lo:lo + VQ_CHUNK],
                        preferred_element_type=jnp.float32)             # (BS, 256)
        score = e2_ref[:, lo:lo + VQ_CHUNK] - 2.0 * cross
        cmin = jnp.min(score, axis=-1, keepdims=True)
        lane = jax.lax.broadcasted_iota(jnp.int32, score.shape, 1) + lo
        cidx = jnp.min(jnp.where(score <= cmin, lane, K),
                       axis=-1, keepdims=True)        # first argmin inside chunk
        better = cmin < run_min                       # strict < : earlier chunk wins ties
        run_idx = jnp.where(better, cidx, run_idx)
        run_min = jnp.where(better, cmin, run_min)
    idx_ref[...] = run_idx.astype(jnp.int32)

    # ---------------- random masking (mask = rand < mask_ratio) --------------
    mask = rand_ref[...] < ratio_ref[...]                               # (BS, 1)
    masked = jnp.where(mask, MASK_TOKEN, run_idx)                       # (BS, 1) int32

    # ---------------- token embedding via one-hot MXU matmul -----------------
    onehot = (jax.lax.broadcasted_iota(jnp.int32, (BS, V_PAD), 1)
              == masked).astype(jnp.bfloat16)                           # (BS, V_PAD)
    x = jnp.dot(onehot, emb_ref[...],
                preferred_element_type=jnp.float32) + pos_ref[...]      # (BS, D) f32

    # ---------------- bidirectional transformer ------------------------------
    def ln(v, g, b):
        mu = jnp.mean(v, axis=-1, keepdims=True)
        vc = v - mu
        var = jnp.mean(vc * vc, axis=-1, keepdims=True)
        return vc * jax.lax.rsqrt(var + LN_EPS) * g + b

    scale = 1.0 / math.sqrt(HEAD_DIM)
    amask = amask_ref[...]                                              # (BS, BS)

    for l in range(LAYERS):
        vec = vecs_ref[l]                                               # (8, 128) f32
        ln1g = vec[ROW_LN1G:ROW_LN1G + 1, 0:D]
        ln1b = vec[ROW_LN1B:ROW_LN1B + 1, 0:D]
        bqkv = vec[ROW_BQKV:ROW_BQKV + 1, 0:3 * D]
        bo = vec[ROW_BO:ROW_BO + 1, 0:D]
        ln2g = vec[ROW_LN2G:ROW_LN2G + 1, 0:D]
        ln2b = vec[ROW_LN2B:ROW_LN2B + 1, 0:D]
        b1 = vec[ROW_B1:ROW_B1 + 1, 0:MLP]
        b2 = vec[ROW_B2:ROW_B2 + 1, 0:D]

        # --- self-attention block (pre-LN), batch-merged per-head matmuls ---
        h = ln(x, ln1g, ln1b)
        qkv = jnp.dot(h.astype(jnp.bfloat16), wqkv_ref[l],
                      preferred_element_type=jnp.float32) + bqkv        # (BS, 3D)
        q = qkv[:, 0 * D:1 * D]
        k = qkv[:, 1 * D:2 * D]
        v = qkv[:, 2 * D:3 * D]
        heads_out = []
        for hh in range(HEADS):
            sl = slice(hh * HEAD_DIM, (hh + 1) * HEAD_DIM)
            qh = q[:, sl].astype(jnp.bfloat16)                          # (BS, 8)
            kh = k[:, sl].astype(jnp.bfloat16)
            vh = v[:, sl].astype(jnp.bfloat16)
            # (BS, BS) scores across the merged batch; additive -inf mask makes
            # the block-diagonal (per-batch) attention exact.
            s = jnp.einsum('qd,kd->qk', qh, kh,
                           preferred_element_type=jnp.float32) * scale + amask
            m = jnp.max(s, axis=-1, keepdims=True)
            p = jnp.exp(s - m)
            denom = jnp.sum(p, axis=-1, keepdims=True)
            probs = p * pl.reciprocal(denom, approx=True)
            heads_out.append(jnp.dot(probs.astype(jnp.bfloat16), vh,
                                     preferred_element_type=jnp.float32))
        attn = jnp.concatenate(heads_out, axis=-1)                      # (BS, D)
        x = x + jnp.dot(attn.astype(jnp.bfloat16), wo_ref[l],
                        preferred_element_type=jnp.float32) + bo

        # --- MLP block ---
        h2 = ln(x, ln2g, ln2b)
        mid = jnp.dot(h2.astype(jnp.bfloat16), w1_ref[l],
                      preferred_element_type=jnp.float32) + b1
        mid = jax.nn.gelu(mid, approximate=True)  # TODO(synk): torch nn.GELU uses exact erf
        x = x + jnp.dot(mid.astype(jnp.bfloat16), w2_ref[l],
                        preferred_element_type=jnp.float32) + b2

    # ---------------- final LN + lane-dense head -----------------------------
    xf = ln(x, lnf_ref[0:1, :], lnf_ref[1:2, :])
    logits_ref[...] = jnp.dot(xf.astype(jnp.bfloat16), wh_ref[...],
                              preferred_element_type=jnp.float32) + bh_ref[...]


# ----------------------------- wrapper ---------------------------------------
def _full(shape):
    return pl.BlockSpec(shape, lambda i, _s=shape: (0,) * len(_s))


def maskgit_fused(patches, rand, ratio, kp):
    # Single pallas_call, grid=(1,): at B*S=32 rows the workload is launch- and
    # latency-bound, so everything lives in one invocation on one TensorCore.
    return pl.pallas_call(
        maskgit_kernel,
        out_shape=(jax.ShapeDtypeStruct((BS, 1), jnp.int32),
                   jax.ShapeDtypeStruct((BS, V_PAD), jnp.float32)),
        grid=(1,),
        in_specs=[_full((BS, P)), _full((P, D)), _full((1, D)),
                  _full((D, K)), _full((1, K)), _full((BS, 1)), _full((1, 1)),
                  _full((V_PAD, D)), _full((BS, D)), _full((BS, BS)),
                  _full((LAYERS, D, 3 * D)), _full((LAYERS, D, D)),
                  _full((LAYERS, D, MLP)), _full((LAYERS, MLP, D)),
                  _full((LAYERS, 8, 128)), _full((2, D)),
                  _full((D, V_PAD)), _full((1, V_PAD))],
        out_specs=(_full((BS, 1)), _full((BS, V_PAD))),
        compiler_params=pltpu.CompilerParams(dimension_semantics=("arbitrary",)),
    )(patches, kp['patch_w'], kp['patch_b'], kp['cbt'], kp['e2'], rand, ratio,
      kp['emb'], kp['pos'], kp['amask'],
      kp['wqkv'], kp['wo'], kp['w1'], kp['w2'], kp['vecs'], kp['lnf'],
      kp['wh'], kp['bh'])


def patchify(x):
    # NCHW -> (B*tokens, C*ph*pw), tokens in row-major (gh, gw) order.
    b, c, h, w = x.shape
    g = h // PATCH
    x = x.reshape(b, c, g, PATCH, g, PATCH)
    x = x.transpose(0, 2, 4, 1, 3, 5)                      # (B, gh, gw, C, ph, pw)
    return x.reshape(b * g * g, c * PATCH * PATCH)


def init_params(key):
    ks = jax.random.split(key, 9)
    s = 0.02
    f32 = jnp.float32
    return dict(
        patch_w=s * jax.random.normal(ks[0], (P, D), f32),
        patch_b=jnp.zeros((1, D), f32),
        codebook=jax.random.normal(ks[1], (K, D), f32),
        emb=s * jax.random.normal(ks[2], (NUM_CLASSES, D), f32),
        pos=s * jax.random.normal(ks[3], (S, D), f32),
        ln1g=jnp.ones((LAYERS, 1, D), f32), ln1b=jnp.zeros((LAYERS, 1, D), f32),
        wqkv=s * jax.random.normal(ks[4], (LAYERS, D, 3 * D), f32),
        bqkv=jnp.zeros((LAYERS, 1, 3 * D), f32),
        wo=s * jax.random.normal(ks[5], (LAYERS, D, D), f32),
        bo=jnp.zeros((LAYERS, 1, D), f32),
        ln2g=jnp.ones((LAYERS, 1, D), f32), ln2b=jnp.zeros((LAYERS, 1, D), f32),
        w1=s * jax.random.normal(ks[6], (LAYERS, D, MLP), f32),
        b1=jnp.zeros((LAYERS, 1, MLP), f32),
        w2=s * jax.random.normal(ks[7], (LAYERS, MLP, D), f32),
        b2=jnp.zeros((LAYERS, 1, D), f32),
        lnfg=jnp.ones((1, D), f32), lnfb=jnp.zeros((1, D), f32),
        wh=s * jax.random.normal(ks[8], (D, NUM_CLASSES), f32),
        bh=jnp.zeros((1, NUM_CLASSES), f32),
    )


def prepare_kernel_params(p):
    """One-time packing/casting of master f32 params into kernel-ready layout."""
    bf16 = jnp.bfloat16
    cbt = p['codebook'].T.astype(bf16)                        # (D, K) pre-transposed
    cb_r = cbt.astype(jnp.float32)                            # bf16-rounded codebook
    e2 = jnp.sum(cb_r * cb_r, axis=0, keepdims=True)          # (1, K) hoisted ||e||^2

    def lane_row(v):                                          # (L,1,w) -> (L,1,128)
        return jnp.pad(v, ((0, 0), (0, 0), (0, 128 - v.shape[-1])))
    vecs = jnp.concatenate(
        [lane_row(p['ln1g']), lane_row(p['ln1b']), lane_row(p['bqkv']),
         lane_row(p['bo']), lane_row(p['ln2g']), lane_row(p['ln2b']),
         lane_row(p['b1']), lane_row(p['b2'])], axis=1)       # (L, 8, 128)

    emb_p = jnp.pad(p['emb'], ((0, V_PAD - NUM_CLASSES), (0, 0))).astype(bf16)
    pos_t = jnp.tile(p['pos'], (B, 1))                        # (BS, D)

    bid = jnp.arange(BS) // S                                 # batch id per row
    amask = jnp.where(bid[:, None] == bid[None, :], 0.0, -1e30).astype(jnp.float32)

    wh = jnp.pad(p['wh'], ((0, 0), (0, V_PAD - NUM_CLASSES))).astype(bf16)
    bh = jnp.pad(p['bh'], ((0, 0), (0, V_PAD - NUM_CLASSES)))
    return dict(
        patch_w=p['patch_w'], patch_b=p['patch_b'], cbt=cbt, e2=e2,
        emb=emb_p, pos=pos_t, amask=amask,
        wqkv=p['wqkv'].astype(bf16), wo=p['wo'].astype(bf16),
        w1=p['w1'].astype(bf16), w2=p['w2'].astype(bf16),
        vecs=vecs, lnf=jnp.concatenate([p['lnfg'], p['lnfb']], axis=0),
        wh=wh, bh=bh,
    )


def maskgit_forward(x, kp, key):
    # _, z_indices = self.encode_to_z(x); masking + embedding + transformer all
    # fused into one Pallas kernel; only logits and z_indices leave VMEM.
    patches = patchify(x)                                     # (BS, P)
    k1, k2 = jax.random.split(key)
    # mask_ratio = (torch.rand(1) * 0.5).item(); mask = rand_like(z) < mask_ratio
    mask_ratio = jax.random.uniform(k1, (1, 1), jnp.float32) * 0.5
    rand = jax.random.uniform(k2, (BS, 1), jnp.float32)

    z_idx, logits_p = maskgit_fused(patches, rand, mask_ratio, kp)
    z_indices = z_idx.reshape(B, S)                           # view(-1, num_image_tokens)
    logits = logits_p[:, :NUM_CLASSES].reshape(B, S, NUM_CLASSES)
    return logits, z_indices


if __name__ == "__main__":
    key = jax.random.PRNGKey(0)
    kx, kparam, kfwd = jax.random.split(key, 3)
    x = jax.random.normal(kx, (B, C_IN, IMG, IMG), jnp.float32)   # NCHW like PyTorch
    params = init_params(kparam)
    kp = prepare_kernel_params(params)

    fwd = jax.jit(maskgit_forward)
    logits, z_indices = fwd(x, kp, kfwd)
    jax.block_until_ready((logits, z_indices))
    assert logits.shape == (B, S, NUM_CLASSES) and logits.dtype == jnp.float32
    assert z_indices.shape == (B, S) and z_indices.dtype == jnp.int32
    print("KERNEL_OK")
</pallas_src>

<mosaic_0001>
module attributes {stable_mosaic.version = 11 : i64} {
  func.func @maskgit_kernel(%arg0: i32, %arg1: memref<32x48xf32, #tpu.memory_space<vmem>>, %arg2: memref<48x32xf32, #tpu.memory_space<vmem>>, %arg3: memref<1x32xf32, #tpu.memory_space<vmem>>, %arg4: memref<32x1024xbf16, #tpu.memory_space<vmem>>, %arg5: memref<1x1024xf32, #tpu.memory_space<vmem>>, %arg6: memref<32x1xf32, #tpu.memory_space<vmem>>, %arg7: memref<1x1xf32, #tpu.memory_space<vmem>>, %arg8: memref<1152x32xbf16, #tpu.memory_space<vmem>>, %arg9: memref<32x32xf32, #tpu.memory_space<vmem>>, %arg10: memref<32x32xf32, #tpu.memory_space<vmem>>, %arg11: memref<2x32x96xbf16, #tpu.memory_space<vmem>>, %arg12: memref<2x32x32xbf16, #tpu.memory_space<vmem>>, %arg13: memref<2x32x128xbf16, #tpu.memory_space<vmem>>, %arg14: memref<2x128x32xbf16, #tpu.memory_space<vmem>>, %arg15: memref<2x8x128xf32, #tpu.memory_space<vmem>>, %arg16: memref<2x32xf32, #tpu.memory_space<vmem>>, %arg17: memref<32x1152xbf16, #tpu.memory_space<vmem>>, %arg18: memref<1x1152xf32, #tpu.memory_space<vmem>>, %arg19: memref<32x1xi32, #tpu.memory_space<vmem>>, %arg20: memref<32x1152xf32, #tpu.memory_space<vmem>>) attributes {dimension_semantics = [#tpu.dimension_semantics<arbitrary>], iteration_bounds = array<i64: 1>, scalar_prefetch = 0 : i64, scratch_operands = 0 : i64, tpu.core_type = #tpu.core_type<tc>, window_params = [{pipeline_mode = #tpu.pipeline_mode<synchronous>, transform_indices = @transform_0, window_bounds = array<i64: 32, 48>}, {pipeline_mode = #tpu.pipeline_mode<synchronous>, transform_indices = @transform_1, window_bounds = array<i64: 48, 32>}, {pipeline_mode = #tpu.pipeline_mode<synchronous>, transform_indices = @transform_2, window_bounds = array<i64: 1, 32>}, {pipeline_mode = #tpu.pipeline_mode<synchronous>, transform_indices = @transform_3, window_bounds = array<i64: 32, 1024>}, {pipeline_mode = #tpu.pipeline_mode<synchronous>, transform_indices = @transform_4, window_bounds = array<i64: 1, 1024>}, {pipeline_mode = #tpu.pipeline_mode<synchronous>, transform_indices = @transform_5, window_bounds = array<i64: 32, 1>}, {pipeline_mode = #tpu.pipeline_mode<synchronous>, transform_indices = @transform_6, window_bounds = array<i64: 1, 1>}, {pipeline_mode = #tpu.pipeline_mode<synchronous>, transform_indices = @transform_7, window_bounds = array<i64: 1152, 32>}, {pipeline_mode = #tpu.pipeline_mode<synchronous>, transform_indices = @transform_8, window_bounds = array<i64: 32, 32>}, {pipeline_mode = #tpu.pipeline_mode<synchronous>, transform_indices = @transform_9, window_bounds = array<i64: 32, 32>}, {pipeline_mode = #tpu.pipeline_mode<synchronous>, transform_indices = @transform_10, window_bounds = array<i64: 2, 32, 96>}, {pipeline_mode = #tpu.pipeline_mode<synchronous>, transform_indices = @transform_11, window_bounds = array<i64: 2, 32, 32>}, {pipeline_mode = #tpu.pipeline_mode<synchronous>, transform_indices = @transform_12, window_bounds = array<i64: 2, 32, 128>}, {pipeline_mode = #tpu.pipeline_mode<synchronous>, transform_indices = @transform_13, window_bounds = array<i64: 2, 128, 32>}, {pipeline_mode = #tpu.pipeline_mode<synchronous>, transform_indices = @transform_14, window_bounds = array<i64: 2, 8, 128>}, {pipeline_mode = #tpu.pipeline_mode<synchronous>, transform_indices = @transform_15, window_bounds = array<i64: 2, 32>}, {pipeline_mode = #tpu.pipeline_mode<synchronous>, transform_indices = @transform_16, window_bounds = array<i64: 32, 1152>}, {pipeline_mode = #tpu.pipeline_mode<synchronous>, transform_indices = @transform_17, window_bounds = array<i64: 1, 1152>}, {pipeline_mode = #tpu.pipeline_mode<synchronous>, transform_indices = @transform_18, window_bounds = array<i64: 32, 1>}, {pipeline_mode = #tpu.pipeline_mode<synchronous>, transform_indices = @transform_19, window_bounds = array<i64: 32, 1152>}]} {
    %c0 = arith.constant 0 : index
    %c0_0 = arith.constant 0 : index
    %0 = vector.load %arg1[%c0, %c0_0] : memref<32x48xf32, #tpu.memory_space<vmem>>, vector<32x48xf32>
    %c0_1 = arith.constant 0 : index
    %c0_2 = arith.constant 0 : index
    %1 = vector.load %arg2[%c0_1, %c0_2] : memref<48x32xf32, #tpu.memory_space<vmem>>, vector<48x32xf32>
    %cst = arith.constant dense<0.000000e+00> : vector<32x32xf32>
    %2 = tpu.matmul %0, %1, %cst {dimension_numbers = #tpu.dot_dimension_numbers<[1], [0], [0], [1], [0, 0, 1, 1], [], []>} : vector<32x48xf32>, vector<48x32xf32>, vector<32x32xf32> -> vector<32x32xf32>
    %c0_3 = arith.constant 0 : index
    %c0_4 = arith.constant 0 : index
    %3 = vector.load %arg3[%c0_3, %c0_4] : memref<1x32xf32, #tpu.memory_space<vmem>>, vector<1x32xf32>
    %4 = vector.broadcast %3 : vector<1x32xf32> to vector<32x32xf32>
    %5 = arith.addf %2, %4 : vector<32x32xf32>
    %6 = arith.truncf %5 : vector<32x32xf32> to vector<32x32xbf16>
    %cst_5 = arith.constant 0x7F800000 : f32
    %7 = vector.broadcast %cst_5 : f32 to vector<32x1xf32>
    %c0_i32 = arith.constant 0 : i32
    %8 = vector.broadcast %c0_i32 : i32 to vector<32x1xi32>
    %c0_6 = arith.constant 0 : index
    %c0_7 = arith.constant 0 : index
    %9 = vector.load %arg4[%c0_6, %c0_7] : memref<32x1024xbf16, #tpu.memory_space<vmem>>, vector<32x256xbf16>
    %cst_8 = arith.constant dense<0.000000e+00> : vector<32x256xf32>
    %10 = tpu.matmul %6, %9, %cst_8 {dimension_numbers = #tpu.dot_dimension_numbers<[1], [0], [0], [1], [0, 0, 1, 1], [], []>} : vector<32x32xbf16>, vector<32x256xbf16>, vector<32x256xf32> -> vector<32x256xf32>
    %c0_9 = arith.constant 0 : index
    %c0_10 = arith.constant 0 : index
    %11 = vector.load %arg5[%c0_9, %c0_10] : memref<1x1024xf32, #tpu.memory_space<vmem>>, vector<1x256xf32>
    %cst_11 = arith.constant 2.000000e+00 : f32
    %12 = vector.broadcast %cst_11 : f32 to vector<32x256xf32>
    %13 = arith.mulf %12, %10 : vector<32x256xf32>
    %14 = vector.broadcast %11 : vector<1x256xf32> to vector<32x256xf32>
    %15 = arith.subf %14, %13 : vector<32x256xf32>
    %cst_12 = arith.constant dense<0x7F800000> : vector<32xf32>
    %16 = vector.multi_reduction <minimumf>, %15, %cst_12 [1] : vector<32x256xf32> to vector<32xf32>
    %17 = vector.shape_cast %16 : vector<32xf32> to vector<32x1xf32>
    %18 = tpu.iota {dimensions = array<i32: 1>} : vector<32x256xi32>
    %c0_i32_13 = arith.constant 0 : i32
    %19 = vector.broadcast %c0_i32_13 : i32 to vector<32x256xi32>
    %20 = arith.addi %18, %19 : vector<32x256xi32>
    %21 = vector.broadcast %17 : vector<32x1xf32> to vector<32x256xf32>
    %22 = arith.cmpf ole, %15, %21 : vector<32x256xf32>
    %c1024_i32 = arith.constant 1024 : i32
    %23 = vector.broadcast %c1024_i32 : i32 to vector<32x256xi32>
    %24 = arith.select %22, %20, %23 : vector<32x256xi1>, vector<32x256xi32>
    %cst_14 = arith.constant dense<2147483647> : vector<32xi32>
    %25 = vector.multi_reduction <minsi>, %24, %cst_14 [1] : vector<32x256xi32> to vector<32xi32>
    %26 = vector.shape_cast %25 : vector<32xi32> to vector<32x1xi32>
    %27 = arith.cmpf olt, %17, %7 : vector<32x1xf32>
    %28 = arith.select %27, %26, %8 : vector<32x1xi1>, vector<32x1xi32>
    %29 = arith.select %27, %17, %7 : vector<32x1xi1>, vector<32x1xf32>
    %c0_15 = arith.constant 0 : index
    %c256 = arith.constant 256 : index
    %30 = vector.load %arg4[%c0_15, %c256] : memref<32x1024xbf16, #tpu.memory_space<vmem>>, vector<32x256xbf16>
    %cst_16 = arith.constant dense<0.000000e+00> : vector<32x256xf32>
    %31 = tpu.matmul %6, %30, %cst_16 {dimension_numbers = #tpu.dot_dimension_numbers<[1], [0], [0], [1], [0, 0, 1, 1], [], []>} : vector<32x32xbf16>, vector<32x256xbf16>, vector<32x256xf32> -> vector<32x256xf32>
    %c0_17 = arith.constant 0 : index
    %c256_18 = arith.constant 256 : index
    %32 = vector.load %arg5[%c0_17, %c256_18] : memref<1x1024xf32, #tpu.memory_space<vmem>>, vector<1x256xf32>
    %cst_19 = arith.constant 2.000000e+00 : f32
    %33 = vector.broadcast %cst_19 : f32 to vector<32x256xf32>
    %34 = arith.mulf %33, %31 : vector<32x256xf32>
    %35 = vector.broadcast %32 : vector<1x256xf32> to vector<32x256xf32>
    %36 = arith.subf %35, %34 : vector<32x256xf32>
    %cst_20 = arith.constant dense<0x7F800000> : vector<32xf32>
    %37 = vector.multi_reduction <minimumf>, %36, %cst_20 [1] : vector<32x256xf32> to vector<32xf32>
    %38 = vector.shape_cast %37 : vector<32xf32> to vector<32x1xf32>
    %39 = tpu.iota {dimensions = array<i32: 1>} : vector<32x256xi32>
    %c256_i32 = arith.constant 256 : i32
    %40 = vector.broadcast %c256_i32 : i32 to vector<32x256xi32>
    %41 = arith.addi %39, %40 : vector<32x256xi32>
    %42 = vector.broadcast %38 : vector<32x1xf32> to vector<32x256xf32>
    %43 = arith.cmpf ole, %36, %42 : vector<32x256xf32>
    %c1024_i32_21 = arith.constant 1024 : i32
    %44 = vector.broadcast %c1024_i32_21 : i32 to vector<32x256xi32>
    %45 = arith.select %43, %41, %44 : vector<32x256xi1>, vector<32x256xi32>
    %cst_22 = arith.constant dense<2147483647> : vector<32xi32>
    %46 = vector.multi_reduction <minsi>, %45, %cst_22 [1] : vector<32x256xi32> to vector<32xi32>
    %47 = vector.shape_cast %46 : vector<32xi32> to vector<32x1xi32>
    %48 = arith.cmpf olt, %38, %29 : vector<32x1xf32>
    %49 = arith.select %48, %47, %28 : vector<32x1xi1>, vector<32x1xi32>
    %50 = arith.select %48, %38, %29 : vector<32x1xi1>, vector<32x1xf32>
    %c0_23 = arith.constant 0 : index
    %c512 = arith.constant 512 : index
    %51 = vector.load %arg4[%c0_23, %c512] : memref<32x1024xbf16, #tpu.memory_space<vmem>>, vector<32x256xbf16>
    %cst_24 = arith.constant dense<0.000000e+00> : vector<32x256xf32>
    %52 = tpu.matmul %6, %51, %cst_24 {dimension_numbers = #tpu.dot_dimension_numbers<[1], [0], [0], [1], [0, 0, 1, 1], [], []>} : vector<32x32xbf16>, vector<32x256xbf16>, vector<32x256xf32> -> vector<32x256xf32>
    %c0_25 = arith.constant 0 : index
    %c512_26 = arith.constant 512 : index
    %53 = vector.load %arg5[%c0_25, %c512_26] : memref<1x1024xf32, #tpu.memory_space<vmem>>, vector<1x256xf32>
    %cst_27 = arith.constant 2.000000e+00 : f32
    %54 = vector.broadcast %cst_27 : f32 to vector<32x256xf32>
    %55 = arith.mulf %54, %52 : vector<32x256xf32>
    %56 = vector.broadcast %53 : vector<1x256xf32> to vector<32x256xf32>
    %57 = arith.subf %56, %55 : vector<32x256xf32>
    %cst_28 = arith.constant dense<0x7F800000> : vector<32xf32>
    %58 = vector.multi_reduction <minimumf>, %57, %cst_28 [1] : vector<32x256xf32> to vector<32xf32>
    %59 = vector.shape_cast %58 : vector<32xf32> to vector<32x1xf32>
    %60 = tpu.iota {dimensions = array<i32: 1>} : vector<32x256xi32>
    %c512_i32 = arith.constant 512 : i32
    %61 = vector.broadcast %c512_i32 : i32 to vector<32x256xi32>
    %62 = arith.addi %60, %61 : vector<32x256xi32>
    %63 = vector.broadcast %59 : vector<32x1xf32> to vector<32x256xf32>
    %64 = arith.cmpf ole, %57, %63 : vector<32x256xf32>
    %c1024_i32_29 = arith.constant 1024 : i32
    %65 = vector.broadcast %c1024_i32_29 : i32 to vector<32x256xi32>
    %66 = arith.select %64, %62, %65 : vector<32x256xi1>, vector<32x256xi32>
    %cst_30 = arith.constant dense<2147483647> : vector<32xi32>
    %67 = vector.multi_reduction <minsi>, %66, %cst_30 [1] : vector<32x256xi32> to vector<32xi32>
    %68 = vector.shape_cast %67 : vector<32xi32> to vector<32x1xi32>
    %69 = arith.cmpf olt, %59, %50 : vector<32x1xf32>
    %70 = arith.select %69, %68, %49 : vector<32x1xi1>, vector<32x1xi32>
    %71 = arith.select %69, %59, %50 : vector<32x1xi1>, vector<32x1xf32>
    %c0_31 = arith.constant 0 : index
    %c768 = arith.constant 768 : index
    %72 = vector.load %arg4[%c0_31, %c768] : memref<32x1024xbf16, #tpu.memory_space<vmem>>, vector<32x256xbf16>
    %cst_32 = arith.constant dense<0.000000e+00> : vector<32x256xf32>
    %73 = tpu.matmul %6, %72, %cst_32 {dimension_numbers = #tpu.dot_dimension_numbers<[1], [0], [0], [1], [0, 0, 1, 1], [], []>} : vector<32x32xbf16>, vector<32x256xbf16>, vector<32x256xf32> -> vector<32x256xf32>
    %c0_33 = arith.constant 0 : index
    %c768_34 = arith.constant 768 : index
    %74 = vector.load %arg5[%c0_33, %c768_34] : memref<1x1024xf32, #tpu.memory_space<vmem>>, vector<1x256xf32>
    %cst_35 = arith.constant 2.000000e+00 : f32
    %75 = vector.broadcast %cst_35 : f32 to vector<32x256xf32>
    %76 = arith.mulf %75, %73 : vector<32x256xf32>
    %77 = vector.broadcast %74 : vector<1x256xf32> to vector<32x256xf32>
    %78 = arith.subf %77, %76 : vector<32x256xf32>
    %cst_36 = arith.constant dense<0x7F800000> : vector<32xf32>
    %79 = vector.multi_reduction <minimumf>, %78, %cst_36 [1] : vector<32x256xf32> to vector<32xf32>
    %80 = vector.shape_cast %79 : vector<32xf32> to vector<32x1xf32>
    %81 = tpu.iota {dimensions = array<i32: 1>} : vector<32x256xi32>
    %c768_i32 = arith.constant 768 : i32
    %82 = vector.broadcast %c768_i32 : i32 to vector<32x256xi32>
    %83 = arith.addi %81, %82 : vector<32x256xi32>
    %84 = vector.broadcast %80 : vector<32x1xf32> to vector<32x256xf32>
    %85 = arith.cmpf ole, %78, %84 : vector<32x256xf32>
    %c1024_i32_37 = arith.constant 1024 : i32
    %86 = vector.broadcast %c1024_i32_37 : i32 to vector<32x256xi32>
    %87 = arith.select %85, %83, %86 : vector<32x256xi1>, vector<32x256xi32>
    %cst_38 = arith.constant dense<2147483647> : vector<32xi32>
    %88 = vector.multi_reduction <minsi>, %87, %cst_38 [1] : vector<32x256xi32> to vector<32xi32>
    %89 = vector.shape_cast %88 : vector<32xi32> to vector<32x1xi32>
    %90 = arith.cmpf olt, %80, %71 : vector<32x1xf32>
    %91 = arith.select %90, %89, %70 : vector<32x1xi1>, vector<32x1xi32>
    %c0_39 = arith.constant 0 : index
    %c0_40 = arith.constant 0 : index
    %92 = vector.load %arg19[%c0_39, %c0_40] : memref<32x1xi32, #tpu.memory_space<vmem>>, vector<32x1xi32>
    tpu.vector_store %arg19[%c0_39, %c0_40], %91 {strides = array<i32>} : memref<32x1xi32, #tpu.memory_space<vmem>>, vector<32x1xi32>,
    %c0_41 = arith.constant 0 : index
    %c0_42 = arith.constant 0 : index
    %93 = vector.load %arg6[%c0_41, %c0_42] : memref<32x1xf32, #tpu.memory_space<vmem>>, vector<32x1xf32>
    %c0_43 = arith.constant 0 : index
    %c0_44 = arith.constant 0 : index
    %94 = vector.load %arg7[%c0_43, %c0_44] : memref<1x1xf32, #tpu.memory_space<vmem>>, vector<1x1xf32>
    %95 = vector.broadcast %94 : vector<1x1xf32> to vector<32x1xf32>
    %96 = arith.cmpf olt, %93, %95 : vector<32x1xf32>
    %c1024_i32_45 = arith.constant 1024 : i32
    %97 = vector.broadcast %c1024_i32_45 : i32 to vector<32x1xi32>
    %98 = arith.select %96, %97, %91 : vector<32x1xi1>, vector<32x1xi32>
    %99 = tpu.iota {dimensions = array<i32: 1>} : vector<32x1152xi32>
    %100 = vector.broadcast %98 : vector<32x1xi32> to vector<32x1152xi32>
    %101 = arith.cmpi eq, %99, %100 : vector<32x1152xi32>
    %102 = arith.extui %101 : vector<32x1152xi1> to vector<32x1152xi32>
    %103 = arith.sitofp %102 : vector<32x1152xi32> to vector<32x1152xf32>
    %104 = arith.truncf %103 : vector<32x1152xf32> to vector<32x1152xbf16>
    %c0_46 = arith.constant 0 : index
    %c0_47 = arith.constant 0 : index
    %105 = vector.load %arg8[%c0_46, %c0_47] : memref<1152x32xbf16, #tpu.memory_space<vmem>>, vector<1152x32xbf16>
    %cst_48 = arith.constant dense<0.000000e+00> : vector<32x32xf32>
    %106 = tpu.matmul %104, %105, %cst_48 {dimension_numbers = #tpu.dot_dimension_numbers<[1], [0], [0], [1], [0, 0, 1, 1], [], []>} : vector<32x1152xbf16>, vector<1152x32xbf16>, vector<32x32xf32> -> vector<32x32xf32>
    %c0_49 = arith.constant 0 : index
    %c0_50 = arith.constant 0 : index
    %107 = vector.load %arg9[%c0_49, %c0_50] : memref<32x32xf32, #tpu.memory_space<vmem>>, vector<32x32xf32>
    %108 = arith.addf %106, %107 : vector<32x32xf32>
    %c0_51 = arith.constant 0 : index
    %c0_52 = arith.constant 0 : index
    %109 = vector.load %arg10[%c0_51, %c0_52] : memref<32x32xf32, #tpu.memory_space<vmem>>, vector<32x32xf32>
    %c0_53 = arith.constant 0 : index
    %c0_54 = arith.constant 0 : index
    %c0_55 = arith.constant 0 : index
    %110 = vector.load %arg15[%c0_53, %c0_54, %c0_55] : memref<2x8x128xf32, #tpu.memory_space<vmem>>, vector<1x8x128xf32>
    %111 = vector.shape_cast %110 : vector<1x8x128xf32> to vector<8x128xf32>
    %112 = vector.extract_strided_slice %111 {offsets = [0, 0], sizes = [1, 32], strides = [1, 1]} : vector<8x128xf32> to vector<1x32xf32>
    %113 = vector.extract_strided_slice %111 {offsets = [1, 0], sizes = [1, 32], strides = [1, 1]} : vector<8x128xf32> to vector<1x32xf32>
    %114 = vector.extract_strided_slice %111 {offsets = [2, 0], sizes = [1, 96], strides = [1, 1]} : vector<8x128xf32> to vector<1x96xf32>
    %115 = vector.extract_strided_slice %111 {offsets = [3, 0], sizes = [1, 32], strides = [1, 1]} : vector<8x128xf32> to vector<1x32xf32>
    %116 = vector.extract_strided_slice %111 {offsets = [4, 0], sizes = [1, 32], strides = [1, 1]} : vector<8x128xf32> to vector<1x32xf32>
    %117 = vector.extract_strided_slice %111 {offsets = [5, 0], sizes = [1, 32], strides = [1, 1]} : vector<8x128xf32> to vector<1x32xf32>
    %118 = vector.extract_strided_slice %111 {offsets = [6, 0], sizes = [1, 128], strides = [1, 1]} : vector<8x128xf32> to vector<1x128xf32>
    %119 = vector.extract_strided_slice %111 {offsets = [7, 0], sizes = [1, 32], strides = [1, 1]} : vector<8x128xf32> to vector<1x32xf32>
    %cst_56 = arith.constant dense<0.000000e+00> : vector<32xf32>
    %120 = vector.multi_reduction <add>, %108, %cst_56 [1] : vector<32x32xf32> to vector<32xf32>
    %121 = vector.shape_cast %120 : vector<32xf32> to vector<32x1xf32>
    %cst_57 = arith.constant 3.200000e+01 : f32
    %122 = vector.broadcast %cst_57 : f32 to vector<32x1xf32>
    %123 = arith.divf %121, %122 : vector<32x1xf32>
    %124 = vector.broadcast %123 : vector<32x1xf32> to vector<32x32xf32>
    %125 = arith.subf %108, %124 : vector<32x32xf32>
    %126 = arith.mulf %125, %125 : vector<32x32xf32>
    %cst_58 = arith.constant dense<0.000000e+00> : vector<32xf32>
    %127 = vector.multi_reduction <add>, %126, %cst_58 [1] : vector<32x32xf32> to vector<32xf32>
    %128 = vector.shape_cast %127 : vector<32xf32> to vector<32x1xf32>
    %cst_59 = arith.constant 3.200000e+01 : f32
    %129 = vector.broadcast %cst_59 : f32 to vector<32x1xf32>
    %130 = arith.divf %128, %129 : vector<32x1xf32>
    %cst_60 = arith.constant 9.99999974E-6 : f32
    %131 = vector.broadcast %cst_60 : f32 to vector<32x1xf32>
    %132 = arith.addf %130, %131 : vector<32x1xf32>
    %133 = math.rsqrt %132 : vector<32x1xf32>
    %134 = vector.broadcast %133 : vector<32x1xf32> to vector<32x32xf32>
    %135 = arith.mulf %125, %134 : vector<32x32xf32>
    %136 = vector.broadcast %112 : vector<1x32xf32> to vector<32x32xf32>
    %137 = arith.mulf %135, %136 : vector<32x32xf32>
    %138 = vector.broadcast %113 : vector<1x32xf32> to vector<32x32xf32>
    %139 = arith.addf %137, %138 : vector<32x32xf32>
    %140 = arith.truncf %139 : vector<32x32xf32> to vector<32x32xbf16>
    %c0_61 = arith.constant 0 : index
    %c0_62 = arith.constant 0 : index
    %c0_63 = arith.constant 0 : index
    %141 = vector.load %arg11[%c0_61, %c0_62, %c0_63] : memref<2x32x96xbf16, #tpu.memory_space<vmem>>, vector<1x32x96xbf16>
    %142 = vector.shape_cast %141 : vector<1x32x96xbf16> to vector<32x96xbf16>
    %cst_64 = arith.constant dense<0.000000e+00> : vector<32x96xf32>
    %143 = tpu.matmul %140, %142, %cst_64 {dimension_numbers = #tpu.dot_dimension_numbers<[1], [0], [0], [1], [0, 0, 1, 1], [], []>} : vector<32x32xbf16>, vector<32x96xbf16>, vector<32x96xf32> -> vector<32x96xf32>
    %144 = vector.broadcast %114 : vector<1x96xf32> to vector<32x96xf32>
    %145 = arith.addf %143, %144 : vector<32x96xf32>
    %146 = vector.extract_strided_slice %145 {offsets = [0, 0], sizes = [32, 32], strides = [1, 1]} : vector<32x96xf32> to vector<32x32xf32>
    %147 = vector.extract_strided_slice %145 {offsets = [0, 32], sizes = [32, 32], strides = [1, 1]} : vector<32x96xf32> to vector<32x32xf32>
    %148 = vector.extract_strided_slice %145 {offsets = [0, 64], sizes = [32, 32], strides = [1, 1]} : vector<32x96xf32> to vector<32x32xf32>
    %149 = vector.extract_strided_slice %146 {offsets = [0, 0], sizes = [32, 8], strides = [1, 1]} : vector<32x32xf32> to vector<32x8xf32>
    %150 = arith.truncf %149 : vector<32x8xf32> to vector<32x8xbf16>
    %151 = vector.extract_strided_slice %147 {offsets = [0, 0], sizes = [32, 8], strides = [1, 1]} : vector<32x32xf32> to vector<32x8xf32>
    %152 = arith.truncf %151 : vector<32x8xf32> to vector<32x8xbf16>
    %153 = vector.extract_strided_slice %148 {offsets = [0, 0], sizes = [32, 8], strides = [1, 1]} : vector<32x32xf32> to vector<32x8xf32>
    %154 = arith.truncf %153 : vector<32x8xf32> to vector<32x8xbf16>
    "tpu.trace_start"() <{level = 10 : i32, message = "qd,kd->qk"}> : () -> ()
    %cst_65 = arith.constant dense<0.000000e+00> : vector<32x32xf32>
    %155 = tpu.matmul %150, %152, %cst_65 {dimension_numbers = #tpu.dot_dimension_numbers<[1], [1], [0], [0], [0, 0, 1, 0], [], []>} : vector<32x8xbf16>, vector<32x8xbf16>, vector<32x32xf32> -> vector<32x32xf32>
    "tpu.trace_stop"() : () -> ()
    %cst_66 = arith.constant 0.353553385 : f32
    %156 = vector.broadcast %cst_66 : f32 to vector<32x32xf32>
    %157 = arith.mulf %155, %156 : vector<32x32xf32>
    %158 = arith.addf %157, %109 : vector<32x32xf32>
    %cst_67 = arith.constant dense<0xFF800000> : vector<32xf32>
    %159 = vector.multi_reduction <maximumf>, %158, %cst_67 [1] : vector<32x32xf32> to vector<32xf32>
    %160 = vector.shape_cast %159 : vector<32xf32> to vector<32x1xf32>
    %161 = vector.broadcast %160 : vector<32x1xf32> to vector<32x32xf32>
    %162 = arith.subf %158, %161 : vector<32x32xf32>
    %163 = math.exp %162 : vector<32x32xf32>
    %cst_68 = arith.constant dense<0.000000e+00> : vector<32xf32>
    %164 = vector.multi_reduction <add>, %163, %cst_68 [1] : vector<32x32xf32> to vector<32xf32>
    %165 = vector.shape_cast %164 : vector<32xf32> to vector<32x1xf32>
    %166 = tpu.reciprocal %165 {approx = true} : vector<32x1xf32> -> vector<32x1xf32>
    %167 = vector.broadcast %166 : vector<32x1xf32> to vector<32x32xf32>
    %168 = arith.mulf %163, %167 : vector<32x32xf32>
    %169 = arith.truncf %168 : vector<32x32xf32> to vector<32x32xbf16>
    %cst_69 = arith.constant dense<0.000000e+00> : vector<32x8xf32>
    %170 = tpu.matmul %169, %154, %cst_69 {dimension_numbers = #tpu.dot_dimension_numbers<[1], [0], [0], [1], [0, 0, 1, 1], [], []>} : vector<32x32xbf16>, vector<32x8xbf16>, vector<32x8xf32> -> vector<32x8xf32>
    %171 = vector.extract_strided_slice %146 {offsets = [0, 8], sizes = [32, 8], strides = [1, 1]} : vector<32x32xf32> to vector<32x8xf32>
    %172 = arith.truncf %171 : vector<32x8xf32> to vector<32x8xbf16>
    %173 = vector.extract_strided_slice %147 {offsets = [0, 8], sizes = [32, 8], strides = [1, 1]} : vector<32x32xf32> to vector<32x8xf32>
    %174 = arith.truncf %173 : vector<32x8xf32> to vector<32x8xbf16>
    %175 = vector.extract_strided_slice %148 {offsets = [0, 8], sizes = [32, 8], strides = [1, 1]} : vector<32x32xf32> to vector<32x8xf32>
    %176 = arith.truncf %175 : vector<32x8xf32> to vector<32x8xbf16>
    "tpu.trace_start"() <{level = 10 : i32, message = "qd,kd->qk"}> : () -> ()
    %cst_70 = arith.constant dense<0.000000e+00> : vector<32x32xf32>
    %177 = tpu.matmul %172, %174, %cst_70 {dimension_numbers = #tpu.dot_dimension_numbers<[1], [1], [0], [0], [0, 0, 1, 0], [], []>} : vector<32x8xbf16>, vector<32x8xbf16>, vector<32x32xf32> -> vector<32x32xf32>
    "tpu.trace_stop"() : () -> ()
    %cst_71 = arith.constant 0.353553385 : f32
    %178 = vector.broadcast %cst_71 : f32 to vector<32x32xf32>
    %179 = arith.mulf %177, %178 : vector<32x32xf32>
    %180 = arith.addf %179, %109 : vector<32x32xf32>
    %cst_72 = arith.constant dense<0xFF800000> : vector<32xf32>
    %181 = vector.multi_reduction <maximumf>, %180, %cst_72 [1] : vector<32x32xf32> to vector<32xf32>
    %182 = vector.shape_cast %181 : vector<32xf32> to vector<32x1xf32>
    %183 = vector.broadcast %182 : vector<32x1xf32> to vector<32x32xf32>
    %184 = arith.subf %180, %183 : vector<32x32xf32>
    %185 = math.exp %184 : vector<32x32xf32>
    %cst_73 = arith.constant dense<0.000000e+00> : vector<32xf32>
    %186 = vector.multi_reduction <add>, %185, %cst_73 [1] : vector<32x32xf32> to vector<32xf32>
    %187 = vector.shape_cast %186 : vector<32xf32> to vector<32x1xf32>
    %188 = tpu.reciprocal %187 {approx = true} : vector<32x1xf32> -> vector<32x1xf32>
    %189 = vector.broadcast %188 : vector<32x1xf32> to vector<32x32xf32>
    %190 = arith.mulf %185, %189 : vector<32x32xf32>
    %191 = arith.truncf %190 : vector<32x32xf32> to vector<32x32xbf16>
    %cst_74 = arith.constant dense<0.000000e+00> : vector<32x8xf32>
    %192 = tpu.matmul %191, %176, %cst_74 {dimension_numbers = #tpu.dot_dimension_numbers<[1], [0], [0], [1], [0, 0, 1, 1], [], []>} : vector<32x32xbf16>, vector<32x8xbf16>, vector<32x8xf32> -> vector<32x8xf32>
    %193 = vector.extract_strided_slice %146 {offsets = [0, 16], sizes = [32, 8], strides = [1, 1]} : vector<32x32xf32> to vector<32x8xf32>
    %194 = arith.truncf %193 : vector<32x8xf32> to vector<32x8xbf16>
    %195 = vector.extract_strided_slice %147 {offsets = [0, 16], sizes = [32, 8], strides = [1, 1]} : vector<32x32xf32> to vector<32x8xf32>
    %196 = arith.truncf %195 : vector<32x8xf32> to vector<32x8xbf16>
    %197 = vector.extract_strided_slice %148 {offsets = [0, 16], sizes = [32, 8], strides = [1, 1]} : vector<32x32xf32> to vector<32x8xf32>
    %198 = arith.truncf %197 : vector<32x8xf32> to vector<32x8xbf16>
    "tpu.trace_start"() <{level = 10 : i32, message = "qd,kd->qk"}> : () -> ()
    %cst_75 = arith.constant dense<0.000000e+00> : vector<32x32xf32>
    %199 = tpu.matmul %194, %196, %cst_75 {dimension_numbers = #tpu.dot_dimension_numbers<[1], [1], [0], [0], [0, 0, 1, 0], [], []>} : vector<32x8xbf16>, vector<32x8xbf16>, vector<32x32xf32> -> vector<32x32xf32>
    "tpu.trace_stop"() : () -> ()
    %cst_76 = arith.constant 0.353553385 : f32
    %200 = vector.broadcast %cst_76 : f32 to vector<32x32xf32>
    %201 = arith.mulf %199, %200 : vector<32x32xf32>
    %202 = arith.addf %201, %109 : vector<32x32xf32>
    %cst_77 = arith.constant dense<0xFF800000> : vector<32xf32>
    %203 = vector.multi_reduction <maximumf>, %202, %cst_77 [1] : vector<32x32xf32> to vector<32xf32>
    %204 = vector.shape_cast %203 : vector<32xf32> to vector<32x1xf32>
    %205 = vector.broadcast %204 : vector<32x1xf32> to vector<32x32xf32>
    %206 = arith.subf %202, %205 : vector<32x32xf32>
    %207 = math.exp %206 : vector<32x32xf32>
    %cst_78 = arith.constant dense<0.000000e+00> : vector<32xf32>
    %208 = vector.multi_reduction <add>, %207, %cst_78 [1] : vector<32x32xf32> to vector<32xf32>
    %209 = vector.shape_cast %208 : vector<32xf32> to vector<32x1xf32>
    %210 = tpu.reciprocal %209 {approx = true} : vector<32x1xf32> -> vector<32x1xf32>
    %211 = vector.broadcast %210 : vector<32x1xf32> to vector<32x32xf32>
    %212 = arith.mulf %207, %211 : vector<32x32xf32>
    %213 = arith.truncf %212 : vector<32x32xf32> to vector<32x32xbf16>
    %cst_79 = arith.constant dense<0.000000e+00> : vector<32x8xf32>
    %214 = tpu.matmul %213, %198, %cst_79 {dimension_numbers = #tpu.dot_dimension_numbers<[1], [0], [0], [1], [0, 0, 1, 1], [], []>} : vector<32x32xbf16>, vector<32x8xbf16>, vector<32x8xf32> -> vector<32x8xf32>
    %215 = vector.extract_strided_slice %146 {offsets = [0, 24], sizes = [32, 8], strides = [1, 1]} : vector<32x32xf32> to vector<32x8xf32>
    %216 = arith.truncf %215 : vector<32x8xf32> to vector<32x8xbf16>
    %217 = vector.extract_strided_slice %147 {offsets = [0, 24], sizes = [32, 8], strides = [1, 1]} : vector<32x32xf32> to vector<32x8xf32>
    %218 = arith.truncf %217 : vector<32x8xf32> to vector<32x8xbf16>
    %219 = vector.extract_strided_slice %148 {offsets = [0, 24], sizes = [32, 8], strides = [1, 1]} : vector<32x32xf32> to vector<32x8xf32>
    %220 = arith.truncf %219 : vector<32x8xf32> to vector<32x8xbf16>
    "tpu.trace_start"() <{level = 10 : i32, message = "qd,kd->qk"}> : () -> ()
    %cst_80 = arith.constant dense<0.000000e+00> : vector<32x32xf32>
    %221 = tpu.matmul %216, %218, %cst_80 {dimension_numbers = #tpu.dot_dimension_numbers<[1], [1], [0], [0], [0, 0, 1, 0], [], []>} : vector<32x8xbf16>, vector<32x8xbf16>, vector<32x32xf32> -> vector<32x32xf32>
    "tpu.trace_stop"() : () -> ()
    %cst_81 = arith.constant 0.353553385 : f32
    %222 = vector.broadcast %cst_81 : f32 to vector<32x32xf32>
    %223 = arith.mulf %221, %222 : vector<32x32xf32>
    %224 = arith.addf %223, %109 : vector<32x32xf32>
    %cst_82 = arith.constant dense<0xFF800000> : vector<32xf32>
    %225 = vector.multi_reduction <maximumf>, %224, %cst_82 [1] : vector<32x32xf32> to vector<32xf32>
    %226 = vector.shape_cast %225 : vector<32xf32> to vector<32x1xf32>
    %227 = vector.broadcast %226 : vector<32x1xf32> to vector<32x32xf32>
    %228 = arith.subf %224, %227 : vector<32x32xf32>
    %229 = math.exp %228 : vector<32x32xf32>
    %cst_83 = arith.constant dense<0.000000e+00> : vector<32xf32>
    %230 = vector.multi_reduction <add>, %229, %cst_83 [1] : vector<32x32xf32> to vector<32xf32>
    %231 = vector.shape_cast %230 : vector<32xf32> to vector<32x1xf32>
    %232 = tpu.reciprocal %231 {approx = true} : vector<32x1xf32> -> vector<32x1xf32>
    %233 = vector.broadcast %232 : vector<32x1xf32> to vector<32x32xf32>
    %234 = arith.mulf %229, %233 : vector<32x32xf32>
    %235 = arith.truncf %234 : vector<32x32xf32> to vector<32x32xbf16>
    %cst_84 = arith.constant dense<0.000000e+00> : vector<32x8xf32>
    %236 = tpu.matmul %235, %220, %cst_84 {dimension_numbers = #tpu.dot_dimension_numbers<[1], [0], [0], [1], [0, 0, 1, 1], [], []>} : vector<32x32xbf16>, vector<32x8xbf16>, vector<32x8xf32> -> vector<32x8xf32>
    %237 = tpu.concatenate %170, %192, %214, %236 in 1 : vector<32x8xf32>, vector<32x8xf32>, vector<32x8xf32>, vector<32x8xf32> -> vector<32x32xf32>
    %238 = arith.truncf %237 : vector<32x32xf32> to vector<32x32xbf16>
    %c0_85 = arith.constant 0 : index
    %c0_86 = arith.constant 0 : index
    %c0_87 = arith.constant 0 : index
    %239 = vector.load %arg12[%c0_85, %c0_86, %c0_87] : memref<2x32x32xbf16, #tpu.memory_space<vmem>>, vector<1x32x32xbf16>
    %240 = vector.shape_cast %239 : vector<1x32x32xbf16> to vector<32x32xbf16>
    %cst_88 = arith.constant dense<0.000000e+00> : vector<32x32xf32>
    %241 = tpu.matmul %238, %240, %cst_88 {dimension_numbers = #tpu.dot_dimension_numbers<[1], [0], [0], [1], [0, 0, 1, 1], [], []>} : vector<32x32xbf16>, vector<32x32xbf16>, vector<32x32xf32> -> vector<32x32xf32>
    %242 = arith.addf %108, %241 : vector<32x32xf32>
    %243 = vector.broadcast %115 : vector<1x32xf32> to vector<32x32xf32>
    %244 = arith.addf %242, %243 : vector<32x32xf32>
    %cst_89 = arith.constant dense<0.000000e+00> : vector<32xf32>
    %245 = vector.multi_reduction <add>, %244, %cst_89 [1] : vector<32x32xf32> to vector<32xf32>
    %246 = vector.shape_cast %245 : vector<32xf32> to vector<32x1xf32>
    %cst_90 = arith.constant 3.200000e+01 : f32
    %247 = vector.broadcast %cst_90 : f32 to vector<32x1xf32>
    %248 = arith.divf %246, %247 : vector<32x1xf32>
    %249 = vector.broadcast %248 : vector<32x1xf32> to vector<32x32xf32>
    %250 = arith.subf %244, %249 : vector<32x32xf32>
    %251 = arith.mulf %250, %250 : vector<32x32xf32>
    %cst_91 = arith.constant dense<0.000000e+00> : vector<32xf32>
    %252 = vector.multi_reduction <add>, %251, %cst_91 [1] : vector<32x32xf32> to vector<32xf32>
    %253 = vector.shape_cast %252 : vector<32xf32> to vector<32x1xf32>
    %cst_92 = arith.constant 3.200000e+01 : f32
    %254 = vector.broadcast %cst_92 : f32 to vector<32x1xf32>
    %255 = arith.divf %253, %254 : vector<32x1xf32>
    %cst_93 = arith.constant 9.99999974E-6 : f32
    %256 = vector.broadcast %cst_93 : f32 to vector<32x1xf32>
    %257 = arith.addf %255, %256 : vector<32x1xf32>
    %258 = math.rsqrt %257 : vector<32x1xf32>
    %259 = vector.broadcast %258 : vector<32x1xf32> to vector<32x32xf32>
    %260 = arith.mulf %250, %259 : vector<32x32xf32>
    %261 = vector.broadcast %116 : vector<1x32xf32> to vector<32x32xf32>
    %262 = arith.mulf %260, %261 : vector<32x32xf32>
    %263 = vector.broadcast %117 : vector<1x32xf32> to vector<32x32xf32>
    %264 = arith.addf %262, %263 : vector<32x32xf32>
    %265 = arith.truncf %264 : vector<32x32xf32> to vector<32x32xbf16>
    %c0_94 = arith.constant 0 : index
    %c0_95 = arith.constant 0 : index
    %c0_96 = arith.constant 0 : index
    %266 = vector.load %arg13[%c0_94, %c0_95, %c0_96] : memref<2x32x128xbf16, #tpu.memory_space<vmem>>, vector<1x32x128xbf16>
    %267 = vector.shape_cast %266 : vector<1x32x128xbf16> to vector<32x128xbf16>
    %cst_97 = arith.constant dense<0.000000e+00> : vector<32x128xf32>
    %268 = tpu.matmul %265, %267, %cst_97 {dimension_numbers = #tpu.dot_dimension_numbers<[1], [0], [0], [1], [0, 0, 1, 1], [], []>} : vector<32x32xbf16>, vector<32x128xbf16>, vector<32x128xf32> -> vector<32x128xf32>
    %269 = vector.broadcast %118 : vector<1x128xf32> to vector<32x128xf32>
    %270 = arith.addf %268, %269 : vector<32x128xf32>
    %271 = arith.mulf %270, %270 : vector<32x128xf32>
    %272 = arith.mulf %270, %271 : vector<32x128xf32>
    %cst_98 = arith.constant 4.471500e-02 : f32
    %273 = vector.broadcast %cst_98 : f32 to vector<32x128xf32>
    %274 = arith.mulf %273, %272 : vector<32x128xf32>
    %275 = arith.addf %270, %274 : vector<32x128xf32>
    %cst_99 = arith.constant 0.797884583 : f32
    %276 = vector.broadcast %cst_99 : f32 to vector<32x128xf32>
    %277 = arith.mulf %276, %275 : vector<32x128xf32>
    %278 = math.tanh %277 : vector<32x128xf32>
    %cst_100 = arith.constant 1.000000e+00 : f32
    %279 = vector.broadcast %cst_100 : f32 to vector<32x128xf32>
    %280 = arith.addf %279, %278 : vector<32x128xf32>
    %cst_101 = arith.constant 5.000000e-01 : f32
    %281 = vector.broadcast %cst_101 : f32 to vector<32x128xf32>
    %282 = arith.mulf %281, %280 : vector<32x128xf32>
    %283 = arith.mulf %270, %282 : vector<32x128xf32>
    %284 = arith.truncf %283 : vector<32x128xf32> to vector<32x128xbf16>
    %c0_102 = arith.constant 0 : index
    %c0_103 = arith.constant 0 : index
    %c0_104 = arith.constant 0 : index
    %285 = vector.load %arg14[%c0_102, %c0_103, %c0_104] : memref<2x128x32xbf16, #tpu.memory_space<vmem>>, vector<1x128x32xbf16>
    %286 = vector.shape_cast %285 : vector<1x128x32xbf16> to vector<128x32xbf16>
    %cst_105 = arith.constant dense<0.000000e+00> : vector<32x32xf32>
    %287 = tpu.matmul %284, %286, %cst_105 {dimension_numbers = #tpu.dot_dimension_numbers<[1], [0], [0], [1], [0, 0, 1, 1], [], []>} : vector<32x128xbf16>, vector<128x32xbf16>, vector<32x32xf32> -> vector<32x32xf32>
    %288 = arith.addf %244, %287 : vector<32x32xf32>
    %289 = vector.broadcast %119 : vector<1x32xf32> to vector<32x32xf32>
    %290 = arith.addf %288, %289 : vector<32x32xf32>
    %c1 = arith.constant 1 : index
    %c0_106 = arith.constant 0 : index
    %c0_107 = arith.constant 0 : index
    %291 = vector.load %arg15[%c1, %c0_106, %c0_107] : memref<2x8x128xf32, #tpu.memory_space<vmem>>, vector<1x8x128xf32>
    %292 = vector.shape_cast %291 : vector<1x8x128xf32> to vector<8x128xf32>
    %293 = vector.extract_strided_slice %292 {offsets = [0, 0], sizes = [1, 32], strides = [1, 1]} : vector<8x128xf32> to vector<1x32xf32>
    %294 = vector.extract_strided_slice %292 {offsets = [1, 0], sizes = [1, 32], strides = [1, 1]} : vector<8x128xf32> to vector<1x32xf32>
    %295 = vector.extract_strided_slice %292 {offsets = [2, 0], sizes = [1, 96], strides = [1, 1]} : vector<8x128xf32> to vector<1x96xf32>
    %296 = vector.extract_strided_slice %292 {offsets = [3, 0], sizes = [1, 32], strides = [1, 1]} : vector<8x128xf32> to vector<1x32xf32>
    %297 = vector.extract_strided_slice %292 {offsets = [4, 0], sizes = [1, 32], strides = [1, 1]} : vector<8x128xf32> to vector<1x32xf32>
    %298 = vector.extract_strided_slice %292 {offsets = [5, 0], sizes = [1, 32], strides = [1, 1]} : vector<8x128xf32> to vector<1x32xf32>
    %299 = vector.extract_strided_slice %292 {offsets = [6, 0], sizes = [1, 128], strides = [1, 1]} : vector<8x128xf32> to vector<1x128xf32>
    %300 = vector.extract_strided_slice %292 {offsets = [7, 0], sizes = [1, 32], strides = [1, 1]} : vector<8x128xf32> to vector<1x32xf32>
    %cst_108 = arith.constant dense<0.000000e+00> : vector<32xf32>
    %301 = vector.multi_reduction <add>, %290, %cst_108 [1] : vector<32x32xf32> to vector<32xf32>
    %302 = vector.shape_cast %301 : vector<32xf32> to vector<32x1xf32>
    %cst_109 = arith.constant 3.200000e+01 : f32
    %303 = vector.broadcast %cst_109 : f32 to vector<32x1xf32>
    %304 = arith.divf %302, %303 : vector<32x1xf32>
    %305 = vector.broadcast %304 : vector<32x1xf32> to vector<32x32xf32>
    %306 = arith.subf %290, %305 : vector<32x32xf32>
    %307 = arith.mulf %306, %306 : vector<32x32xf32>
    %cst_110 = arith.constant dense<0.000000e+00> : vector<32xf32>
    %308 = vector.multi_reduction <add>, %307, %cst_110 [1] : vector<32x32xf32> to vector<32xf32>
    %309 = vector.shape_cast %308 : vector<32xf32> to vector<32x1xf32>
    %cst_111 = arith.constant 3.200000e+01 : f32
    %310 = vector.broadcast %cst_111 : f32 to vector<32x1xf32>
    %311 = arith.divf %309, %310 : vector<32x1xf32>
    %cst_112 = arith.constant 9.99999974E-6 : f32
    %312 = vector.broadcast %cst_112 : f32 to vector<32x1xf32>
    %313 = arith.addf %311, %312 : vector<32x1xf32>
    %314 = math.rsqrt %313 : vector<32x1xf32>
    %315 = vector.broadcast %314 : vector<32x1xf32> to vector<32x32xf32>
    %316 = arith.mulf %306, %315 : vector<32x32xf32>
    %317 = vector.broadcast %293 : vector<1x32xf32> to vector<32x32xf32>
    %318 = arith.mulf %316, %317 : vector<32x32xf32>
    %319 = vector.broadcast %294 : vector<1x32xf32> to vector<32x32xf32>
    %320 = arith.addf %318, %319 : vector<32x32xf32>
    %321 = arith.truncf %320 : vector<32x32xf32> to vector<32x32xbf16>
    %c1_113 = arith.constant 1 : index
    %c0_114 = arith.constant 0 : index
    %c0_115 = arith.constant 0 : index
    %322 = vector.load %arg11[%c1_113, %c0_114, %c0_115] : memref<2x32x96xbf16, #tpu.memory_space<vmem>>, vector<1x32x96xbf16>
    %323 = vector.shape_cast %322 : vector<1x32x96xbf16> to vector<32x96xbf16>
    %cst_116 = arith.constant dense<0.000000e+00> : vector<32x96xf32>
    %324 = tpu.matmul %321, %323, %cst_116 {dimension_numbers = #tpu.dot_dimension_numbers<[1], [0], [0], [1], [0, 0, 1, 1], [], []>} : vector<32x32xbf16>, vector<32x96xbf16>, vector<32x96xf32> -> vector<32x96xf32>
    %325 = vector.broadcast %295 : vector<1x96xf32> to vector<32x96xf32>
    %326 = arith.addf %324, %325 : vector<32x96xf32>
    %327 = vector.extract_strided_slice %326 {offsets = [0, 0], sizes = [32, 32], strides = [1, 1]} : vector<32x96xf32> to vector<32x32xf32>
    %328 = vector.extract_strided_slice %326 {offsets = [0, 32], sizes = [32, 32], strides = [1, 1]} : vector<32x96xf32> to vector<32x32xf32>
    %329 = vector.extract_strided_slice %326 {offsets = [0, 64], sizes = [32, 32], strides = [1, 1]} : vector<32x96xf32> to vector<32x32xf32>
    %330 = vector.extract_strided_slice %327 {offsets = [0, 0], sizes = [32, 8], strides = [1, 1]} : vector<32x32xf32> to vector<32x8xf32>
    %331 = arith.truncf %330 : vector<32x8xf32> to vector<32x8xbf16>
    %332 = vector.extract_strided_slice %328 {offsets = [0, 0], sizes = [32, 8], strides = [1, 1]} : vector<32x32xf32> to vector<32x8xf32>
    %333 = arith.truncf %332 : vector<32x8xf32> to vector<32x8xbf16>
    %334 = vector.extract_strided_slice %329 {offsets = [0, 0], sizes = [32, 8], strides = [1, 1]} : vector<32x32xf32> to vector<32x8xf32>
    %335 = arith.truncf %334 : vector<32x8xf32> to vector<32x8xbf16>
    "tpu.trace_start"() <{level = 10 : i32, message = "qd,kd->qk"}> : () -> ()
    %cst_117 = arith.constant dense<0.000000e+00> : vector<32x32xf32>
    %336 = tpu.matmul %331, %333, %cst_117 {dimension_numbers = #tpu.dot_dimension_numbers<[1], [1], [0], [0], [0, 0, 1, 0], [], []>} : vector<32x8xbf16>, vector<32x8xbf16>, vector<32x32xf32> -> vector<32x32xf32>
    "tpu.trace_stop"() : () -> ()
    %cst_118 = arith.constant 0.353553385 : f32
    %337 = vector.broadcast %cst_118 : f32 to vector<32x32xf32>
    %338 = arith.mulf %336, %337 : vector<32x32xf32>
    %339 = arith.addf %338, %109 : vector<32x32xf32>
    %cst_119 = arith.constant dense<0xFF800000> : vector<32xf32>
    %340 = vector.multi_reduction <maximumf>, %339, %cst_119 [1] : vector<32x32xf32> to vector<32xf32>
    %341 = vector.shape_cast %340 : vector<32xf32> to vector<32x1xf32>
    %342 = vector.broadcast %341 : vector<32x1xf32> to vector<32x32xf32>
    %343 = arith.subf %339, %342 : vector<32x32xf32>
    %344 = math.exp %343 : vector<32x32xf32>
    %cst_120 = arith.constant dense<0.000000e+00> : vector<32xf32>
    %345 = vector.multi_reduction <add>, %344, %cst_120 [1] : vector<32x32xf32> to vector<32xf32>
    %346 = vector.shape_cast %345 : vector<32xf32> to vector<32x1xf32>
    %347 = tpu.reciprocal %346 {approx = true} : vector<32x1xf32> -> vector<32x1xf32>
    %348 = vector.broadcast %347 : vector<32x1xf32> to vector<32x32xf32>
    %349 = arith.mulf %344, %348 : vector<32x32xf32>
    %350 = arith.truncf %349 : vector<32x32xf32> to vector<32x32xbf16>
    %cst_121 = arith.constant dense<0.000000e+00> : vector<32x8xf32>
    %351 = tpu.matmul %350, %335, %cst_121 {dimension_numbers = #tpu.dot_dimension_numbers<[1], [0], [0], [1], [0, 0, 1, 1], [], []>} : vector<32x32xbf16>, vector<32x8xbf16>, vector<32x8xf32> -> vector<32x8xf32>
    %352 = vector.extract_strided_slice %327 {offsets = [0, 8], sizes = [32, 8], strides = [1, 1]} : vector<32x32xf32> to vector<32x8xf32>
    %353 = arith.truncf %352 : vector<32x8xf32> to vector<32x8xbf16>
    %354 = vector.extract_strided_slice %328 {offsets = [0, 8], sizes = [32, 8], strides = [1, 1]} : vector<32x32xf32> to vector<32x8xf32>
    %355 = arith.truncf %354 : vector<32x8xf32> to vector<32x8xbf16>
    %356 = vector.extract_strided_slice %329 {offsets = [0, 8], sizes = [32, 8], strides = [1, 1]} : vector<32x32xf32> to vector<32x8xf32>
    %357 = arith.truncf %356 : vector<32x8xf32> to vector<32x8xbf16>
    "tpu.trace_start"() <{level = 10 : i32, message = "qd,kd->qk"}> : () -> ()
    %cst_122 = arith.constant dense<0.000000e+00> : vector<32x32xf32>
    %358 = tpu.matmul %353, %355, %cst_122 {dimension_numbers = #tpu.dot_dimension_numbers<[1], [1], [0], [0], [0, 0, 1, 0], [], []>} : vector<32x8xbf16>, vector<32x8xbf16>, vector<32x32xf32> -> vector<32x32xf32>
    "tpu.trace_stop"() : () -> ()
    %cst_123 = arith.constant 0.353553385 : f32
    %359 = vector.broadcast %cst_123 : f32 to vector<32x32xf32>
    %360 = arith.mulf %358, %359 : vector<32x32xf32>
    %361 = arith.addf %360, %109 : vector<32x32xf32>
    %cst_124 = arith.constant dense<0xFF800000> : vector<32xf32>
    %362 = vector.multi_reduction <maximumf>, %361, %cst_124 [1] : vector<32x32xf32> to vector<32xf32>
    %363 = vector.shape_cast %362 : vector<32xf32> to vector<32x1xf32>
    %364 = vector.broadcast %363 : vector<32x1xf32> to vector<32x32xf32>
    %365 = arith.subf %361, %364 : vector<32x32xf32>
    %366 = math.exp %365 : vector<32x32xf32>
    %cst_125 = arith.constant dense<0.000000e+00> : vector<32xf32>
    %367 = vector.multi_reduction <add>, %366, %cst_125 [1] : vector<32x32xf32> to vector<32xf32>
    %368 = vector.shape_cast %367 : vector<32xf32> to vector<32x1xf32>
    %369 = tpu.reciprocal %368 {approx = true} : vector<32x1xf32> -> vector<32x1xf32>
    %370 = vector.broadcast %369 : vector<32x1xf32> to vector<32x32xf32>
    %371 = arith.mulf %366, %370 : vector<32x32xf32>
    %372 = arith.truncf %371 : vector<32x32xf32> to vector<32x32xbf16>
    %cst_126 = arith.constant dense<0.000000e+00> : vector<32x8xf32>
    %373 = tpu.matmul %372, %357, %cst_126 {dimension_numbers = #tpu.dot_dimension_numbers<[1], [0], [0], [1], [0, 0, 1, 1], [], []>} : vector<32x32xbf16>, vector<32x8xbf16>, vector<32x8xf32> -> vector<32x8xf32>
    %374 = vector.extract_strided_slice %327 {offsets = [0, 16], sizes = [32, 8], strides = [1, 1]} : vector<32x32xf32> to vector<32x8xf32>
    %375 = arith.truncf %374 : vector<32x8xf32> to vector<32x8xbf16>
    %376 = vector.extract_strided_slice %328 {offsets = [0, 16], sizes = [32, 8], strides = [1, 1]} : vector<32x32xf32> to vector<32x8xf32>
    %377 = arith.truncf %376 : vector<32x8xf32> to vector<32x8xbf16>
    %378 = vector.extract_strided_slice %329 {offsets = [0, 16], sizes = [32, 8], strides = [1, 1]} : vector<32x32xf32> to vector<32x8xf32>
    %379 = arith.truncf %378 : vector<32x8xf32> to vector<32x8xbf16>
    "tpu.trace_start"() <{level = 10 : i32, message = "qd,kd->qk"}> : () -> ()
    %cst_127 = arith.constant dense<0.000000e+00> : vector<32x32xf32>
    %380 = tpu.matmul %375, %377, %cst_127 {dimension_numbers = #tpu.dot_dimension_numbers<[1], [1], [0], [0], [0, 0, 1, 0], [], []>} : vector<32x8xbf16>, vector<32x8xbf16>, vector<32x32xf32> -> vector<32x32xf32>
    "tpu.trace_stop"() : () -> ()
    %cst_128 = arith.constant 0.353553385 : f32
    %381 = vector.broadcast %cst_128 : f32 to vector<32x32xf32>
    %382 = arith.mulf %380, %381 : vector<32x32xf32>
    %383 = arith.addf %382, %109 : vector<32x32xf32>
    %cst_129 = arith.constant dense<0xFF800000> : vector<32xf32>
    %384 = vector.multi_reduction <maximumf>, %383, %cst_129 [1] : vector<32x32xf32> to vector<32xf32>
    %385 = vector.shape_cast %384 : vector<32xf32> to vector<32x1xf32>
    %386 = vector.broadcast %385 : vector<32x1xf32> to vector<32x32xf32>
    %387 = arith.subf %383, %386 : vector<32x32xf32>
    %388 = math.exp %387 : vector<32x32xf32>
    %cst_130 = arith.constant dense<0.000000e+00> : vector<32xf32>
    %389 = vector.multi_reduction <add>, %388, %cst_130 [1] : vector<32x32xf32> to vector<32xf32>
    %390 = vector.shape_cast %389 : vector<32xf32> to vector<32x1xf32>
    %391 = tpu.reciprocal %390 {approx = true} : vector<32x1xf32> -> vector<32x1xf32>
    %392 = vector.broadcast %391 : vector<32x1xf32> to vector<32x32xf32>
    %393 = arith.mulf %388, %392 : vector<32x32xf32>
    %394 = arith.truncf %393 : vector<32x32xf32> to vector<32x32xbf16>
    %cst_131 = arith.constant dense<0.000000e+00> : vector<32x8xf32>
    %395 = tpu.matmul %394, %379, %cst_131 {dimension_numbers = #tpu.dot_dimension_numbers<[1], [0], [0], [1], [0, 0, 1, 1], [], []>} : vector<32x32xbf16>, vector<32x8xbf16>, vector<32x8xf32> -> vector<32x8xf32>
    %396 = vector.extract_strided_slice %327 {offsets = [0, 24], sizes = [32, 8], strides = [1, 1]} : vector<32x32xf32> to vector<32x8xf32>
    %397 = arith.truncf %396 : vector<32x8xf32> to vector<32x8xbf16>
    %398 = vector.extract_strided_slice %328 {offsets = [0, 24], sizes = [32, 8], strides = [1, 1]} : vector<32x32xf32> to vector<32x8xf32>
    %399 = arith.truncf %398 : vector<32x8xf32> to vector<32x8xbf16>
    %400 = vector.extract_strided_slice %329 {offsets = [0, 24], sizes = [32, 8], strides = [1, 1]} : vector<32x32xf32> to vector<32x8xf32>
    %401 = arith.truncf %400 : vector<32x8xf32> to vector<32x8xbf16>
    "tpu.trace_start"() <{level = 10 : i32, message = "qd,kd->qk"}> : () -> ()
    %cst_132 = arith.constant dense<0.000000e+00> : vector<32x32xf32>
    %402 = tpu.matmul %397, %399, %cst_132 {dimension_numbers = #tpu.dot_dimension_numbers<[1], [1], [0], [0], [0, 0, 1, 0], [], []>} : vector<32x8xbf16>, vector<32x8xbf16>, vector<32x32xf32> -> vector<32x32xf32>
    "tpu.trace_stop"() : () -> ()
    %cst_133 = arith.constant 0.353553385 : f32
    %403 = vector.broadcast %cst_133 : f32 to vector<32x32xf32>
    %404 = arith.mulf %402, %403 : vector<32x32xf32>
    %405 = arith.addf %404, %109 : vector<32x32xf32>
    %cst_134 = arith.constant dense<0xFF800000> : vector<32xf32>
    %406 = vector.multi_reduction <maximumf>, %405, %cst_134 [1] : vector<32x32xf32> to vector<32xf32>
    %407 = vector.shape_cast %406 : vector<32xf32> to vector<32x1xf32>
    %408 = vector.broadcast %407 : vector<32x1xf32> to vector<32x32xf32>
    %409 = arith.subf %405, %408 : vector<32x32xf32>
    %410 = math.exp %409 : vector<32x32xf32>
    %cst_135 = arith.constant dense<0.000000e+00> : vector<32xf32>
    %411 = vector.multi_reduction <add>, %410, %cst_135 [1] : vector<32x32xf32> to vector<32xf32>
    %412 = vector.shape_cast %411 : vector<32xf32> to vector<32x1xf32>
    %413 = tpu.reciprocal %412 {approx = true} : vector<32x1xf32> -> vector<32x1xf32>
    %414 = vector.broadcast %413 : vector<32x1xf32> to vector<32x32xf32>
    %415 = arith.mulf %410, %414 : vector<32x32xf32>
    %416 = arith.truncf %415 : vector<32x32xf32> to vector<32x32xbf16>
    %cst_136 = arith.constant dense<0.000000e+00> : vector<32x8xf32>
    %417 = tpu.matmul %416, %401, %cst_136 {dimension_numbers = #tpu.dot_dimension_numbers<[1], [0], [0], [1], [0, 0, 1, 1], [], []>} : vector<32x32xbf16>, vector<32x8xbf16>, vector<32x8xf32> -> vector<32x8xf32>
    %418 = tpu.concatenate %351, %373, %395, %417 in 1 : vector<32x8xf32>, vector<32x8xf32>, vector<32x8xf32>, vector<32x8xf32> -> vector<32x32xf32>
    %419 = arith.truncf %418 : vector<32x32xf32> to vector<32x32xbf16>
    %c1_137 = arith.constant 1 : index
    %c0_138 = arith.constant 0 : index
    %c0_139 = arith.constant 0 : index
    %420 = vector.load %arg12[%c1_137, %c0_138, %c0_139] : memref<2x32x32xbf16, #tpu.memory_space<vmem>>, vector<1x32x32xbf16>
    %421 = vector.shape_cast %420 : vector<1x32x32xbf16> to vector<32x32xbf16>
    %cst_140 = arith.constant dense<0.000000e+00> : vector<32x32xf32>
    %422 = tpu.matmul %419, %421, %cst_140 {dimension_numbers = #tpu.dot_dimension_numbers<[1], [0], [0], [1], [0, 0, 1, 1], [], []>} : vector<32x32xbf16>, vector<32x32xbf16>, vector<32x32xf32> -> vector<32x32xf32>
    %423 = arith.addf %290, %422 : vector<32x32xf32>
    %424 = vector.broadcast %296 : vector<1x32xf32> to vector<32x32xf32>
    %425 = arith.addf %423, %424 : vector<32x32xf32>
    %cst_141 = arith.constant dense<0.000000e+00> : vector<32xf32>
    %426 = vector.multi_reduction <add>, %425, %cst_141 [1] : vector<32x32xf32> to vector<32xf32>
    %427 = vector.shape_cast %426 : vector<32xf32> to vector<32x1xf32>
    %cst_142 = arith.constant 3.200000e+01 : f32
    %428 = vector.broadcast %cst_142 : f32 to vector<32x1xf32>
    %429 = arith.divf %427, %428 : vector<32x1xf32>
    %430 = vector.broadcast %429 : vector<32x1xf32> to vector<32x32xf32>
    %431 = arith.subf %425, %430 : vector<32x32xf32>
    %432 = arith.mulf %431, %431 : vector<32x32xf32>
    %cst_143 = arith.constant dense<0.000000e+00> : vector<32xf32>
    %433 = vector.multi_reduction <add>, %432, %cst_143 [1] : vector<32x32xf32> to vector<32xf32>
    %434 = vector.shape_cast %433 : vector<32xf32> to vector<32x1xf32>
    %cst_144 = arith.constant 3.200000e+01 : f32
    %435 = vector.broadcast %cst_144 : f32 to vector<32x1xf32>
    %436 = arith.divf %434, %435 : vector<32x1xf32>
    %cst_145 = arith.constant 9.99999974E-6 : f32
    %437 = vector.broadcast %cst_145 : f32 to vector<32x1xf32>
    %438 = arith.addf %436, %437 : vector<32x1xf32>
    %439 = math.rsqrt %438 : vector<32x1xf32>
    %440 = vector.broadcast %439 : vector<32x1xf32> to vector<32x32xf32>
    %441 = arith.mulf %431, %440 : vector<32x32xf32>
    %442 = vector.broadcast %297 : vector<1x32xf32> to vector<32x32xf32>
    %443 = arith.mulf %441, %442 : vector<32x32xf32>
    %444 = vector.broadcast %298 : vector<1x32xf32> to vector<32x32xf32>
    %445 = arith.addf %443, %444 : vector<32x32xf32>
    %446 = arith.truncf %445 : vector<32x32xf32> to vector<32x32xbf16>
    %c1_146 = arith.constant 1 : index
    %c0_147 = arith.constant 0 : index
    %c0_148 = arith.constant 0 : index
    %447 = vector.load %arg13[%c1_146, %c0_147, %c0_148] : memref<2x32x128xbf16, #tpu.memory_space<vmem>>, vector<1x32x128xbf16>
    %448 = vector.shape_cast %447 : vector<1x32x128xbf16> to vector<32x128xbf16>
    %cst_149 = arith.constant dense<0.000000e+00> : vector<32x128xf32>
    %449 = tpu.matmul %446, %448, %cst_149 {dimension_numbers = #tpu.dot_dimension_numbers<[1], [0], [0], [1], [0, 0, 1, 1], [], []>} : vector<32x32xbf16>, vector<32x128xbf16>, vector<32x128xf32> -> vector<32x128xf32>
    %450 = vector.broadcast %299 : vector<1x128xf32> to vector<32x128xf32>
    %451 = arith.addf %449, %450 : vector<32x128xf32>
    %452 = arith.mulf %451, %451 : vector<32x128xf32>
    %453 = arith.mulf %451, %452 : vector<32x128xf32>
    %cst_150 = arith.constant 4.471500e-02 : f32
    %454 = vector.broadcast %cst_150 : f32 to vector<32x128xf32>
    %455 = arith.mulf %454, %453 : vector<32x128xf32>
    %456 = arith.addf %451, %455 : vector<32x128xf32>
    %cst_151 = arith.constant 0.797884583 : f32
    %457 = vector.broadcast %cst_151 : f32 to vector<32x128xf32>
    %458 = arith.mulf %457, %456 : vector<32x128xf32>
    %459 = math.tanh %458 : vector<32x128xf32>
    %cst_152 = arith.constant 1.000000e+00 : f32
    %460 = vector.broadcast %cst_152 : f32 to vector<32x128xf32>
    %461 = arith.addf %460, %459 : vector<32x128xf32>
    %cst_153 = arith.constant 5.000000e-01 : f32
    %462 = vector.broadcast %cst_153 : f32 to vector<32x128xf32>
    %463 = arith.mulf %462, %461 : vector<32x128xf32>
    %464 = arith.mulf %451, %463 : vector<32x128xf32>
    %465 = arith.truncf %464 : vector<32x128xf32> to vector<32x128xbf16>
    %c1_154 = arith.constant 1 : index
    %c0_155 = arith.constant 0 : index
    %c0_156 = arith.constant 0 : index
    %466 = vector.load %arg14[%c1_154, %c0_155, %c0_156] : memref<2x128x32xbf16, #tpu.memory_space<vmem>>, vector<1x128x32xbf16>
    %467 = vector.shape_cast %466 : vector<1x128x32xbf16> to vector<128x32xbf16>
    %cst_157 = arith.constant dense<0.000000e+00> : vector<32x32xf32>
    %468 = tpu.matmul %465, %467, %cst_157 {dimension_numbers = #tpu.dot_dimension_numbers<[1], [0], [0], [1], [0, 0, 1, 1], [], []>} : vector<32x128xbf16>, vector<128x32xbf16>, vector<32x32xf32> -> vector<32x32xf32>
    %469 = arith.addf %425, %468 : vector<32x32xf32>
    %470 = vector.broadcast %300 : vector<1x32xf32> to vector<32x32xf32>
    %471 = arith.addf %469, %470 : vector<32x32xf32>
    %c0_158 = arith.constant 0 : index
    %c0_159 = arith.constant 0 : index
    %472 = vector.load %arg16[%c0_158, %c0_159] : memref<2x32xf32, #tpu.memory_space<vmem>>, vector<1x32xf32>
    %c1_160 = arith.constant 1 : index
    %c0_161 = arith.constant 0 : index
    %473 = vector.load %arg16[%c1_160, %c0_161] : memref<2x32xf32, #tpu.memory_space<vmem>>, vector<1x32xf32>
    %cst_162 = arith.constant dense<0.000000e+00> : vector<32xf32>
    %474 = vector.multi_reduction <add>, %471, %cst_162 [1] : vector<32x32xf32> to vector<32xf32>
    %475 = vector.shape_cast %474 : vector<32xf32> to vector<32x1xf32>
    %cst_163 = arith.constant 3.200000e+01 : f32
    %476 = vector.broadcast %cst_163 : f32 to vector<32x1xf32>
    %477 = arith.divf %475, %476 : vector<32x1xf32>
    %478 = vector.broadcast %477 : vector<32x1xf32> to vector<32x32xf32>
    %479 = arith.subf %471, %478 : vector<32x32xf32>
    %480 = arith.mulf %479, %479 : vector<32x32xf32>
    %cst_164 = arith.constant dense<0.000000e+00> : vector<32xf32>
    %481 = vector.multi_reduction <add>, %480, %cst_164 [1] : vector<32x32xf32> to vector<32xf32>
    %482 = vector.shape_cast %481 : vector<32xf32> to vector<32x1xf32>
    %cst_165 = arith.constant 3.200000e+01 : f32
    %483 = vector.broadcast %cst_165 : f32 to vector<32x1xf32>
    %484 = arith.divf %482, %483 : vector<32x1xf32>
    %cst_166 = arith.constant 9.99999974E-6 : f32
    %485 = vector.broadcast %cst_166 : f32 to vector<32x1xf32>
    %486 = arith.addf %484, %485 : vector<32x1xf32>
    %487 = math.rsqrt %486 : vector<32x1xf32>
    %488 = vector.broadcast %487 : vector<32x1xf32> to vector<32x32xf32>
    %489 = arith.mulf %479, %488 : vector<32x32xf32>
    %490 = vector.broadcast %472 : vector<1x32xf32> to vector<32x32xf32>
    %491 = arith.mulf %489, %490 : vector<32x32xf32>
    %492 = vector.broadcast %473 : vector<1x32xf32> to vector<32x32xf32>
    %493 = arith.addf %491, %492 : vector<32x32xf32>
    %494 = arith.truncf %493 : vector<32x32xf32> to vector<32x32xbf16>
    %c0_167 = arith.constant 0 : index
    %c0_168 = arith.constant 0 : index
    %495 = vector.load %arg17[%c0_167, %c0_168] : memref<32x1152xbf16, #tpu.memory_space<vmem>>, vector<32x1152xbf16>
    %cst_169 = arith.constant dense<0.000000e+00> : vector<32x1152xf32>
    %496 = tpu.matmul %494, %495, %cst_169 {dimension_numbers = #tpu.dot_dimension_numbers<[1], [0], [0], [1], [0, 0, 1, 1], [], []>} : vector<32x32xbf16>, vector<32x1152xbf16>, vector<32x1152xf32> -> vector<32x1152xf32>
    %c0_170 = arith.constant 0 : index
    %c0_171 = arith.constant 0 : index
    %497 = vector.load %arg18[%c0_170, %c0_171] : memref<1x1152xf32, #tpu.memory_space<vmem>>, vector<1x1152xf32>
    %498 = vector.broadcast %497 : vector<1x1152xf32> to vector<32x1152xf32>
    %499 = arith.addf %496, %498 : vector<32x1152xf32>
    %c0_172 = arith.constant 0 : index
    %c0_173 = arith.constant 0 : index
    %500 = vector.load %arg20[%c0_172, %c0_173] : memref<32x1152xf32, #tpu.memory_space<vmem>>, vector<32x1152xf32>
    tpu.vector_store %arg20[%c0_172, %c0_173], %499 {strides = array<i32>} : memref<32x1152xf32, #tpu.memory_space<vmem>>, vector<32x1152xf32>,
    return
  }
  func.func @transform_0(%arg0: i32) -> (i32, i32) {
    %c0_i32 = arith.constant 0 : i32
    %c0_i32_0 = arith.constant 0 : i32
    %c0_i32_1 = arith.constant 0 : i32
    return %c0_i32, %c0_i32_0 : i32, i32
  }
  func.func @transform_1(%arg0: i32) -> (i32, i32) {
    %c0_i32 = arith.constant 0 : i32
    %c0_i32_0 = arith.constant 0 : i32
    %c0_i32_1 = arith.constant 0 : i32
    return %c0_i32, %c0_i32_0 : i32, i32
  }
  func.func @transform_2(%arg0: i32) -> (i32, i32) {
    %c0_i32 = arith.constant 0 : i32
    %c0_i32_0 = arith.constant 0 : i32
    %c0_i32_1 = arith.constant 0 : i32
    return %c0_i32, %c0_i32_0 : i32, i32
  }
  func.func @transform_3(%arg0: i32) -> (i32, i32) {
    %c0_i32 = arith.constant 0 : i32
    %c0_i32_0 = arith.constant 0 : i32
    %c0_i32_1 = arith.constant 0 : i32
    return %c0_i32, %c0_i32_0 : i32, i32
  }
  func.func @transform_4(%arg0: i32) -> (i32, i32) {
    %c0_i32 = arith.constant 0 : i32
    %c0_i32_0 = arith.constant 0 : i32
    %c0_i32_1 = arith.constant 0 : i32
    return %c0_i32, %c0_i32_0 : i32, i32
  }
  func.func @transform_5(%arg0: i32) -> (i32, i32) {
    %c0_i32 = arith.constant 0 : i32
    %c0_i32_0 = arith.constant 0 : i32
    %c0_i32_1 = arith.constant 0 : i32
    return %c0_i32, %c0_i32_0 : i32, i32
  }
  func.func @transform_6(%arg0: i32) -> (i32, i32) {
    %c0_i32 = arith.constant 0 : i32
    %c0_i32_0 = arith.constant 0 : i32
    %c0_i32_1 = arith.constant 0 : i32
    return %c0_i32, %c0_i32_0 : i32, i32
  }
  func.func @transform_7(%arg0: i32) -> (i32, i32) {
    %c0_i32 = arith.constant 0 : i32
    %c0_i32_0 = arith.constant 0 : i32
    %c0_i32_1 = arith.constant 0 : i32
    return %c0_i32, %c0_i32_0 : i32, i32
  }
  func.func @transform_8(%arg0: i32) -> (i32, i32) {
    %c0_i32 = arith.constant 0 : i32
    %c0_i32_0 = arith.constant 0 : i32
    %c0_i32_1 = arith.constant 0 : i32
    return %c0_i32, %c0_i32_0 : i32, i32
  }
  func.func @transform_9(%arg0: i32) -> (i32, i32) {
    %c0_i32 = arith.constant 0 : i32
    %c0_i32_0 = arith.constant 0 : i32
    %c0_i32_1 = arith.constant 0 : i32
    return %c0_i32, %c0_i32_0 : i32, i32
  }
  func.func @transform_10(%arg0: i32) -> (i32, i32, i32) {
    %c0_i32 = arith.constant 0 : i32
    %c0_i32_0 = arith.constant 0 : i32
    %c0_i32_1 = arith.constant 0 : i32
    %c0_i32_2 = arith.constant 0 : i32
    return %c0_i32, %c0_i32_0, %c0_i32_1 : i32, i32, i32
  }
  func.func @transform_11(%arg0: i32) -> (i32, i32, i32) {
    %c0_i32 = arith.constant 0 : i32
    %c0_i32_0 = arith.constant 0 : i32
    %c0_i32_1 = arith.constant 0 : i32
    %c0_i32_2 = arith.constant 0 : i32
    return %c0_i32, %c0_i32_0, %c0_i32_1 : i32, i32, i32
  }
  func.func @transform_12(%arg0: i32) -> (i32, i32, i32) {
    %c0_i32 = arith.constant 0 : i32
    %c0_i32_0 = arith.constant 0 : i32
    %c0_i32_1 = arith.constant 0 : i32
    %c0_i32_2 = arith.constant 0 : i32
    return %c0_i32, %c0_i32_0, %c0_i32_1 : i32, i32, i32
  }
  func.func @transform_13(%arg0: i32) -> (i32, i32, i32) {
    %c0_i32 = arith.constant 0 : i32
    %c0_i32_0 = arith.constant 0 : i32
    %c0_i32_1 = arith.constant 0 : i32
    %c0_i32_2 = arith.constant 0 : i32
    return %c0_i32, %c0_i32_0, %c0_i32_1 : i32, i32, i32
  }
  func.func @transform_14(%arg0: i32) -> (i32, i32, i32) {
    %c0_i32 = arith.constant 0 : i32
    %c0_i32_0 = arith.constant 0 : i32
    %c0_i32_1 = arith.constant 0 : i32
    %c0_i32_2 = arith.constant 0 : i32
    return %c0_i32, %c0_i32_0, %c0_i32_1 : i32, i32, i32
  }
  func.func @transform_15(%arg0: i32) -> (i32, i32) {
    %c0_i32 = arith.constant 0 : i32
    %c0_i32_0 = arith.constant 0 : i32
    %c0_i32_1 = arith.constant 0 : i32
    return %c0_i32, %c0_i32_0 : i32, i32
  }
  func.func @transform_16(%arg0: i32) -> (i32, i32) {
    %c0_i32 = arith.constant 0 : i32
    %c0_i32_0 = arith.constant 0 : i32
    %c0_i32_1 = arith.constant 0 : i32
    return %c0_i32, %c0_i32_0 : i32, i32
  }
  func.func @transform_17(%arg0: i32) -> (i32, i32) {
    %c0_i32 = arith.constant 0 : i32
    %c0_i32_0 = arith.constant 0 : i32
    %c0_i32_1 = arith.constant 0 : i32
    return %c0_i32, %c0_i32_0 : i32, i32
  }
  func.func @transform_18(%arg0: i32) -> (i32, i32) {
    %c0_i32 = arith.constant 0 : i32
    %c0_i32_0 = arith.constant 0 : i32
    %c0_i32_1 = arith.constant 0 : i32
    return %c0_i32, %c0_i32_0 : i32, i32
  }
  func.func @transform_19(%arg0: i32) -> (i32, i32) {
    %c0_i32 = arith.constant 0 : i32
    %c0_i32_0 = arith.constant 0 : i32
    %c0_i32_1 = arith.constant 0 : i32
    return %c0_i32, %c0_i32_0 : i32, i32
  }
}

</mosaic_0001>

<llo_original>
// kernel: maskgit_forward.3
$region0: #{maskgit_forward.3}
  #allocation0 [shape = 'u32[]', space=smem, size = 0x4, offset = 0x4, fixed_abs, tag = 'smem constant byte address 0x4 - core index']
  #allocation1 [shape = 'u32[72,128]{1,0:T(1,128)}', space=vmem, size = 0x9000, scoped, tag = 'internal scratch']
  #allocation2 [shape = 'f32[1,1]{1,0:T(1,128)S(1)}', space=vmem, size = 0x200, scoped, tag = 'scoped memory for maskgit_forward.3']
  %s0 = inlined_call_operand.vmem [shape: f32[32,48], index: 0, kind: input, shape index: {}]
  %s1 = inlined_call_operand.vmem [shape: f32[48,32], index: 1, kind: input, shape index: {}]
  %s2 = inlined_call_operand.vmem [shape: f32[1,32], index: 2, kind: input, shape index: {}]
  %s3 = inlined_call_operand.vmem [shape: bf16[32,1024], index: 3, kind: input, shape index: {}]
  %s4 = inlined_call_operand.vmem [shape: f32[1,1024], index: 4, kind: input, shape index: {}]
  %s5 = inlined_call_operand.vmem [shape: f32[32,1], index: 5, kind: input, shape index: {}]
  %s6 = inlined_call_operand.<no memory space> [shape: f32[1,1], index: 6, kind: input, shape index: {}]
  %s7 = inlined_call_operand.vmem [shape: bf16[1152,32], index: 7, kind: input, shape index: {}]
  %s8 = inlined_call_operand.vmem [shape: f32[32,32], index: 8, kind: input, shape index: {}]
  %s9 = inlined_call_operand.vmem [shape: f32[32,32], index: 9, kind: input, shape index: {}]
  %s10 = inlined_call_operand.vmem [shape: bf16[2,32,96], index: 10, kind: input, shape index: {}]
  %s11 = inlined_call_operand.vmem [shape: bf16[2,32,32], index: 11, kind: input, shape index: {}]
  %s12 = inlined_call_operand.vmem [shape: bf16[2,32,128], index: 12, kind: input, shape index: {}]
  %s13 = inlined_call_operand.vmem [shape: bf16[2,128,32], index: 13, kind: input, shape index: {}]
  %s14 = inlined_call_operand.vmem [shape: f32[2,8,128], index: 14, kind: input, shape index: {}]
  %s15 = inlined_call_operand.vmem [shape: f32[2,32], index: 15, kind: input, shape index: {}]
  %s16 = inlined_call_operand.vmem [shape: bf16[32,1152], index: 16, kind: input, shape index: {}]
  %s17 = inlined_call_operand.vmem [shape: f32[1,1152], index: 17, kind: input, shape index: {}]
  %s18 = inlined_call_operand.vmem [shape: s32[32,1], index: 18, kind: output, shape index: {0}]
  %s19 = inlined_call_operand.hbm [shape: f32[32,1152], index: 19, kind: output, shape index: {1}]
  %20 = xla_tuple %s18, %s19
  %s21 = sld [smem:[#allocation0]]
  $region90: #{maskgit_forward.3} parent=0
    _
  %s23 = ssub.s32 1, %s21
  %s24 = scalar_select 0, %s23, %s21
  %v25 = vstv %s6
  %26 = vst [vmem:[#allocation2] sm:$0x1] %v25
  $region1: #{maskgit_forward.3} parent=0
    #allocation3 [shape = 'u8[147456]{0}', space=vmem, size = 0x24000, scoped, tag = 'output window, operand 1, single buffered']
    #allocation4 [shape = 's32[1]{0}', space=sflag, size = 0x4, scoped, tag = 'scoped memory for maskgit_forward.3']
    %27 = vsyncpa [#allocation4], 0
    // Predicated region
    $region2: #{maskgit_forward.3} parent=1 // pred_check
      _
    $region3: #{maskgit_forward.3} parent=1 // pred_check_branch
      %29 = sbr.rel (0) target = $region5
    $region4: #{maskgit_forward.3} parent=1 // pred_region
      _
    $region5: #{maskgit_forward.3} parent=1 // pred_fallthru
      _
    // Predicated region
    $region6: #{maskgit_forward.3} parent=1 // pred_check
      _
    $region7: #{maskgit_forward.3} parent=1 // pred_check_branch
      %31 = sbr.rel (0) target = $region9
    $region8: #{maskgit_forward.3} parent=1 // pred_region
      _
    $region9: #{maskgit_forward.3} parent=1 // pred_fallthru
      _
    // Predicated region
    $region10: #{maskgit_forward.3} parent=1 // pred_check
      _
    $region11: #{maskgit_forward.3} parent=1 // pred_check_branch
      %33 = sbr.rel (0) target = $region13
    $region12: #{maskgit_forward.3} parent=1 // pred_region
      _
    $region13: #{maskgit_forward.3} parent=1 // pred_fallthru
      _
    // Predicated region
    $region14: #{maskgit_forward.3} parent=1 // pred_check
      _
    $region15: #{maskgit_forward.3} parent=1 // pred_check_branch
      %35 = sbr.rel (0) target = $region17
    $region16: #{maskgit_forward.3} parent=1 // pred_region
      _
    $region17: #{maskgit_forward.3} parent=1 // pred_fallthru
      _
    // Predicated region
    $region18: #{maskgit_forward.3} parent=1 // pred_check
      _
    $region19: #{maskgit_forward.3} parent=1 // pred_check_branch
      %37 = sbr.rel (0) target = $region21
    $region20: #{maskgit_forward.3} parent=1 // pred_region
      _
    $region21: #{maskgit_forward.3} parent=1 // pred_fallthru
      _
    // Predicated region
    $region22: #{maskgit_forward.3} parent=1 // pred_check
      _
    $region23: #{maskgit_forward.3} parent=1 // pred_check_branch
      %39 = sbr.rel (0) target = $region25
    $region24: #{maskgit_forward.3} parent=1 // pred_region
      _
    $region25: #{maskgit_forward.3} parent=1 // pred_fallthru
      _
    // Predicated region
    $region26: #{maskgit_forward.3} parent=1 // pred_check
      _
    $region27: #{maskgit_forward.3} parent=1 // pred_check_branch
      %41 = sbr.rel (0) target = $region29
    $region28: #{maskgit_forward.3} parent=1 // pred_region
      _
    $region29: #{maskgit_forward.3} parent=1 // pred_fallthru
      _
    // Predicated region
    $region30: #{maskgit_forward.3} parent=1 // pred_check
      _
    $region31: #{maskgit_forward.3} parent=1 // pred_check_branch
      %43 = sbr.rel (0) target = $region33
    $region32: #{maskgit_forward.3} parent=1 // pred_region
      _
    $region33: #{maskgit_forward.3} parent=1 // pred_fallthru
      _
    // Predicated region
    $region34: #{maskgit_forward.3} parent=1 // pred_check
      _
    $region35: #{maskgit_forward.3} parent=1 // pred_check_branch
      %45 = sbr.rel (0) target = $region37
    $region36: #{maskgit_forward.3} parent=1 // pred_region
      _
    $region37: #{maskgit_forward.3} parent=1 // pred_fallthru
      _
    // Predicated region
    $region38: #{maskgit_forward.3} parent=1 // pred_check
      _
    $region39: #{maskgit_forward.3} parent=1 // pred_check_branch
      %47 = sbr.rel (0) target = $region41
    $region40: #{maskgit_forward.3} parent=1 // pred_region
      _
    $region41: #{maskgit_forward.3} parent=1 // pred_fallthru
      _
    // Predicated region
    $region42: #{maskgit_forward.3} parent=1 // pred_check
      _
    $region43: #{maskgit_forward.3} parent=1 // pred_check_branch
      %49 = sbr.rel (0) target = $region45
    $region44: #{maskgit_forward.3} parent=1 // pred_region
      _
    $region45: #{maskgit_forward.3} parent=1 // pred_fallthru
      _
    // Predicated region
    $region46: #{maskgit_forward.3} parent=1 // pred_check
      _
    $region47: #{maskgit_forward.3} parent=1 // pred_check_branch
      %51 = sbr.rel (0) target = $region49
    $region48: #{maskgit_forward.3} parent=1 // pred_region
      _
    $region49: #{maskgit_forward.3} parent=1 // pred_fallthru
      _
    // Predicated region
    $region50: #{maskgit_forward.3} parent=1 // pred_check
      _
    $region51: #{maskgit_forward.3} parent=1 // pred_check_branch
      %53 = sbr.rel (0) target = $region53
    $region52: #{maskgit_forward.3} parent=1 // pred_region
      _
    $region53: #{maskgit_forward.3} parent=1 // pred_fallthru
      _
    // Predicated region
    $region54: #{maskgit_forward.3} parent=1 // pred_check
      _
    $region55: #{maskgit_forward.3} parent=1 // pred_check_branch
      %55 = sbr.rel (0) target = $region57
    $region56: #{maskgit_forward.3} parent=1 // pred_region
      _
    $region57: #{maskgit_forward.3} parent=1 // pred_fallthru
      _
    // Predicated region
    $region58: #{maskgit_forward.3} parent=1 // pred_check
      _
    $region59: #{maskgit_forward.3} parent=1 // pred_check_branch
      %57 = sbr.rel (0) target = $region61
    $region60: #{maskgit_forward.3} parent=1 // pred_region
      _
    $region61: #{maskgit_forward.3} parent=1 // pred_fallthru
      _
    // Predicated region
    $region62: #{maskgit_forward.3} parent=1 // pred_check
      _
    $region63: #{maskgit_forward.3} parent=1 // pred_check_branch
      %59 = sbr.rel (0) target = $region65
    $region64: #{maskgit_forward.3} parent=1 // pred_region
      _
    $region65: #{maskgit_forward.3} parent=1 // pred_fallthru
      _
    // Predicated region
    $region66: #{maskgit_forward.3} parent=1 // pred_check
      _
    $region67: #{maskgit_forward.3} parent=1 // pred_check_branch
      %61 = sbr.rel (0) target = $region69
    $region68: #{maskgit_forward.3} parent=1 // pred_region
      _
    $region69: #{maskgit_forward.3} parent=1 // pred_fallthru
      _
    // Predicated region
    $region70: #{maskgit_forward.3} parent=1 // pred_check
      _
    $region71: #{maskgit_forward.3} parent=1 // pred_check_branch
      %63 = sbr.rel (0) target = $region73
    $region72: #{maskgit_forward.3} parent=1 // pred_region
      _
    $region73: #{maskgit_forward.3} parent=1 // pred_fallthru
      _
    %v65 = vld [vmem:[%s0] sm:$0xff]
    %v66 = vld [vmem:[%s0 + $0x8] sm:$0xff]
    %v67 = vld [vmem:[%s0 + $0x10] sm:$0xff]
    %v68 = vld [vmem:[%s0 + $0x18] sm:$0xff]
    %v69 = vld [vmem:[%s1] sm:$0xff]
    %v70 = vld [vmem:[%s1 + $0x8] sm:$0xff]
    %v71 = vld [vmem:[%s1 + $0x10] sm:$0xff]
    %v72 = vld [vmem:[%s1 + $0x18] sm:$0xff]
    %v73 = vld [vmem:[%s1 + $0x20] sm:$0xff]
    %v74 = vld [vmem:[%s1 + $0x28] sm:$0xff]
    %v75 = vld [vmem:[%s2] sm:$0x1]
    %v77 = vperm.slane %v75, 0
    %vm79 = vcmask 392192
    %v81 = vsel %vm79, %v65, 0
    %v84 = vsel %vm79, %v66, 0
    %v87 = vsel %vm79, %v67, 0
    %v90 = vsel %vm79, %v68, 0
    %92 = vmatpush.msra.mxu0 0.0
    %93 = vmatpush.msra.mxu0 0.0
    %94 = vmatpush.msra.mxu0 0.0
    %95 = vmatpush.msra.mxu0 0.0
    %96 = vmatpush.msra.mxu0 0.0
    %97 = vmatpush.msra.mxu0 0.0
    %98 = vmatpush.msra.mxu0 0.0
    %99 = vmatpush.msra.mxu0 0.0
    %100 = vmatpush.msra.mxu0 0.0
    %101 = vmatpush.msra.mxu0 0.0
    %102 = vmatpush.msra.mxu0 %v74
    %103 = vmatpush.msra.mxu0 %v73
    %104 = vmatpush.msra.mxu0 %v72
    %105 = vmatpush.msra.mxu0 %v71
    %106 = vmatpush.msra.mxu0 %v70
    %107 = vmatpush.msra.mxu0 %v69
    %108 = vmatmul.f32.gmra.mxu0 %v81
    %v109 = vpop.f32.mrf.mxu0
    %v110 = vadd.f32 %v77, %v109
    %111 = vmatmul.f32.gmra.mxu0 %v84
    %v112 = vpop.f32.mrf.mxu0
    %v113 = vadd.f32 %v77, %v112
    %114 = vmatmul.f32.gmra.mxu0 %v87
    %v115 = vpop.f32.mrf.mxu0
    %v116 = vadd.f32 %v77, %v115
    %117 = vmatmul.f32.gmra.mxu0 %v90
    %v118 = vpop.f32.mrf.mxu0
    %v119 = vadd.f32 %v77, %v118
    %120 = vdwg.mxu0
    %v121 = vpack.c.bf16 %v113, %v110
    %v122 = vpack.c.bf16 %v119, %v116
    %v123 = vld [vmem:[%s3] sm:$0xff]
    %v124 = vld [vmem:[%s3 + $0x20] sm:$0xff]
    %v125 = vld [vmem:[%s3 + $0x40] sm:$0xff]
    %v126 = vld [vmem:[%s3 + $0x60] sm:$0xff]
    %v131 = vunpack.c.l.b16 %v123
    %v132 = vunpack.c.h.b16 %v123
    %v133 = vunpack.c.l.b16 %v124
    %v134 = vunpack.c.h.b16 %v124
    %v135 = vunpack.c.l.b16 %v125
    %v136 = vunpack.c.h.b16 %v125
    %v137 = vunpack.c.l.b16 %v126
    %v138 = vunpack.c.h.b16 %v126
    %v139 = vpack.c.b16 %v133, %v131
    %v140 = vpack.c.b16 %v134, %v132
    %v141 = vpack.c.b16 %v137, %v135
    %v142 = vpack.c.b16 %v138, %v136
    %vm147 = vcmask 261120
    %v149 = vsel %vm147, %v121, 0
    %v152 = vsel %vm147, %v122, 0
    %154 = vmatpush.bf16.msra.mxu0 0
    %155 = vmatpush.bf16.msra.mxu0 0
    %156 = vmatpush.bf16.msra.mxu0 0
    %157 = vmatpush.bf16.msra.mxu0 0
    %158 = vmatpush.bf16.msra.mxu0 0
    %159 = vmatpush.bf16.msra.mxu0 0
    %160 = vmatpush.bf16.msra.mxu0 %v141
    %161 = vmatpush.bf16.msra.mxu0 %v139
    %162 = vmatmul.bf16.gmra.mxu0 %v149
    %v163 = vpop.f32.mrf.mxu0
    %v164 = vadd.f32 0.0, %v163
    %v165 = vpop.f32.mrf.mxu0
    %v166 = vadd.f32 0.0, %v165
    %167 = vmatmul.bf16.gmra.mxu0 %v152
    %v168 = vpop.f32.mrf.mxu0
    %v169 = vadd.f32 0.0, %v168
    %v170 = vpop.f32.mrf.mxu0
    %v171 = vadd.f32 0.0, %v170
    %172 = vdwg.mxu0
    %173 = vmatpush.bf16.msra.mxu0 0
    %174 = vmatpush.bf16.msra.mxu0 0
    %175 = vmatpush.bf16.msra.mxu0 0
    %176 = vmatpush.bf16.msra.mxu0 0
    %177 = vmatpush.bf16.msra.mxu0 0
    %178 = vmatpush.bf16.msra.mxu0 0
    %179 = vmatpush.bf16.msra.mxu0 %v142
    %180 = vmatpush.bf16.msra.mxu0 %v140
    %181 = vmatmul.bf16.gmra.mxu0 %v149
    %v182 = vpop.f32.mrf.mxu0
    %v183 = vadd.f32 0.0, %v182
    %v184 = vpop.f32.mrf.mxu0
    %v185 = vadd.f32 0.0, %v184
    %186 = vmatmul.bf16.gmra.mxu0 %v152
    %v187 = vpop.f32.mrf.mxu0
    %v188 = vadd.f32 0.0, %v187
    %v189 = vpop.f32.mrf.mxu0
    %v190 = vadd.f32 0.0, %v189
    %191 = vdwg.mxu0
    %v192 = vld [vmem:[%s4] sm:$0x3]
    %v193 = vmul.f32 %v164, 2.0
    %v194 = vmul.f32 %v183, 2.0
    %v195 = vmul.f32 %v166, 2.0
    %v196 = vmul.f32 %v185, 2.0
    %v197 = vmul.f32 %v169, 2.0
    %v198 = vmul.f32 %v188, 2.0
    %v199 = vmul.f32 %v171, 2.0
    %v200 = vmul.f32 %v190, 2.0
    %v202 = vperm.slane %v192, 0
    %v203 = vperm.slane %v192, 1
    %v206 = vsub.f32 %v202, %v193
    %v207 = vsub.f32 %v203, %v194
    %v208 = vsub.f32 %v202, %v195
    %v209 = vsub.f32 %v203, %v196
    %v210 = vsub.f32 %v202, %v197
    %v211 = vsub.f32 %v203, %v198
    %v212 = vsub.f32 %v202, %v199
    %v213 = vsub.f32 %v203, %v200
    %v214 = vmin.f32 %v206, %v207
    %215 = vmin.xlane.f32.xlu0 %v214
    %v216 = vpop.xlane.xlu0 %215
    %v217 = vmin.f32 %v208, %v209
    %218 = vmin.xlane.f32.xlu0 %v217
    %v219 = vpop.xlane.xlu0 %218
    %v220 = vmin.f32 %v210, %v211
    %221 = vmin.xlane.f32.xlu0 %v220
    %v222 = vpop.xlane.xlu0 %221
    %v223 = vmin.f32 %v212, %v213
    %224 = vmin.xlane.f32.xlu0 %v223
    %v225 = vpop.xlane.xlu0 %224
    %v226 = vlaneseq
    %v227 = vand.u32 %v226, 127
    %v228 = vadd.s32 %v227, 128
    %vm229 = vcmp.le.f32.partialorder %v206, %v216
    %vm230 = vcmp.le.f32.partialorder %v207, %v216
    %vm231 = vcmp.le.f32.partialorder %v208, %v219
    %vm232 = vcmp.le.f32.partialorder %v209, %v219
    %vm233 = vcmp.le.f32.partialorder %v210, %v222
    %vm234 = vcmp.le.f32.partialorder %v211, %v222
    %vm235 = vcmp.le.f32.partialorder %v212, %v225
    %vm236 = vcmp.le.f32.partialorder %v213, %v225
    %v237 = vsel %vm229, %v227, 1024
    %v238 = vsel %vm230, %v228, 1024
    %v239 = vsel %vm231, %v227, 1024
    %v240 = vsel %vm232, %v228, 1024
    %v241 = vsel %vm233, %v227, 1024
    %v242 = vsel %vm234, %v228, 1024
    %v243 = vsel %vm235, %v227, 1024
    %v244 = vsel %vm236, %v228, 1024
    %vm245 = vcmp.lt.s32.totalorder %v237, %v238
    %v246 = vsel %vm245, %v237, %v238
    %v247 = vand.u32 %v246, 65535
    %v248 = vshra.s32 %v246, 16
    %v249 = vcvt.s32.f32 %v247
    %v250 = vcvt.s32.f32 %v248
    %251 = vmin.xlane.f32.xlu0 %v250
    %v252 = vpop.xlane.xlu0 %251
    %vm253 = vcmp.eq.f32.partialorder %v250, %v252
    %v254 = vsel %vm253, %v249, inf
    %255 = vmin.xlane.f32.xlu0 %v254
    %v256 = vpop.xlane.xlu0 %255
    %v257 = vcvt.f32.s32 %v256
    %v258 = vcvt.f32.s32 %v252
    %v259 = vshll.u32 %v258, 16
    %v260 = vadd.s32 %v259, %v257
    %vm261 = vcmp.lt.s32.totalorder %v239, %v240
    %v262 = vsel %vm261, %v239, %v240
    %v263 = vand.u32 %v262, 65535
    %v264 = vshra.s32 %v262, 16
    %v265 = vcvt.s32.f32 %v263
    %v266 = vcvt.s32.f32 %v264
    %267 = vmin.xlane.f32.xlu0 %v266
    %v268 = vpop.xlane.xlu0 %267
    %vm269 = vcmp.eq.f32.partialorder %v266, %v268
    %v270 = vsel %vm269, %v265, inf
    %271 = vmin.xlane.f32.xlu0 %v270
    %v272 = vpop.xlane.xlu0 %271
    %v273 = vcvt.f32.s32 %v272
    %v274 = vcvt.f32.s32 %v268
    %v275 = vshll.u32 %v274, 16
    %v276 = vadd.s32 %v275, %v273
    %vm277 = vcmp.lt.s32.totalorder %v241, %v242
    %v278 = vsel %vm277, %v241, %v242
    %v279 = vand.u32 %v278, 65535
    %v280 = vshra.s32 %v278, 16
    %v281 = vcvt.s32.f32 %v279
    %v282 = vcvt.s32.f32 %v280
    %283 = vmin.xlane.f32.xlu0 %v282
    %v284 = vpop.xlane.xlu0 %283
    %vm285 = vcmp.eq.f32.partialorder %v282, %v284
    %v286 = vsel %vm285, %v281, inf
    %287 = vmin.xlane.f32.xlu0 %v286
    %v288 = vpop.xlane.xlu0 %287
    %v289 = vcvt.f32.s32 %v288
    %v290 = vcvt.f32.s32 %v284
    %v291 = vshll.u32 %v290, 16
    %v292 = vadd.s32 %v291, %v289
    %vm293 = vcmp.lt.s32.totalorder %v243, %v244
    %v294 = vsel %vm293, %v243, %v244
    %v295 = vand.u32 %v294, 65535
    %v296 = vshra.s32 %v294, 16
    %v297 = vcvt.s32.f32 %v295
    %v298 = vcvt.s32.f32 %v296
    %299 = vmin.xlane.f32.xlu0 %v298
    %v300 = vpop.xlane.xlu0 %299
    %vm301 = vcmp.eq.f32.partialorder %v298, %v300
    %v302 = vsel %vm301, %v297, inf
    %303 = vmin.xlane.f32.xlu0 %v302
    %v304 = vpop.xlane.xlu0 %303
    %v305 = vcvt.f32.s32 %v304
    %v306 = vcvt.f32.s32 %v300
    %v307 = vshll.u32 %v306, 16
    %v308 = vadd.s32 %v307, %v305
    %vm309 = vcmp.lt.f32.partialorder %v216, inf
    %vm310 = vcmp.lt.f32.partialorder %v219, inf
    %vm311 = vcmp.lt.f32.partialorder %v222, inf
    %vm312 = vcmp.lt.f32.partialorder %v225, inf
    %v313 = vsel %vm309, %v260, 0
    %v314 = vsel %vm310, %v276, 0
    %v315 = vsel %vm311, %v292, 0
    %v316 = vsel %vm312, %v308, 0
    %v317 = vsel %vm309, %v216, inf
    %v318 = vsel %vm310, %v219, inf
    %v319 = vsel %vm311, %v222, inf
    %v320 = vsel %vm312, %v225, inf
    %v321 = vld [vmem:[%s3 + $0x8] sm:$0xff]
    %v322 = vld [vmem:[%s3 + $0x28] sm:$0xff]
    %v323 = vld [vmem:[%s3 + $0x48] sm:$0xff]
    %v324 = vld [vmem:[%s3 + $0x68] sm:$0xff]
    %v329 = vunpack.c.l.b16 %v321
    %v330 = vunpack.c.h.b16 %v321
    %v331 = vunpack.c.l.b16 %v322
    %v332 = vunpack.c.h.b16 %v322
    %v333 = vunpack.c.l.b16 %v323
    %v334 = vunpack.c.h.b16 %v323
    %v335 = vunpack.c.l.b16 %v324
    %v336 = vunpack.c.h.b16 %v324
    %v337 = vpack.c.b16 %v331, %v329
    %v338 = vpack.c.b16 %v332, %v330
    %v339 = vpack.c.b16 %v335, %v333
    %v340 = vpack.c.b16 %v336, %v334
    %345 = vmatpush.bf16.msra.mxu0 0
    %346 = vmatpush.bf16.msra.mxu0 0
    %347 = vmatpush.bf16.msra.mxu0 0
    %348 = vmatpush.bf16.msra.mxu0 0
    %349 = vmatpush.bf16.msra.mxu0 0
    %350 = vmatpush.bf16.msra.mxu0 0
    %351 = vmatpush.bf16.msra.mxu0 %v339
    %352 = vmatpush.bf16.msra.mxu0 %v337
    %353 = vmatmul.bf16.gmra.mxu0 %v149
    %v354 = vpop.f32.mrf.mxu0
    %v355 = vadd.f32 0.0, %v354
    %v356 = vpop.f32.mrf.mxu0
    %v357 = vadd.f32 0.0, %v356
    %358 = vmatmul.bf16.gmra.mxu0 %v152
    %v359 = vpop.f32.mrf.mxu0
    %v360 = vadd.f32 0.0, %v359
    %v361 = vpop.f32.mrf.mxu0
    %v362 = vadd.f32 0.0, %v361
    %363 = vdwg.mxu0
    %364 = vmatpush.bf16.msra.mxu0 0
    %365 = vmatpush.bf16.msra.mxu0 0
    %366 = vmatpush.bf16.msra.mxu0 0
    %367 = vmatpush.bf16.msra.mxu0 0
    %368 = vmatpush.bf16.msra.mxu0 0
    %369 = vmatpush.bf16.msra.mxu0 0
    %370 = vmatpush.bf16.msra.mxu0 %v340
    %371 = vmatpush.bf16.msra.mxu0 %v338
    %372 = vmatmul.bf16.gmra.mxu0 %v149
    %v373 = vpop.f32.mrf.mxu0
    %v374 = vadd.f32 0.0, %v373
    %v375 = vpop.f32.mrf.mxu0
    %v376 = vadd.f32 0.0, %v375
    %377 = vmatmul.bf16.gmra.mxu0 %v152
    %v378 = vpop.f32.mrf.mxu0
    %v379 = vadd.f32 0.0, %v378
    %v380 = vpop.f32.mrf.mxu0
    %v381 = vadd.f32 0.0, %v380
    %382 = vdwg.mxu0
    %v383 = vld [vmem:[%s4 + $0x2] sm:$0x3]
    %v384 = vmul.f32 %v355, 2.0
    %v385 = vmul.f32 %v374, 2.0
    %v386 = vmul.f32 %v357, 2.0
    %v387 = vmul.f32 %v376, 2.0
    %v388 = vmul.f32 %v360, 2.0
    %v389 = vmul.f32 %v379, 2.0
    %v390 = vmul.f32 %v362, 2.0
    %v391 = vmul.f32 %v381, 2.0
    %v393 = vperm.slane %v383, 0
    %v394 = vperm.slane %v383, 1
    %v397 = vsub.f32 %v393, %v384
    %v398 = vsub.f32 %v394, %v385
    %v399 = vsub.f32 %v393, %v386
    %v400 = vsub.f32 %v394, %v387
    %v401 = vsub.f32 %v393, %v388
    %v402 = vsub.f32 %v394, %v389
    %v403 = vsub.f32 %v393, %v390
    %v404 = vsub.f32 %v394, %v391
    %v405 = vmin.f32 %v397, %v398
    %406 = vmin.xlane.f32.xlu0 %v405
    %v407 = vpop.xlane.xlu0 %406
    %v408 = vmin.f32 %v399, %v400
    %409 = vmin.xlane.f32.xlu0 %v408
    %v410 = vpop.xlane.xlu0 %409
    %v411 = vmin.f32 %v401, %v402
    %412 = vmin.xlane.f32.xlu0 %v411
    %v413 = vpop.xlane.xlu0 %412
    %v414 = vmin.f32 %v403, %v404
    %415 = vmin.xlane.f32.xlu0 %v414
    %v416 = vpop.xlane.xlu0 %415
    %v417 = vadd.s32 %v227, 256
    %v418 = vadd.s32 %v228, 256
    %vm419 = vcmp.le.f32.partialorder %v397, %v407
    %vm420 = vcmp.le.f32.partialorder %v398, %v407
    %vm421 = vcmp.le.f32.partialorder %v399, %v410
    %vm422 = vcmp.le.f32.partialorder %v400, %v410
    %vm423 = vcmp.le.f32.partialorder %v401, %v413
    %vm424 = vcmp.le.f32.partialorder %v402, %v413
    %vm425 = vcmp.le.f32.partialorder %v403, %v416
    %vm426 = vcmp.le.f32.partialorder %v404, %v416
    %v427 = vsel %vm419, %v417, 1024
    %v428 = vsel %vm420, %v418, 1024
    %v429 = vsel %vm421, %v417, 1024
    %v430 = vsel %vm422, %v418, 1024
    %v431 = vsel %vm423, %v417, 1024
    %v432 = vsel %vm424, %v418, 1024
    %v433 = vsel %vm425, %v417, 1024
    %v434 = vsel %vm426, %v418, 1024
    %vm435 = vcmp.lt.s32.totalorder %v427, %v428
    %v436 = vsel %vm435, %v427, %v428
    %v437 = vand.u32 %v436, 65535
    %v438 = vshra.s32 %v436, 16
    %v439 = vcvt.s32.f32 %v437
    %v440 = vcvt.s32.f32 %v438
    %441 = vmin.xlane.f32.xlu0 %v440
    %v442 = vpop.xlane.xlu0 %441
    %vm443 = vcmp.eq.f32.partialorder %v440, %v442
    %v444 = vsel %vm443, %v439, inf
    %445 = vmin.xlane.f32.xlu0 %v444
    %v446 = vpop.xlane.xlu0 %445
    %v447 = vcvt.f32.s32 %v446
    %v448 = vcvt.f32.s32 %v442
    %v449 = vshll.u32 %v448, 16
    %v450 = vadd.s32 %v449, %v447
    %vm451 = vcmp.lt.s32.totalorder %v429, %v430
    %v452 = vsel %vm451, %v429, %v430
    %v453 = vand.u32 %v452, 65535
    %v454 = vshra.s32 %v452, 16
    %v455 = vcvt.s32.f32 %v453
    %v456 = vcvt.s32.f32 %v454
    %457 = vmin.xlane.f32.xlu0 %v456
    %v458 = vpop.xlane.xlu0 %457
    %vm459 = vcmp.eq.f32.partialorder %v456, %v458
    %v460 = vsel %vm459, %v455, inf
    %461 = vmin.xlane.f32.xlu0 %v460
    %v462 = vpop.xlane.xlu0 %461
    %v463 = vcvt.f32.s32 %v462
    %v464 = vcvt.f32.s32 %v458
    %v465 = vshll.u32 %v464, 16
    %v466 = vadd.s32 %v465, %v463
    %vm467 = vcmp.lt.s32.totalorder %v431, %v432
    %v468 = vsel %vm467, %v431, %v432
    %v469 = vand.u32 %v468, 65535
    %v470 = vshra.s32 %v468, 16
    %v471 = vcvt.s32.f32 %v469
    %v472 = vcvt.s32.f32 %v470
    %473 = vmin.xlane.f32.xlu0 %v472
    %v474 = vpop.xlane.xlu0 %473
    %vm475 = vcmp.eq.f32.partialorder %v472, %v474
    %v476 = vsel %vm475, %v471, inf
    %477 = vmin.xlane.f32.xlu0 %v476
    %v478 = vpop.xlane.xlu0 %477
    %v479 = vcvt.f32.s32 %v478
    %v480 = vcvt.f32.s32 %v474
    %v481 = vshll.u32 %v480, 16
    %v482 = vadd.s32 %v481, %v479
    %vm483 = vcmp.lt.s32.totalorder %v433, %v434
    %v484 = vsel %vm483, %v433, %v434
    %v485 = vand.u32 %v484, 65535
    %v486 = vshra.s32 %v484, 16
    %v487 = vcvt.s32.f32 %v485
    %v488 = vcvt.s32.f32 %v486
    %489 = vmin.xlane.f32.xlu0 %v488
    %v490 = vpop.xlane.xlu0 %489
    %vm491 = vcmp.eq.f32.partialorder %v488, %v490
    %v492 = vsel %vm491, %v487, inf
    %493 = vmin.xlane.f32.xlu0 %v492
    %v494 = vpop.xlane.xlu0 %493
    %v495 = vcvt.f32.s32 %v494
    %v496 = vcvt.f32.s32 %v490
    %v497 = vshll.u32 %v496, 16
    %v498 = vadd.s32 %v497, %v495
    %vm499 = vcmp.lt.f32.partialorder %v407, %v317
    %vm500 = vcmp.lt.f32.partialorder %v410, %v318
    %vm501 = vcmp.lt.f32.partialorder %v413, %v319
    %vm502 = vcmp.lt.f32.partialorder %v416, %v320
    %v503 = vsel %vm499, %v450, %v313
    %v504 = vsel %vm500, %v466, %v314
    %v505 = vsel %vm501, %v482, %v315
    %v506 = vsel %vm502, %v498, %v316
    %v507 = vsel %vm499, %v407, %v317
    %v508 = vsel %vm500, %v410, %v318
    %v509 = vsel %vm501, %v413, %v319
    %v510 = vsel %vm502, %v416, %v320
    %v511 = vld [vmem:[%s3 + $0x10] sm:$0xff]
    %v512 = vld [vmem:[%s3 + $0x30] sm:$0xff]
    %v513 = vld [vmem:[%s3 + $0x50] sm:$0xff]
    %v514 = vld [vmem:[%s3 + $0x70] sm:$0xff]
    %v519 = vunpack.c.l.b16 %v511
    %v520 = vunpack.c.h.b16 %v511
    %v521 = vunpack.c.l.b16 %v512
    %v522 = vunpack.c.h.b16 %v512
    %v523 = vunpack.c.l.b16 %v513
    %v524 = vunpack.c.h.b16 %v513
    %v525 = vunpack.c.l.b16 %v514
    %v526 = vunpack.c.h.b16 %v514
    %v527 = vpack.c.b16 %v521, %v519
    %v528 = vpack.c.b16 %v522, %v520
    %v529 = vpack.c.b16 %v525, %v523
    %v530 = vpack.c.b16 %v526, %v524
    %535 = vmatpush.bf16.msra.mxu0 0
    %536 = vmatpush.bf16.msra.mxu0 0
    %537 = vmatpush.bf16.msra.mxu0 0
    %538 = vmatpush.bf16.msra.mxu0 0
    %539 = vmatpush.bf16.msra.mxu0 0
    %540 = vmatpush.bf16.msra.mxu0 0
    %541 = vmatpush.bf16.msra.mxu0 %v529
    %542 = vmatpush.bf16.msra.mxu0 %v527
    %543 = vmatmul.bf16.gmra.mxu0 %v149
    %v544 = vpop.f32.mrf.mxu0
    %v545 = vadd.f32 0.0, %v544
    %v546 = vpop.f32.mrf.mxu0
    %v547 = vadd.f32 0.0, %v546
    %548 = vmatmul.bf16.gmra.mxu0 %v152
    %v549 = vpop.f32.mrf.mxu0
    %v550 = vadd.f32 0.0, %v549
    %v551 = vpop.f32.mrf.mxu0
    %v552 = vadd.f32 0.0, %v551
    %553 = vdwg.mxu0
    %554 = vmatpush.bf16.msra.mxu0 0
    %555 = vmatpush.bf16.msra.mxu0 0
    %556 = vmatpush.bf16.msra.mxu0 0
    %557 = vmatpush.bf16.msra.mxu0 0
    %558 = vmatpush.bf16.msra.mxu0 0
    %559 = vmatpush.bf16.msra.mxu0 0
    %560 = vmatpush.bf16.msra.mxu0 %v530
    %561 = vmatpush.bf16.msra.mxu0 %v528
    %562 = vmatmul.bf16.gmra.mxu0 %v149
    %v563 = vpop.f32.mrf.mxu0
    %v564 = vadd.f32 0.0, %v563
    %v565 = vpop.f32.mrf.mxu0
    %v566 = vadd.f32 0.0, %v565
    %567 = vmatmul.bf16.gmra.mxu0 %v152
    %v568 = vpop.f32.mrf.mxu0
    %v569 = vadd.f32 0.0, %v568
    %v570 = vpop.f32.mrf.mxu0
    %v571 = vadd.f32 0.0, %v570
    %572 = vdwg.mxu0
    %v573 = vld [vmem:[%s4 + $0x4] sm:$0x3]
    %v574 = vmul.f32 %v545, 2.0
    %v575 = vmul.f32 %v564, 2.0
    %v576 = vmul.f32 %v547, 2.0
    %v577 = vmul.f32 %v566, 2.0
    %v578 = vmul.f32 %v550, 2.0
    %v579 = vmul.f32 %v569, 2.0
    %v580 = vmul.f32 %v552, 2.0
    %v581 = vmul.f32 %v571, 2.0
    %v583 = vperm.slane %v573, 0
    %v584 = vperm.slane %v573, 1
    %v587 = vsub.f32 %v583, %v574
    %v588 = vsub.f32 %v584, %v575
    %v589 = vsub.f32 %v583, %v576
    %v590 = vsub.f32 %v584, %v577
    %v591 = vsub.f32 %v583, %v578
    %v592 = vsub.f32 %v584, %v579
    %v593 = vsub.f32 %v583, %v580
    %v594 = vsub.f32 %v584, %v581
    %v595 = vmin.f32 %v587, %v588
    %596 = vmin.xlane.f32.xlu0 %v595
    %v597 = vpop.xlane.xlu0 %596
    %v598 = vmin.f32 %v589, %v590
    %599 = vmin.xlane.f32.xlu0 %v598
    %v600 = vpop.xlane.xlu0 %599
    %v601 = vmin.f32 %v591, %v592
    %602 = vmin.xlane.f32.xlu0 %v601
    %v603 = vpop.xlane.xlu0 %602
    %v604 = vmin.f32 %v593, %v594
    %605 = vmin.xlane.f32.xlu0 %v604
    %v606 = vpop.xlane.xlu0 %605
    %v607 = vadd.s32 %v227, 512
    %v608 = vadd.s32 %v228, 512
    %vm609 = vcmp.le.f32.partialorder %v587, %v597
    %vm610 = vcmp.le.f32.partialorder %v588, %v597
    %vm611 = vcmp.le.f32.partialorder %v589, %v600
    %vm612 = vcmp.le.f32.partialorder %v590, %v600
    %vm613 = vcmp.le.f32.partialorder %v591, %v603
    %vm614 = vcmp.le.f32.partialorder %v592, %v603
    %vm615 = vcmp.le.f32.partialorder %v593, %v606
    %vm616 = vcmp.le.f32.partialorder %v594, %v606
    %v617 = vsel %vm609, %v607, 1024
    %v618 = vsel %vm610, %v608, 1024
    %v619 = vsel %vm611, %v607, 1024
    %v620 = vsel %vm612, %v608, 1024
    %v621 = vsel %vm613, %v607, 1024
    %v622 = vsel %vm614, %v608, 1024
    %v623 = vsel %vm615, %v607, 1024
    %v624 = vsel %vm616, %v608, 1024
    %vm625 = vcmp.lt.s32.totalorder %v617, %v618
    %v626 = vsel %vm625, %v617, %v618
    %v627 = vand.u32 %v626, 65535
    %v628 = vshra.s32 %v626, 16
    %v629 = vcvt.s32.f32 %v627
    %v630 = vcvt.s32.f32 %v628
    %631 = vmin.xlane.f32.xlu0 %v630
    %v632 = vpop.xlane.xlu0 %631
    %vm633 = vcmp.eq.f32.partialorder %v630, %v632
    %v634 = vsel %vm633, %v629, inf
    %635 = vmin.xlane.f32.xlu0 %v634
    %v636 = vpop.xlane.xlu0 %635
    %v637 = vcvt.f32.s32 %v636
    %v638 = vcvt.f32.s32 %v632
    %v639 = vshll.u32 %v638, 16
    %v640 = vadd.s32 %v639, %v637
    %vm641 = vcmp.lt.s32.totalorder %v619, %v620
    %v642 = vsel %vm641, %v619, %v620
    %v643 = vand.u32 %v642, 65535
    %v644 = vshra.s32 %v642, 16
    %v645 = vcvt.s32.f32 %v643
    %v646 = vcvt.s32.f32 %v644
    %647 = vmin.xlane.f32.xlu0 %v646
    %v648 = vpop.xlane.xlu0 %647
    %vm649 = vcmp.eq.f32.partialorder %v646, %v648
    %v650 = vsel %vm649, %v645, inf
    %651 = vmin.xlane.f32.xlu0 %v650
    %v652 = vpop.xlane.xlu0 %651
    %v653 = vcvt.f32.s32 %v652
    %v654 = vcvt.f32.s32 %v648
    %v655 = vshll.u32 %v654, 16
    %v656 = vadd.s32 %v655, %v653
    %vm657 = vcmp.lt.s32.totalorder %v621, %v622
    %v658 = vsel %vm657, %v621, %v622
    %v659 = vand.u32 %v658, 65535
    %v660 = vshra.s32 %v658, 16
    %v661 = vcvt.s32.f32 %v659
    %v662 = vcvt.s32.f32 %v660
    %663 = vmin.xlane.f32.xlu0 %v662
    %v664 = vpop.xlane.xlu0 %663
    %vm665 = vcmp.eq.f32.partialorder %v662, %v664
    %v666 = vsel %vm665, %v661, inf
    %667 = vmin.xlane.f32.xlu0 %v666
    %v668 = vpop.xlane.xlu0 %667
    %v669 = vcvt.f32.s32 %v668
    %v670 = vcvt.f32.s32 %v664
    %v671 = vshll.u32 %v670, 16
    %v672 = vadd.s32 %v671, %v669
    %vm673 = vcmp.lt.s32.totalorder %v623, %v624
    %v674 = vsel %vm673, %v623, %v624
    %v675 = vand.u32 %v674, 65535
    %v676 = vshra.s32 %v674, 16
    %v677 = vcvt.s32.f32 %v675
    %v678 = vcvt.s32.f32 %v676
    %679 = vmin.xlane.f32.xlu0 %v678
    %v680 = vpop.xlane.xlu0 %679
    %vm681 = vcmp.eq.f32.partialorder %v678, %v680
    %v682 = vsel %vm681, %v677, inf
    %683 = vmin.xlane.f32.xlu0 %v682
    %v684 = vpop.xlane.xlu0 %683
    %v685 = vcvt.f32.s32 %v684
    %v686 = vcvt.f32.s32 %v680
    %v687 = vshll.u32 %v686, 16
    %v688 = vadd.s32 %v687, %v685
    %vm689 = vcmp.lt.f32.partialorder %v597, %v507
    %vm690 = vcmp.lt.f32.partialorder %v600, %v508
    %vm691 = vcmp.lt.f32.partialorder %v603, %v509
    %vm692 = vcmp.lt.f32.partialorder %v606, %v510
    %v693 = vsel %vm689, %v640, %v503
    %v694 = vsel %vm690, %v656, %v504
    %v695 = vsel %vm691, %v672, %v505
    %v696 = vsel %vm692, %v688, %v506
    %v697 = vsel %vm689, %v597, %v507
    %v698 = vsel %vm690, %v600, %v508
    %v699 = vsel %vm691, %v603, %v509
    %v700 = vsel %vm692, %v606, %v510
    %v701 = vld [vmem:[%s3 + $0x18] sm:$0xff]
    %v702 = vld [vmem:[%s3 + $0x38] sm:$0xff]
    %v703 = vld [vmem:[%s3 + $0x58] sm:$0xff]
    %v704 = vld [vmem:[%s3 + $0x78] sm:$0xff]
    %v709 = vunpack.c.l.b16 %v701
    %v710 = vunpack.c.h.b16 %v701
    %v711 = vunpack.c.l.b16 %v702
    %v712 = vunpack.c.h.b16 %v702
    %v713 = vunpack.c.l.b16 %v703
    %v714 = vunpack.c.h.b16 %v703
    %v715 = vunpack.c.l.b16 %v704
    %v716 = vunpack.c.h.b16 %v704
    %v717 = vpack.c.b16 %v711, %v709
    %v718 = vpack.c.b16 %v712, %v710
    %v719 = vpack.c.b16 %v715, %v713
    %v720 = vpack.c.b16 %v716, %v714
    %725 = vmatpush.bf16.msra.mxu0 0
    %726 = vmatpush.bf16.msra.mxu0 0
    %727 = vmatpush.bf16.msra.mxu0 0
    %728 = vmatpush.bf16.msra.mxu0 0
    %729 = vmatpush.bf16.msra.mxu0 0
    %730 = vmatpush.bf16.msra.mxu0 0
    %731 = vmatpush.bf16.msra.mxu0 %v719
    %732 = vmatpush.bf16.msra.mxu0 %v717
    %733 = vmatmul.bf16.gmra.mxu0 %v149
    %v734 = vpop.f32.mrf.mxu0
    %v735 = vadd.f32 0.0, %v734
    %v736 = vpop.f32.mrf.mxu0
    %v737 = vadd.f32 0.0, %v736
    %738 = vmatmul.bf16.gmra.mxu0 %v152
    %v739 = vpop.f32.mrf.mxu0
    %v740 = vadd.f32 0.0, %v739
    %v741 = vpop.f32.mrf.mxu0
    %v742 = vadd.f32 0.0, %v741
    %743 = vdwg.mxu0
    %744 = vmatpush.bf16.msra.mxu0 0
    %745 = vmatpush.bf16.msra.mxu0 0
    %746 = vmatpush.bf16.msra.mxu0 0
    %747 = vmatpush.bf16.msra.mxu0 0
    %748 = vmatpush.bf16.msra.mxu0 0
    %749 = vmatpush.bf16.msra.mxu0 0
    %750 = vmatpush.bf16.msra.mxu0 %v720
    %751 = vmatpush.bf16.msra.mxu0 %v718
    %752 = vmatmul.bf16.gmra.mxu0 %v149
    %v753 = vpop.f32.mrf.mxu0
    %v754 = vadd.f32 0.0, %v753
    %v755 = vpop.f32.mrf.mxu0
    %v756 = vadd.f32 0.0, %v755
    %757 = vmatmul.bf16.gmra.mxu0 %v152
    %v758 = vpop.f32.mrf.mxu0
    %v759 = vadd.f32 0.0, %v758
    %v760 = vpop.f32.mrf.mxu0
    %v761 = vadd.f32 0.0, %v760
    %762 = vdwg.mxu0
    %v763 = vld [vmem:[%s4 + $0x6] sm:$0x3]
    %v764 = vmul.f32 %v735, 2.0
    %v765 = vmul.f32 %v754, 2.0
    %v766 = vmul.f32 %v737, 2.0
    %v767 = vmul.f32 %v756, 2.0
    %v768 = vmul.f32 %v740, 2.0
    %v769 = vmul.f32 %v759, 2.0
    %v770 = vmul.f32 %v742, 2.0
    %v771 = vmul.f32 %v761, 2.0
    %v773 = vperm.slane %v763, 0
    %v774 = vperm.slane %v763, 1
    %v777 = vsub.f32 %v773, %v764
    %v778 = vsub.f32 %v774, %v765
    %v779 = vsub.f32 %v773, %v766
    %v780 = vsub.f32 %v774, %v767
    %v781 = vsub.f32 %v773, %v768
    %v782 = vsub.f32 %v774, %v769
    %v783 = vsub.f32 %v773, %v770
    %v784 = vsub.f32 %v774, %v771
    %v785 = vmin.f32 %v777, %v778
    %786 = vmin.xlane.f32.xlu0 %v785
    %v787 = vpop.xlane.xlu0 %786
    %v788 = vmin.f32 %v779, %v780
    %789 = vmin.xlane.f32.xlu0 %v788
    %v790 = vpop.xlane.xlu0 %789
    %v791 = vmin.f32 %v781, %v782
    %792 = vmin.xlane.f32.xlu0 %v791
    %v793 = vpop.xlane.xlu0 %792
    %v794 = vmin.f32 %v783, %v784
    %795 = vmin.xlane.f32.xlu0 %v794
    %v796 = vpop.xlane.xlu0 %795
    %v797 = vadd.s32 %v227, 768
    %v798 = vadd.s32 %v228, 768
    %vm799 = vcmp.le.f32.partialorder %v777, %v787
    %vm800 = vcmp.le.f32.partialorder %v778, %v787
    %vm801 = vcmp.le.f32.partialorder %v779, %v790
    %vm802 = vcmp.le.f32.partialorder %v780, %v790
    %vm803 = vcmp.le.f32.partialorder %v781, %v793
    %vm804 = vcmp.le.f32.partialorder %v782, %v793
    %vm805 = vcmp.le.f32.partialorder %v783, %v796
    %vm806 = vcmp.le.f32.partialorder %v784, %v796
    %v807 = vsel %vm799, %v797, 1024
    %v808 = vsel %vm800, %v798, 1024
    %v809 = vsel %vm801, %v797, 1024
    %v810 = vsel %vm802, %v798, 1024
    %v811 = vsel %vm803, %v797, 1024
    %v812 = vsel %vm804, %v798, 1024
    %v813 = vsel %vm805, %v797, 1024
    %v814 = vsel %vm806, %v798, 1024
    %vm815 = vcmp.lt.s32.totalorder %v807, %v808
    %v816 = vsel %vm815, %v807, %v808
    %v817 = vand.u32 %v816, 65535
    %v818 = vshra.s32 %v816, 16
    %v819 = vcvt.s32.f32 %v817
    %v820 = vcvt.s32.f32 %v818
    %821 = vmin.xlane.f32.xlu0 %v820
    %v822 = vpop.xlane.xlu0 %821
    %vm823 = vcmp.eq.f32.partialorder %v820, %v822
    %v824 = vsel %vm823, %v819, inf
    %825 = vmin.xlane.f32.xlu0 %v824
    %v826 = vpop.xlane.xlu0 %825
    %v827 = vcvt.f32.s32 %v826
    %v828 = vcvt.f32.s32 %v822
    %v829 = vshll.u32 %v828, 16
    %v830 = vadd.s32 %v829, %v827
    %vm831 = vcmp.lt.s32.totalorder %v809, %v810
    %v832 = vsel %vm831, %v809, %v810
    %v833 = vand.u32 %v832, 65535
    %v834 = vshra.s32 %v832, 16
    %v835 = vcvt.s32.f32 %v833
    %v836 = vcvt.s32.f32 %v834
    %837 = vmin.xlane.f32.xlu0 %v836
    %v838 = vpop.xlane.xlu0 %837
    %vm839 = vcmp.eq.f32.partialorder %v836, %v838
    %v840 = vsel %vm839, %v835, inf
    %841 = vmin.xlane.f32.xlu0 %v840
    %v842 = vpop.xlane.xlu0 %841
    %v843 = vcvt.f32.s32 %v842
    %v844 = vcvt.f32.s32 %v838
    %v845 = vshll.u32 %v844, 16
    %v846 = vadd.s32 %v845, %v843
    %vm847 = vcmp.lt.s32.totalorder %v811, %v812
    %v848 = vsel %vm847, %v811, %v812
    %v849 = vand.u32 %v848, 65535
    %v850 = vshra.s32 %v848, 16
    %v851 = vcvt.s32.f32 %v849
    %v852 = vcvt.s32.f32 %v850
    %853 = vmin.xlane.f32.xlu0 %v852
    %v854 = vpop.xlane.xlu0 %853
    %vm855 = vcmp.eq.f32.partialorder %v852, %v854
    %v856 = vsel %vm855, %v851, inf
    %857 = vmin.xlane.f32.xlu0 %v856
    %v858 = vpop.xlane.xlu0 %857
    %v859 = vcvt.f32.s32 %v858
    %v860 = vcvt.f32.s32 %v854
    %v861 = vshll.u32 %v860, 16
    %v862 = vadd.s32 %v861, %v859
    %vm863 = vcmp.lt.s32.totalorder %v813, %v814
    %v864 = vsel %vm863, %v813, %v814
    %v865 = vand.u32 %v864, 65535
    %v866 = vshra.s32 %v864, 16
    %v867 = vcvt.s32.f32 %v865
    %v868 = vcvt.s32.f32 %v866
    %869 = vmin.xlane.f32.xlu0 %v868
    %v870 = vpop.xlane.xlu0 %869
    %vm871 = vcmp.eq.f32.partialorder %v868, %v870
    %v872 = vsel %vm871, %v867, inf
    %873 = vmin.xlane.f32.xlu0 %v872
    %v874 = vpop.xlane.xlu0 %873
    %v875 = vcvt.f32.s32 %v874
    %v876 = vcvt.f32.s32 %v870
    %v877 = vshll.u32 %v876, 16
    %v878 = vadd.s32 %v877, %v875
    %vm879 = vcmp.lt.f32.partialorder %v787, %v697
    %vm880 = vcmp.lt.f32.partialorder %v790, %v698
    %vm881 = vcmp.lt.f32.partialorder %v793, %v699
    %vm882 = vcmp.lt.f32.partialorder %v796, %v700
    %v883 = vsel %vm879, %v830, %v693
    %v884 = vsel %vm880, %v846, %v694
    %v885 = vsel %vm881, %v862, %v695
    %v886 = vsel %vm882, %v878, %v696
    %vm887 = vcmask 7168
    %888 = vst.msk [vmem:[%s18] sm:$0xff] %vm887, %v883
    %889 = vst.msk [vmem:[%s18 + $0x8] sm:$0xff] %vm887, %v884
    %890 = vst.msk [vmem:[%s18 + $0x10] sm:$0xff] %vm887, %v885
    %891 = vst.msk [vmem:[%s18 + $0x18] sm:$0xff] %vm887, %v886
    %v892 = vld [vmem:[%s5] sm:$0xff]
    %v893 = vld [vmem:[%s5 + $0x8] sm:$0xff]
    %v894 = vld [vmem:[%s5 + $0x10] sm:$0xff]
    %v895 = vld [vmem:[%s5 + $0x18] sm:$0xff]
    %v896 = vld [vmem:[#allocation2] sm:$0x1]
    %v898 = vperm.slane %v896, 0
    %vm900 = vcmp.lt.f32.partialorder %v892, %v898
    %vm901 = vcmp.lt.f32.partialorder %v893, %v898
    %vm902 = vcmp.lt.f32.partialorder %v894, %v898
    %vm903 = vcmp.lt.f32.partialorder %v895, %v898
    %v904 = vsel %vm900, 1024, %v883
    %v905 = vsel %vm901, 1024, %v884
    %v906 = vsel %vm902, 1024, %v885
    %v907 = vsel %vm903, 1024, %v886
    %v908 = vadd.s32 %v227, 384
    %v909 = vadd.s32 %v227, 640
    %v910 = vadd.s32 %v227, 896
    %v911 = vadd.s32 %v227, 1024
    %912 = vset.pattern.permute.xlu0 0
    %913 = vperm.xlu0 %912, %v904
    %v914 = vpop.permute.xlu0 %913
    %915 = vset.pattern.permute.xlu0 0
    %916 = vperm.xlu0 %915, %v905
    %v917 = vpop.permute.xlu0 %916
    %918 = vset.pattern.permute.xlu0 0
    %919 = vperm.xlu0 %918, %v906
    %v920 = vpop.permute.xlu0 %919
    %921 = vset.pattern.permute.xlu0 0
    %922 = vperm.xlu0 %921, %v907
    %v923 = vpop.permute.xlu0 %922
    %vm924 = vcmp.eq.s32.totalorder %v227, %v914
    %vm925 = vcmp.eq.s32.totalorder %v228, %v914
    %vm926 = vcmp.eq.s32.totalorder %v417, %v914
    %vm927 = vcmp.eq.s32.totalorder %v908, %v914
    %vm928 = vcmp.eq.s32.totalorder %v607, %v914
    %vm929 = vcmp.eq.s32.totalorder %v909, %v914
    %vm930 = vcmp.eq.s32.totalorder %v797, %v914
    %vm931 = vcmp.eq.s32.totalorder %v910, %v914
    %vm932 = vcmp.eq.s32.totalorder %v911, %v914
    %vm933 = vcmp.eq.s32.totalorder %v227, %v917
    %vm934 = vcmp.eq.s32.totalorder %v228, %v917
    %vm935 = vcmp.eq.s32.totalorder %v417, %v917
    %vm936 = vcmp.eq.s32.totalorder %v908, %v917
    %vm937 = vcmp.eq.s32.totalorder %v607, %v917
    %vm938 = vcmp.eq.s32.totalorder %v909, %v917
    %vm939 = vcmp.eq.s32.totalorder %v797, %v917
    %vm940 = vcmp.eq.s32.totalorder %v910, %v917
    %vm941 = vcmp.eq.s32.totalorder %v911, %v917
    %vm942 = vcmp.eq.s32.totalorder %v227, %v920
    %vm943 = vcmp.eq.s32.totalorder %v228, %v920
    %vm944 = vcmp.eq.s32.totalorder %v417, %v920
    %vm945 = vcmp.eq.s32.totalorder %v908, %v920
    %vm946 = vcmp.eq.s32.totalorder %v607, %v920
    %vm947 = vcmp.eq.s32.totalorder %v909, %v920
    %vm948 = vcmp.eq.s32.totalorder %v797, %v920
    %vm949 = vcmp.eq.s32.totalorder %v910, %v920
    %vm950 = vcmp.eq.s32.totalorder %v911, %v920
    %vm951 = vcmp.eq.s32.totalorder %v227, %v923
    %vm952 = vcmp.eq.s32.totalorder %v228, %v923
    %vm953 = vcmp.eq.s32.totalorder %v417, %v923
    %vm954 = vcmp.eq.s32.totalorder %v908, %v923
    %vm955 = vcmp.eq.s32.totalorder %v607, %v923
    %vm956 = vcmp.eq.s32.totalorder %v909, %v923
    %vm957 = vcmp.eq.s32.totalorder %v797, %v923
    %vm958 = vcmp.eq.s32.totalorder %v910, %v923
    %vm959 = vcmp.eq.s32.totalorder %v911, %v923
    %v960 = vsel %vm924, 1, 0
    %v961 = vsel %vm925, 1, 0
    %v962 = vsel %vm926, 1, 0
    %v963 = vsel %vm927, 1, 0
    %v964 = vsel %vm928, 1, 0
    %v965 = vsel %vm929, 1, 0
    %v966 = vsel %vm930, 1, 0
    %v967 = vsel %vm931, 1, 0
    %v968 = vsel %vm932, 1, 0
    %v969 = vsel %vm933, 1, 0
    %v970 = vsel %vm934, 1, 0
    %v971 = vsel %vm935, 1, 0
    %v972 = vsel %vm936, 1, 0
    %v973 = vsel %vm937, 1, 0
    %v974 = vsel %vm938, 1, 0
    %v975 = vsel %vm939, 1, 0
    %v976 = vsel %vm940, 1, 0
    %v977 = vsel %vm941, 1, 0
    %v978 = vsel %vm942, 1, 0
    %v979 = vsel %vm943, 1, 0
    %v980 = vsel %vm944, 1, 0
    %v981 = vsel %vm945, 1, 0
    %v982 = vsel %vm946, 1, 0
    %v983 = vsel %vm947, 1, 0
    %v984 = vsel %vm948, 1, 0
    %v985 = vsel %vm949, 1, 0
    %v986 = vsel %vm950, 1, 0
    %v987 = vsel %vm951, 1, 0
    %v988 = vsel %vm952, 1, 0
    %v989 = vsel %vm953, 1, 0
    %v990 = vsel %vm954, 1, 0
    %v991 = vsel %vm955, 1, 0
    %v992 = vsel %vm956, 1, 0
    %v993 = vsel %vm957, 1, 0
    %v994 = vsel %vm958, 1, 0
    %v995 = vsel %vm959, 1, 0
    %v996 = vcvt.s32.f32 %v960
    %v997 = vcvt.s32.f32 %v961
    %v998 = vcvt.s32.f32 %v962
    %v999 = vcvt.s32.f32 %v963
    %v1000 = vcvt.s32.f32 %v964
    %v1001 = vcvt.s32.f32 %v965
    %v1002 = vcvt.s32.f32 %v966
    %v1003 = vcvt.s32.f32 %v967
    %v1004 = vcvt.s32.f32 %v968
    %v1005 = vcvt.s32.f32 %v969
    %v1006 = vcvt.s32.f32 %v970
    %v1007 = vcvt.s32.f32 %v971
    %v1008 = vcvt.s32.f32 %v972
    %v1009 = vcvt.s32.f32 %v973
    %v1010 = vcvt.s32.f32 %v974
    %v1011 = vcvt.s32.f32 %v975
    %v1012 = vcvt.s32.f32 %v976
    %v1013 = vcvt.s32.f32 %v977
    %v1014 = vcvt.s32.f32 %v978
    %v1015 = vcvt.s32.f32 %v979
    %v1016 = vcvt.s32.f32 %v980
    %v1017 = vcvt.s32.f32 %v981
    %v1018 = vcvt.s32.f32 %v982
    %v1019 = vcvt.s32.f32 %v983
    %v1020 = vcvt.s32.f32 %v984
    %v1021 = vcvt.s32.f32 %v985
    %v1022 = vcvt.s32.f32 %v986
    %v1023 = vcvt.s32.f32 %v987
    %v1024 = vcvt.s32.f32 %v988
    %v1025 = vcvt.s32.f32 %v989
    %v1026 = vcvt.s32.f32 %v990
    %v1027 = vcvt.s32.f32 %v991
    %v1028 = vcvt.s32.f32 %v992
    %v1029 = vcvt.s32.f32 %v993
    %v1030 = vcvt.s32.f32 %v994
    %v1031 = vcvt.s32.f32 %v995
    %v1032 = vpack.c.bf16 %v1005, %v996
    %v1033 = vpack.c.bf16 %v1006, %v997
    %v1034 = vpack.c.bf16 %v1007, %v998
    %v1035 = vpack.c.bf16 %v1008, %v999
    %v1036 = vpack.c.bf16 %v1009, %v1000
    %v1037 = vpack.c.bf16 %v1010, %v1001
    %v1038 = vpack.c.bf16 %v1011, %v1002
    %v1039 = vpack.c.bf16 %v1012, %v1003
    %v1040 = vpack.c.bf16 %v1013, %v1004
    %v1041 = vpack.c.bf16 %v1023, %v1014
    %v1042 = vpack.c.bf16 %v1024, %v1015
    %v1043 = vpack.c.bf16 %v1025, %v1016
    %v1044 = vpack.c.bf16 %v1026, %v1017
    %v1045 = vpack.c.bf16 %v1027, %v1018
    %v1046 = vpack.c.bf16 %v1028, %v1019
    %v1047 = vpack.c.bf16 %v1029, %v1020
    %v1048 = vpack.c.bf16 %v1030, %v1021
    %v1049 = vpack.c.bf16 %v1031, %v1022
    %v1050 = vld [vmem:[%s7] sm:$0xf]
    %v1051 = vld [vmem:[%s7 + $0x4] sm:$0xf]
    %v1052 = vld [vmem:[%s7 + $0x8] sm:$0xf]
    %v1053 = vld [vmem:[%s7 + $0xc] sm:$0xf]
    %v1054 = vld [vmem:[%s7 + $0x10] sm:$0xf]
    %v1055 = vld [vmem:[%s7 + $0x14] sm:$0xf]
    %v1056 = vld [vmem:[%s7 + $0x18] sm:$0xf]
    %v1057 = vld [vmem:[%s7 + $0x1c] sm:$0xf]
    %v1058 = vld [vmem:[%s7 + $0x20] sm:$0xf]
    %v1059 = vld [vmem:[%s7 + $0x24] sm:$0xf]
    %v1060 = vld [vmem:[%s7 + $0x28] sm:$0xf]
    %v1061 = vld [vmem:[%s7 + $0x2c] sm:$0xf]
    %v1062 = vld [vmem:[%s7 + $0x30] sm:$0xf]
    %v1063 = vld [vmem:[%s7 + $0x34] sm:$0xf]
    %v1064 = vld [vmem:[%s7 + $0x38] sm:$0xf]
    %v1065 = vld [vmem:[%s7 + $0x3c] sm:$0xf]
    %v1066 = vld [vmem:[%s7 + $0x40] sm:$0xf]
    %v1067 = vld [vmem:[%s7 + $0x44] sm:$0xf]
    %v1068 = vld [vmem:[%s7 + $0x48] sm:$0xf]
    %v1069 = vld [vmem:[%s7 + $0x4c] sm:$0xf]
    %v1070 = vld [vmem:[%s7 + $0x50] sm:$0xf]
    %v1071 = vld [vmem:[%s7 + $0x54] sm:$0xf]
    %v1072 = vld [vmem:[%s7 + $0x58] sm:$0xf]
    %v1073 = vld [vmem:[%s7 + $0x5c] sm:$0xf]
    %v1074 = vld [vmem:[%s7 + $0x60] sm:$0xf]
    %v1075 = vld [vmem:[%s7 + $0x64] sm:$0xf]
    %v1076 = vld [vmem:[%s7 + $0x68] sm:$0xf]
    %v1077 = vld [vmem:[%s7 + $0x6c] sm:$0xf]
    %v1078 = vld [vmem:[%s7 + $0x70] sm:$0xf]
    %v1079 = vld [vmem:[%s7 + $0x74] sm:$0xf]
    %v1080 = vld [vmem:[%s7 + $0x78] sm:$0xf]
    %v1081 = vld [vmem:[%s7 + $0x7c] sm:$0xf]
    %v1082 = vld [vmem:[%s7 + $0x80] sm:$0xf]
    %v1083 = vld [vmem:[%s7 + $0x84] sm:$0xf]
    %v1084 = vld [vmem:[%s7 + $0x88] sm:$0xf]
    %v1085 = vld [vmem:[%s7 + $0x8c] sm:$0xf]
    %v1086 = vld [vmem:[%s7 + $0x90] sm:$0xf]
    %v1087 = vld [vmem:[%s7 + $0x94] sm:$0xf]
    %v1088 = vld [vmem:[%s7 + $0x98] sm:$0xf]
    %v1089 = vld [vmem:[%s7 + $0x9c] sm:$0xf]
    %v1090 = vld [vmem:[%s7 + $0xa0] sm:$0xf]
    %v1091 = vld [vmem:[%s7 + $0xa4] sm:$0xf]
    %v1092 = vld [vmem:[%s7 + $0xa8] sm:$0xf]
    %v1093 = vld [vmem:[%s7 + $0xac] sm:$0xf]
    %v1094 = vld [vmem:[%s7 + $0xb0] sm:$0xf]
    %v1095 = vld [vmem:[%s7 + $0xb4] sm:$0xf]
    %v1096 = vld [vmem:[%s7 + $0xb8] sm:$0xf]
    %v1097 = vld [vmem:[%s7 + $0xbc] sm:$0xf]
    %v1098 = vld [vmem:[%s7 + $0xc0] sm:$0xf]
    %v1099 = vld [vmem:[%s7 + $0xc4] sm:$0xf]
    %v1100 = vld [vmem:[%s7 + $0xc8] sm:$0xf]
    %v1101 = vld [vmem:[%s7 + $0xcc] sm:$0xf]
    %v1102 = vld [vmem:[%s7 + $0xd0] sm:$0xf]
    %v1103 = vld [vmem:[%s7 + $0xd4] sm:$0xf]
    %v1104 = vld [vmem:[%s7 + $0xd8] sm:$0xf]
    %v1105 = vld [vmem:[%s7 + $0xdc] sm:$0xf]
    %v1106 = vld [vmem:[%s7 + $0xe0] sm:$0xf]
    %v1107 = vld [vmem:[%s7 + $0xe4] sm:$0xf]
    %v1108 = vld [vmem:[%s7 + $0xe8] sm:$0xf]
    %v1109 = vld [vmem:[%s7 + $0xec] sm:$0xf]
    %v1110 = vld [vmem:[%s7 + $0xf0] sm:$0xf]
    %v1111 = vld [vmem:[%s7 + $0xf4] sm:$0xf]
    %v1112 = vld [vmem:[%s7 + $0xf8] sm:$0xf]
    %v1113 = vld [vmem:[%s7 + $0xfc] sm:$0xf]
    %v1114 = vld [vmem:[%s7 + $0x100] sm:$0xf]
    %v1115 = vld [vmem:[%s7 + $0x104] sm:$0xf]
    %v1116 = vld [vmem:[%s7 + $0x108] sm:$0xf]
    %v1117 = vld [vmem:[%s7 + $0x10c] sm:$0xf]
    %v1118 = vld [vmem:[%s7 + $0x110] sm:$0xf]
    %v1119 = vld [vmem:[%s7 + $0x114] sm:$0xf]
    %v1120 = vld [vmem:[%s7 + $0x118] sm:$0xf]
    %v1121 = vld [vmem:[%s7 + $0x11c] sm:$0xf]
    %v1122 = vld [vmem:[%s7 + $0x120] sm:$0xf]
    %v1123 = vld [vmem:[%s7 + $0x124] sm:$0xf]
    %v1124 = vld [vmem:[%s7 + $0x128] sm:$0xf]
    %v1125 = vld [vmem:[%s7 + $0x12c] sm:$0xf]
    %v1126 = vld [vmem:[%s7 + $0x130] sm:$0xf]
    %v1127 = vld [vmem:[%s7 + $0x134] sm:$0xf]
    %v1128 = vld [vmem:[%s7 + $0x138] sm:$0xf]
    %v1129 = vld [vmem:[%s7 + $0x13c] sm:$0xf]
    %v1130 = vld [vmem:[%s7 + $0x140] sm:$0xf]
    %v1131 = vld [vmem:[%s7 + $0x144] sm:$0xf]
    %v1132 = vld [vmem:[%s7 + $0x148] sm:$0xf]
    %v1133 = vld [vmem:[%s7 + $0x14c] sm:$0xf]
    %v1134 = vld [vmem:[%s7 + $0x150] sm:$0xf]
    %v1135 = vld [vmem:[%s7 + $0x154] sm:$0xf]
    %v1136 = vld [vmem:[%s7 + $0x158] sm:$0xf]
    %v1137 = vld [vmem:[%s7 + $0x15c] sm:$0xf]
    %v1138 = vld [vmem:[%s7 + $0x160] sm:$0xf]
    %v1139 = vld [vmem:[%s7 + $0x164] sm:$0xf]
    %v1140 = vld [vmem:[%s7 + $0x168] sm:$0xf]
    %v1141 = vld [vmem:[%s7 + $0x16c] sm:$0xf]
    %v1142 = vld [vmem:[%s7 + $0x170] sm:$0xf]
    %v1143 = vld [vmem:[%s7 + $0x174] sm:$0xf]
    %v1144 = vld [vmem:[%s7 + $0x178] sm:$0xf]
    %v1145 = vld [vmem:[%s7 + $0x17c] sm:$0xf]
    %v1146 = vld [vmem:[%s7 + $0x180] sm:$0xf]
    %v1147 = vld [vmem:[%s7 + $0x184] sm:$0xf]
    %v1148 = vld [vmem:[%s7 + $0x188] sm:$0xf]
    %v1149 = vld [vmem:[%s7 + $0x18c] sm:$0xf]
    %v1150 = vld [vmem:[%s7 + $0x190] sm:$0xf]
    %v1151 = vld [vmem:[%s7 + $0x194] sm:$0xf]
    %v1152 = vld [vmem:[%s7 + $0x198] sm:$0xf]
    %v1153 = vld [vmem:[%s7 + $0x19c] sm:$0xf]
    %v1154 = vld [vmem:[%s7 + $0x1a0] sm:$0xf]
    %v1155 = vld [vmem:[%s7 + $0x1a4] sm:$0xf]
    %v1156 = vld [vmem:[%s7 + $0x1a8] sm:$0xf]
    %v1157 = vld [vmem:[%s7 + $0x1ac] sm:$0xf]
    %v1158 = vld [vmem:[%s7 + $0x1b0] sm:$0xf]
    %v1159 = vld [vmem:[%s7 + $0x1b4] sm:$0xf]
    %v1160 = vld [vmem:[%s7 + $0x1b8] sm:$0xf]
    %v1161 = vld [vmem:[%s7 + $0x1bc] sm:$0xf]
    %v1162 = vld [vmem:[%s7 + $0x1c0] sm:$0xf]
    %v1163 = vld [vmem:[%s7 + $0x1c4] sm:$0xf]
    %v1164 = vld [vmem:[%s7 + $0x1c8] sm:$0xf]
    %v1165 = vld [vmem:[%s7 + $0x1cc] sm:$0xf]
    %v1166 = vld [vmem:[%s7 + $0x1d0] sm:$0xf]
    %v1167 = vld [vmem:[%s7 + $0x1d4] sm:$0xf]
    %v1168 = vld [vmem:[%s7 + $0x1d8] sm:$0xf]
    %v1169 = vld [vmem:[%s7 + $0x1dc] sm:$0xf]
    %v1170 = vld [vmem:[%s7 + $0x1e0] sm:$0xf]
    %v1171 = vld [vmem:[%s7 + $0x1e4] sm:$0xf]
    %v1172 = vld [vmem:[%s7 + $0x1e8] sm:$0xf]
    %v1173 = vld [vmem:[%s7 + $0x1ec] sm:$0xf]
    %v1174 = vld [vmem:[%s7 + $0x1f0] sm:$0xf]
    %v1175 = vld [vmem:[%s7 + $0x1f4] sm:$0xf]
    %v1176 = vld [vmem:[%s7 + $0x1f8] sm:$0xf]
    %v1177 = vld [vmem:[%s7 + $0x1fc] sm:$0xf]
    %v1178 = vld [vmem:[%s7 + $0x200] sm:$0xf]
    %v1179 = vld [vmem:[%s7 + $0x204] sm:$0xf]
    %v1180 = vld [vmem:[%s7 + $0x208] sm:$0xf]
    %v1181 = vld [vmem:[%s7 + $0x20c] sm:$0xf]
    %v1182 = vld [vmem:[%s7 + $0x210] sm:$0xf]
    %v1183 = vld [vmem:[%s7 + $0x214] sm:$0xf]
    %v1184 = vld [vmem:[%s7 + $0x218] sm:$0xf]
    %v1185 = vld [vmem:[%s7 + $0x21c] sm:$0xf]
    %v1186 = vld [vmem:[%s7 + $0x220] sm:$0xf]
    %v1187 = vld [vmem:[%s7 + $0x224] sm:$0xf]
    %v1188 = vld [vmem:[%s7 + $0x228] sm:$0xf]
    %v1189 = vld [vmem:[%s7 + $0x22c] sm:$0xf]
    %v1190 = vld [vmem:[%s7 + $0x230] sm:$0xf]
    %v1191 = vld [vmem:[%s7 + $0x234] sm:$0xf]
    %v1192 = vld [vmem:[%s7 + $0x238] sm:$0xf]
    %v1193 = vld [vmem:[%s7 + $0x23c] sm:$0xf]
    %v1194 = vld [vmem:[%s8] sm:$0xff]
    %v1195 = vld [vmem:[%s8 + $0x8] sm:$0xff]
    %v1196 = vld [vmem:[%s8 + $0x10] sm:$0xff]
    %v1197 = vld [vmem:[%s8 + $0x18] sm:$0xff]
    %v1342 = vunpack.c.l.b16 %v1050
    %v1343 = vunpack.c.l.b16 %v1051
    %v1344 = vunpack.c.l.b16 %v1052
    %v1345 = vunpack.c.l.b16 %v1053
    %v1346 = vunpack.c.l.b16 %v1054
    %v1347 = vunpack.c.l.b16 %v1055
    %v1348 = vunpack.c.l.b16 %v1056
    %v1349 = vunpack.c.l.b16 %v1057
    %v1350 = vunpack.c.l.b16 %v1058
    %v1351 = vunpack.c.l.b16 %v1059
    %v1352 = vunpack.c.l.b16 %v1060
    %v1353 = vunpack.c.l.b16 %v1061
    %v1354 = vunpack.c.l.b16 %v1062
    %v1355 = vunpack.c.l.b16 %v1063
    %v1356 = vunpack.c.l.b16 %v1064
    %v1357 = vunpack.c.l.b16 %v1065
    %v1358 = vunpack.c.l.b16 %v1066
    %v1359 = vunpack.c.l.b16 %v1067
    %v1360 = vunpack.c.l.b16 %v1068
    %v1361 = vunpack.c.l.b16 %v1069
    %v1362 = vunpack.c.l.b16 %v1070
    %v1363 = vunpack.c.l.b16 %v1071
    %v1364 = vunpack.c.l.b16 %v1072
    %v1365 = vunpack.c.l.b16 %v1073
    %v1366 = vunpack.c.l.b16 %v1074
    %v1367 = vunpack.c.l.b16 %v1075
    %v1368 = vunpack.c.l.b16 %v1076
    %v1369 = vunpack.c.l.b16 %v1077
    %v1370 = vunpack.c.l.b16 %v1078
    %v1371 = vunpack.c.l.b16 %v1079
    %v1372 = vunpack.c.l.b16 %v1080
    %v1373 = vunpack.c.l.b16 %v1081
    %v1374 = vunpack.c.l.b16 %v1082
    %v1375 = vunpack.c.l.b16 %v1083
    %v1376 = vunpack.c.l.b16 %v1084
    %v1377 = vunpack.c.l.b16 %v1085
    %v1378 = vunpack.c.l.b16 %v1086
    %v1379 = vunpack.c.l.b16 %v1087
    %v1380 = vunpack.c.l.b16 %v1088
    %v1381 = vunpack.c.l.b16 %v1089
    %v1382 = vunpack.c.l.b16 %v1090
    %v1383 = vunpack.c.l.b16 %v1091
    %v1384 = vunpack.c.l.b16 %v1092
    %v1385 = vunpack.c.l.b16 %v1093
    %v1386 = vunpack.c.l.b16 %v1094
    %v1387 = vunpack.c.l.b16 %v1095
    %v1388 = vunpack.c.l.b16 %v1096
    %v1389 = vunpack.c.l.b16 %v1097
    %v1390 = vunpack.c.l.b16 %v1098
    %v1391 = vunpack.c.l.b16 %v1099
    %v1392 = vunpack.c.l.b16 %v1100
    %v1393 = vunpack.c.l.b16 %v1101
    %v1394 = vunpack.c.l.b16 %v1102
    %v1395 = vunpack.c.l.b16 %v1103
    %v1396 = vunpack.c.l.b16 %v1104
    %v1397 = vunpack.c.l.b16 %v1105
    %v1398 = vunpack.c.l.b16 %v1106
    %v1399 = vunpack.c.l.b16 %v1107
    %v1400 = vunpack.c.l.b16 %v1108
    %v1401 = vunpack.c.l.b16 %v1109
    %v1402 = vunpack.c.l.b16 %v1110
    %v1403 = vunpack.c.l.b16 %v1111
    %v1404 = vunpack.c.l.b16 %v1112
    %v1405 = vunpack.c.l.b16 %v1113
    %v1406 = vunpack.c.l.b16 %v1114
    %v1407 = vunpack.c.l.b16 %v1115
    %v1408 = vunpack.c.l.b16 %v1116
    %v1409 = vunpack.c.l.b16 %v1117
    %v1410 = vunpack.c.l.b16 %v1118
    %v1411 = vunpack.c.l.b16 %v1119
    %v1412 = vunpack.c.l.b16 %v1120
    %v1413 = vunpack.c.l.b16 %v1121
    %v1414 = vunpack.c.l.b16 %v1122
    %v1415 = vunpack.c.l.b16 %v1123
    %v1416 = vunpack.c.l.b16 %v1124
    %v1417 = vunpack.c.l.b16 %v1125
    %v1418 = vunpack.c.l.b16 %v1126
    %v1419 = vunpack.c.l.b16 %v1127
    %v1420 = vunpack.c.l.b16 %v1128
    %v1421 = vunpack.c.l.b16 %v1129
    %v1422 = vunpack.c.l.b16 %v1130
    %v1423 = vunpack.c.l.b16 %v1131
    %v1424 = vunpack.c.l.b16 %v1132
    %v1425 = vunpack.c.l.b16 %v1133
    %v1426 = vunpack.c.l.b16 %v1134
    %v1427 = vunpack.c.l.b16 %v1135
    %v1428 = vunpack.c.l.b16 %v1136
    %v1429 = vunpack.c.l.b16 %v1137
    %v1430 = vunpack.c.l.b16 %v1138
    %v1431 = vunpack.c.l.b16 %v1139
    %v1432 = vunpack.c.l.b16 %v1140
    %v1433 = vunpack.c.l.b16 %v1141
    %v1434 = vunpack.c.l.b16 %v1142
    %v1435 = vunpack.c.l.b16 %v1143
    %v1436 = vunpack.c.l.b16 %v1144
    %v1437 = vunpack.c.l.b16 %v1145
    %v1438 = vunpack.c.l.b16 %v1146
    %v1439 = vunpack.c.l.b16 %v1147
    %v1440 = vunpack.c.l.b16 %v1148
    %v1441 = vunpack.c.l.b16 %v1149
    %v1442 = vunpack.c.l.b16 %v1150
    %v1443 = vunpack.c.l.b16 %v1151
    %v1444 = vunpack.c.l.b16 %v1152
    %v1445 = vunpack.c.l.b16 %v1153
    %v1446 = vunpack.c.l.b16 %v1154
    %v1447 = vunpack.c.l.b16 %v1155
    %v1448 = vunpack.c.l.b16 %v1156
    %v1449 = vunpack.c.l.b16 %v1157
    %v1450 = vunpack.c.l.b16 %v1158
    %v1451 = vunpack.c.l.b16 %v1159
    %v1452 = vunpack.c.l.b16 %v1160
    %v1453 = vunpack.c.l.b16 %v1161
    %v1454 = vunpack.c.l.b16 %v1162
    %v1455 = vunpack.c.l.b16 %v1163
    %v1456 = vunpack.c.l.b16 %v1164
    %v1457 = vunpack.c.l.b16 %v1165
    %v1458 = vunpack.c.l.b16 %v1166
    %v1459 = vunpack.c.l.b16 %v1167
    %v1460 = vunpack.c.l.b16 %v1168
    %v1461 = vunpack.c.l.b16 %v1169
    %v1462 = vunpack.c.l.b16 %v1170
    %v1463 = vunpack.c.l.b16 %v1171
    %v1464 = vunpack.c.l.b16 %v1172
    %v1465 = vunpack.c.l.b16 %v1173
    %v1466 = vunpack.c.l.b16 %v1174
    %v1467 = vunpack.c.l.b16 %v1175
    %v1468 = vunpack.c.l.b16 %v1176
    %v1469 = vunpack.c.l.b16 %v1177
    %v1470 = vunpack.c.l.b16 %v1178
    %v1471 = vunpack.c.l.b16 %v1179
    %v1472 = vunpack.c.l.b16 %v1180
    %v1473 = vunpack.c.l.b16 %v1181
    %v1474 = vunpack.c.l.b16 %v1182
    %v1475 = vunpack.c.l.b16 %v1183
    %v1476 = vunpack.c.l.b16 %v1184
    %v1477 = vunpack.c.l.b16 %v1185
    %v1478 = vunpack.c.l.b16 %v1186
    %v1479 = vunpack.c.l.b16 %v1187
    %v1480 = vunpack.c.l.b16 %v1188
    %v1481 = vunpack.c.l.b16 %v1189
    %v1482 = vunpack.c.l.b16 %v1190
    %v1483 = vunpack.c.l.b16 %v1191
    %v1484 = vunpack.c.l.b16 %v1192
    %v1485 = vunpack.c.l.b16 %v1193
    %v1486 = vpack.c.b16 %v1343, %v1342
    %v1487 = vpack.c.b16 %v1345, %v1344
    %v1488 = vpack.c.b16 %v1347, %v1346
    %v1489 = vpack.c.b16 %v1349, %v1348
    %v1490 = vpack.c.b16 %v1351, %v1350
    %v1491 = vpack.c.b16 %v1353, %v1352
    %v1492 = vpack.c.b16 %v1355, %v1354
    %v1493 = vpack.c.b16 %v1357, %v1356
    %v1494 = vpack.c.b16 %v1359, %v1358
    %v1495 = vpack.c.b16 %v1361, %v1360
    %v1496 = vpack.c.b16 %v1363, %v1362
    %v1497 = vpack.c.b16 %v1365, %v1364
    %v1498 = vpack.c.b16 %v1367, %v1366
    %v1499 = vpack.c.b16 %v1369, %v1368
    %v1500 = vpack.c.b16 %v1371, %v1370
    %v1501 = vpack.c.b16 %v1373, %v1372
    %v1502 = vpack.c.b16 %v1375, %v1374
    %v1503 = vpack.c.b16 %v1377, %v1376
    %v1504 = vpack.c.b16 %v1379, %v1378
    %v1505 = vpack.c.b16 %v1381, %v1380
    %v1506 = vpack.c.b16 %v1383, %v1382
    %v1507 = vpack.c.b16 %v1385, %v1384
    %v1508 = vpack.c.b16 %v1387, %v1386
    %v1509 = vpack.c.b16 %v1389, %v1388
    %v1510 = vpack.c.b16 %v1391, %v1390
    %v1511 = vpack.c.b16 %v1393, %v1392
    %v1512 = vpack.c.b16 %v1395, %v1394
    %v1513 = vpack.c.b16 %v1397, %v1396
    %v1514 = vpack.c.b16 %v1399, %v1398
    %v1515 = vpack.c.b16 %v1401, %v1400
    %v1516 = vpack.c.b16 %v1403, %v1402
    %v1517 = vpack.c.b16 %v1405, %v1404
    %v1518 = vpack.c.b16 %v1407, %v1406
    %v1519 = vpack.c.b16 %v1409, %v1408
    %v1520 = vpack.c.b16 %v1411, %v1410
    %v1521 = vpack.c.b16 %v1413, %v1412
    %v1522 = vpack.c.b16 %v1415, %v1414
    %v1523 = vpack.c.b16 %v1417, %v1416
    %v1524 = vpack.c.b16 %v1419, %v1418
    %v1525 = vpack.c.b16 %v1421, %v1420
    %v1526 = vpack.c.b16 %v1423, %v1422
    %v1527 = vpack.c.b16 %v1425, %v1424
    %v1528 = vpack.c.b16 %v1427, %v1426
    %v1529 = vpack.c.b16 %v1429, %v1428
    %v1530 = vpack.c.b16 %v1431, %v1430
    %v1531 = vpack.c.b16 %v1433, %v1432
    %v1532 = vpack.c.b16 %v1435, %v1434
    %v1533 = vpack.c.b16 %v1437, %v1436
    %v1534 = vpack.c.b16 %v1439, %v1438
    %v1535 = vpack.c.b16 %v1441, %v1440
    %v1536 = vpack.c.b16 %v1443, %v1442
    %v1537 = vpack.c.b16 %v1445, %v1444
    %v1538 = vpack.c.b16 %v1447, %v1446
    %v1539 = vpack.c.b16 %v1449, %v1448
    %v1540 = vpack.c.b16 %v1451, %v1450
    %v1541 = vpack.c.b16 %v1453, %v1452
    %v1542 = vpack.c.b16 %v1455, %v1454
    %v1543 = vpack.c.b16 %v1457, %v1456
    %v1544 = vpack.c.b16 %v1459, %v1458
    %v1545 = vpack.c.b16 %v1461, %v1460
    %v1546 = vpack.c.b16 %v1463, %v1462
    %v1547 = vpack.c.b16 %v1465, %v1464
    %v1548 = vpack.c.b16 %v1467, %v1466
    %v1549 = vpack.c.b16 %v1469, %v1468
    %v1550 = vpack.c.b16 %v1471, %v1470
    %v1551 = vpack.c.b16 %v1473, %v1472
    %v1552 = vpack.c.b16 %v1475, %v1474
    %v1553 = vpack.c.b16 %v1477, %v1476
    %v1554 = vpack.c.b16 %v1479, %v1478
    %v1555 = vpack.c.b16 %v1481, %v1480
    %v1556 = vpack.c.b16 %v1483, %v1482
    %v1557 = vpack.c.b16 %v1485, %v1484
    %1630 = vmatpush.bf16.msra.mxu0 %v1493
    %1631 = vmatpush.bf16.msra.mxu0 %v1492
    %1632 = vmatpush.bf16.msra.mxu0 %v1491
    %1633 = vmatpush.bf16.msra.mxu0 %v1490
    %1634 = vmatpush.bf16.msra.mxu0 %v1489
    %1635 = vmatpush.bf16.msra.mxu0 %v1488
    %1636 = vmatpush.bf16.msra.mxu0 %v1487
    %1637 = vmatpush.bf16.msra.mxu0 %v1486
    %1638 = vmatmul.bf16.gmra.mxu0 %v1032
    %v1639 = vpop.f32.mrf.mxu0
    %v1640 = vadd.f32 %v1194, %v1639
    %v1641 = vpop.f32.mrf.mxu0
    %v1642 = vadd.f32 %v1195, %v1641
    %1643 = vmatmul.bf16.gmra.mxu0 %v1041
    %v1644 = vpop.f32.mrf.mxu0
    %v1645 = vadd.f32 %v1196, %v1644
    %v1646 = vpop.f32.mrf.mxu0
    %v1647 = vadd.f32 %v1197, %v1646
    %1648 = vdwg.mxu0
    %1649 = vmatpush.bf16.msra.mxu0 %v1501
    %1650 = vmatpush.bf16.msra.mxu0 %v1500
    %1651 = vmatpush.bf16.msra.mxu0 %v1499
    %1652 = vmatpush.bf16.msra.mxu0 %v1498
    %1653 = vmatpush.bf16.msra.mxu0 %v1497
    %1654 = vmatpush.bf16.msra.mxu0 %v1496
    %1655 = vmatpush.bf16.msra.mxu0 %v1495
    %1656 = vmatpush.bf16.msra.mxu0 %v1494
    %1657 = vmatmul.bf16.gmra.mxu0 %v1033
    %v1658 = vpop.f32.mrf.mxu0
    %v1659 = vadd.f32 %v1640, %v1658
    %v1660 = vpop.f32.mrf.mxu0
    %v1661 = vadd.f32 %v1642, %v1660
    %1662 = vmatmul.bf16.gmra.mxu0 %v1042
    %v1663 = vpop.f32.mrf.mxu0
    %v1664 = vadd.f32 %v1645, %v1663
    %v1665 = vpop.f32.mrf.mxu0
    %v1666 = vadd.f32 %v1647, %v1665
    %1667 = vdwg.mxu0
    %1668 = vmatpush.bf16.msra.mxu0 %v1509
    %1669 = vmatpush.bf16.msra.mxu0 %v1508
    %1670 = vmatpush.bf16.msra.mxu0 %v1507
    %1671 = vmatpush.bf16.msra.mxu0 %v1506
    %1672 = vmatpush.bf16.msra.mxu0 %v1505
    %1673 = vmatpush.bf16.msra.mxu0 %v1504
    %1674 = vmatpush.bf16.msra.mxu0 %v1503
    %1675 = vmatpush.bf16.msra.mxu0 %v1502
    %1676 = vmatmul.bf16.gmra.mxu0 %v1034
    %v1677 = vpop.f32.mrf.mxu0
    %v1678 = vadd.f32 %v1659, %v1677
    %v1679 = vpop.f32.mrf.mxu0
    %v1680 = vadd.f32 %v1661, %v1679
    %1681 = vmatmul.bf16.gmra.mxu0 %v1043
    %v1682 = vpop.f32.mrf.mxu0
    %v1683 = vadd.f32 %v1664, %v1682
    %v1684 = vpop.f32.mrf.mxu0
    %v1685 = vadd.f32 %v1666, %v1684
    %1686 = vdwg.mxu0
    %1687 = vmatpush.bf16.msra.mxu0 %v1517
    %1688 = vmatpush.bf16.msra.mxu0 %v1516
    %1689 = vmatpush.bf16.msra.mxu0 %v1515
    %1690 = vmatpush.bf16.msra.mxu0 %v1514
    %1691 = vmatpush.bf16.msra.mxu0 %v1513
    %1692 = vmatpush.bf16.msra.mxu0 %v1512
    %1693 = vmatpush.bf16.msra.mxu0 %v1511
    %1694 = vmatpush.bf16.msra.mxu0 %v1510
    %1695 = vmatmul.bf16.gmra.mxu0 %v1035
    %v1696 = vpop.f32.mrf.mxu0
    %v1697 = vadd.f32 %v1678, %v1696
    %v1698 = vpop.f32.mrf.mxu0
    %v1699 = vadd.f32 %v1680, %v1698
    %1700 = vmatmul.bf16.gmra.mxu0 %v1044
    %v1701 = vpop.f32.mrf.mxu0
    %v1702 = vadd.f32 %v1683, %v1701
    %v1703 = vpop.f32.mrf.mxu0
    %v1704 = vadd.f32 %v1685, %v1703
    %1705 = vdwg.mxu0
    %1706 = vmatpush.bf16.msra.mxu0 %v1525
    %1707 = vmatpush.bf16.msra.mxu0 %v1524
    %1708 = vmatpush.bf16.msra.mxu0 %v1523
    %1709 = vmatpush.bf16.msra.mxu0 %v1522
    %1710 = vmatpush.bf16.msra.mxu0 %v1521
    %1711 = vmatpush.bf16.msra.mxu0 %v1520
    %1712 = vmatpush.bf16.msra.mxu0 %v1519
    %1713 = vmatpush.bf16.msra.mxu0 %v1518
    %1714 = vmatmul.bf16.gmra.mxu0 %v1036
    %v1715 = vpop.f32.mrf.mxu0
    %v1716 = vadd.f32 %v1697, %v1715
    %v1717 = vpop.f32.mrf.mxu0
    %v1718 = vadd.f32 %v1699, %v1717
    %1719 = vmatmul.bf16.gmra.mxu0 %v1045
    %v1720 = vpop.f32.mrf.mxu0
    %v1721 = vadd.f32 %v1702, %v1720
    %v1722 = vpop.f32.mrf.mxu0
    %v1723 = vadd.f32 %v1704, %v1722
    %1724 = vdwg.mxu0
    %1725 = vmatpush.bf16.msra.mxu0 %v1533
    %1726 = vmatpush.bf16.msra.mxu0 %v1532
    %1727 = vmatpush.bf16.msra.mxu0 %v1531
    %1728 = vmatpush.bf16.msra.mxu0 %v1530
    %1729 = vmatpush.bf16.msra.mxu0 %v1529
    %1730 = vmatpush.bf16.msra.mxu0 %v1528
    %1731 = vmatpush.bf16.msra.mxu0 %v1527
    %1732 = vmatpush.bf16.msra.mxu0 %v1526
    %1733 = vmatmul.bf16.gmra.mxu0 %v1037
    %v1734 = vpop.f32.mrf.mxu0
    %v1735 = vadd.f32 %v1716, %v1734
    %v1736 = vpop.f32.mrf.mxu0
    %v1737 = vadd.f32 %v1718, %v1736
    %1738 = vmatmul.bf16.gmra.mxu0 %v1046
    %v1739 = vpop.f32.mrf.mxu0
    %v1740 = vadd.f32 %v1721, %v1739
    %v1741 = vpop.f32.mrf.mxu0
    %v1742 = vadd.f32 %v1723, %v1741
    %1743 = vdwg.mxu0
    %1744 = vmatpush.bf16.msra.mxu0 %v1541
    %1745 = vmatpush.bf16.msra.mxu0 %v1540
    %1746 = vmatpush.bf16.msra.mxu0 %v1539
    %1747 = vmatpush.bf16.msra.mxu0 %v1538
    %1748 = vmatpush.bf16.msra.mxu0 %v1537
    %1749 = vmatpush.bf16.msra.mxu0 %v1536
    %1750 = vmatpush.bf16.msra.mxu0 %v1535
    %1751 = vmatpush.bf16.msra.mxu0 %v1534
    %1752 = vmatmul.bf16.gmra.mxu0 %v1038
    %v1753 = vpop.f32.mrf.mxu0
    %v1754 = vadd.f32 %v1735, %v1753
    %v1755 = vpop.f32.mrf.mxu0
    %v1756 = vadd.f32 %v1737, %v1755
    %1757 = vmatmul.bf16.gmra.mxu0 %v1047
    %v1758 = vpop.f32.mrf.mxu0
    %v1759 = vadd.f32 %v1740, %v1758
    %v1760 = vpop.f32.mrf.mxu0
    %v1761 = vadd.f32 %v1742, %v1760
    %1762 = vdwg.mxu0
    %1763 = vmatpush.bf16.msra.mxu0 %v1549
    %1764 = vmatpush.bf16.msra.mxu0 %v1548
    %1765 = vmatpush.bf16.msra.mxu0 %v1547
    %1766 = vmatpush.bf16.msra.mxu0 %v1546
    %1767 = vmatpush.bf16.msra.mxu0 %v1545
    %1768 = vmatpush.bf16.msra.mxu0 %v1544
    %1769 = vmatpush.bf16.msra.mxu0 %v1543
    %1770 = vmatpush.bf16.msra.mxu0 %v1542
    %1771 = vmatmul.bf16.gmra.mxu0 %v1039
    %v1772 = vpop.f32.mrf.mxu0
    %v1773 = vadd.f32 %v1754, %v1772
    %v1774 = vpop.f32.mrf.mxu0
    %v1775 = vadd.f32 %v1756, %v1774
    %1776 = vmatmul.bf16.gmra.mxu0 %v1048
    %v1777 = vpop.f32.mrf.mxu0
    %v1778 = vadd.f32 %v1759, %v1777
    %v1779 = vpop.f32.mrf.mxu0
    %v1780 = vadd.f32 %v1761, %v1779
    %1781 = vdwg.mxu0
    %1782 = vmatpush.bf16.msra.mxu0 %v1557
    %1783 = vmatpush.bf16.msra.mxu0 %v1556
    %1784 = vmatpush.bf16.msra.mxu0 %v1555
    %1785 = vmatpush.bf16.msra.mxu0 %v1554
    %1786 = vmatpush.bf16.msra.mxu0 %v1553
    %1787 = vmatpush.bf16.msra.mxu0 %v1552
    %1788 = vmatpush.bf16.msra.mxu0 %v1551
    %1789 = vmatpush.bf16.msra.mxu0 %v1550
    %1790 = vmatmul.bf16.gmra.mxu0 %v1040
    %v1791 = vpop.f32.mrf.mxu0
    %v1792 = vadd.f32 %v1773, %v1791
    %v1793 = vpop.f32.mrf.mxu0
    %v1794 = vadd.f32 %v1775, %v1793
    %1795 = vmatmul.bf16.gmra.mxu0 %v1049
    %v1796 = vpop.f32.mrf.mxu0
    %v1797 = vadd.f32 %v1778, %v1796
    %v1798 = vpop.f32.mrf.mxu0
    %v1799 = vadd.f32 %v1780, %v1798
    %1800 = vdwg.mxu0
    %v1801 = vld [vmem:[%s9] sm:$0xff]
    %v1802 = vld [vmem:[%s9 + $0x8] sm:$0xff]
    %v1803 = vld [vmem:[%s9 + $0x10] sm:$0xff]
    %v1804 = vld [vmem:[%s9 + $0x18] sm:$0xff]
    %v1805 = vld [vmem:[%s14] sm:$0xff]
    %v1806 = vsel %vm147, %v1792, 0.0
    %1807 = vadd.xlane.f32.xlu0 %v1806
    %v1808 = vpop.xlane.xlu0 %1807
    %v1809 = vsel %vm147, %v1794, 0.0
    %1810 = vadd.xlane.f32.xlu0 %v1809
    %v1811 = vpop.xlane.xlu0 %1810
    %v1812 = vsel %vm147, %v1797, 0.0
    %1813 = vadd.xlane.f32.xlu0 %v1812
    %v1814 = vpop.xlane.xlu0 %1813
    %v1815 = vsel %vm147, %v1799, 0.0
    %1816 = vadd.xlane.f32.xlu0 %v1815
    %v1817 = vpop.xlane.xlu0 %1816
    %v1818 = vrcp.pop 32.0
    %v1819 = vmul.f32 32.0, %v1818
    %v1820 = vsub.f32 1.0, %v1819
    %v1821 = vmul.f32 %v1818, %v1820
    %v1822 = vadd.f32 %v1818, %v1821
    %vm1823 = vweird.f32 %v1818
    %v1824 = vsel %vm1823, %v1818, %v1822
    %v1825 = vmul.f32 %v1808, %v1824
    %v1826 = vmul.f32 %v1811, %v1824
    %v1827 = vmul.f32 %v1814, %v1824
    %v1828 = vmul.f32 %v1817, %v1824
    %v1829 = vsub.f32 %v1792, %v1825
    %v1830 = vsub.f32 %v1794, %v1826
    %v1831 = vsub.f32 %v1797, %v1827
    %v1832 = vsub.f32 %v1799, %v1828
    %v1833 = vmul.f32 %v1829, %v1829
    %v1834 = vmul.f32 %v1830, %v1830
    %v1835 = vmul.f32 %v1831, %v1831
    %v1836 = vmul.f32 %v1832, %v1832
    %v1837 = vsel %vm147, %v1833, 0.0
    %1838 = vadd.xlane.f32.xlu0 %v1837
    %v1839 = vpop.xlane.xlu0 %1838
    %v1840 = vsel %vm147, %v1834, 0.0
    %1841 = vadd.xlane.f32.xlu0 %v1840
    %v1842 = vpop.xlane.xlu0 %1841
    %v1843 = vsel %vm147, %v1835, 0.0
    %1844 = vadd.xlane.f32.xlu0 %v1843
    %v1845 = vpop.xlane.xlu0 %1844
    %v1846 = vsel %vm147, %v1836, 0.0
    %1847 = vadd.xlane.f32.xlu0 %v1846
    %v1848 = vpop.xlane.xlu0 %1847
    %v1849 = vmul.f32 %v1839, %v1824
    %v1850 = vmul.f32 %v1842, %v1824
    %v1851 = vmul.f32 %v1845, %v1824
    %v1852 = vmul.f32 %v1848, %v1824
    %v1853 = vadd.f32 %v1849, 1e-05
    %v1854 = vadd.f32 %v1850, 1e-05
    %v1855 = vadd.f32 %v1851, 1e-05
    %v1856 = vadd.f32 %v1852, 1e-05
    %v1857 = vrsqrt.pop %v1853
    %v1858 = vmul.f32 %v1857, %v1853
    %v1859 = vmul.f32 %v1858, %v1857
    %v1860 = vmul.f32 0.5, %v1859
    %v1861 = vsub.f32 1.5, %v1860
    %v1862 = vmul.f32 %v1857, %v1861
    %vm1863 = vweird.f32 %v1853
    %vm1864 = vweird.f32 %v1857
    %vm1865 = vmor %vm1863, %vm1864
    %v1866 = vsel %vm1865, %v1857, %v1862
    %v1867 = vrsqrt.pop %v1854
    %v1868 = vmul.f32 %v1867, %v1854
    %v1869 = vmul.f32 %v1868, %v1867
    %v1870 = vmul.f32 0.5, %v1869
    %v1871 = vsub.f32 1.5, %v1870
    %v1872 = vmul.f32 %v1867, %v1871
    %vm1873 = vweird.f32 %v1854
    %vm1874 = vweird.f32 %v1867
    %vm1875 = vmor %vm1873, %vm1874
    %v1876 = vsel %vm1875, %v1867, %v1872
    %v1877 = vrsqrt.pop %v1855
    %v1878 = vmul.f32 %v1877, %v1855
    %v1879 = vmul.f32 %v1878, %v1877
    %v1880 = vmul.f32 0.5, %v1879
    %v1881 = vsub.f32 1.5, %v1880
    %v1882 = vmul.f32 %v1877, %v1881
    %vm1883 = vweird.f32 %v1855
    %vm1884 = vweird.f32 %v1877
    %vm1885 = vmor %vm1883, %vm1884
    %v1886 = vsel %vm1885, %v1877, %v1882
    %v1887 = vrsqrt.pop %v1856
    %v1888 = vmul.f32 %v1887, %v1856
    %v1889 = vmul.f32 %v1888, %v1887
    %v1890 = vmul.f32 0.5, %v1889
    %v1891 = vsub.f32 1.5, %v1890
    %v1892 = vmul.f32 %v1887, %v1891
    %vm1893 = vweird.f32 %v1856
    %vm1894 = vweird.f32 %v1887
    %vm1895 = vmor %vm1893, %vm1894
    %v1896 = vsel %vm1895, %v1887, %v1892
    %v1897 = vmul.f32 %v1829, %v1866
    %v1898 = vmul.f32 %v1830, %v1876
    %v1899 = vmul.f32 %v1831, %v1886
    %v1900 = vmul.f32 %v1832, %v1896
    %v1901 = vperm.slane %v1805, 0
    %v1902 = vmul.f32 %v1897, %v1901
    %v1903 = vmul.f32 %v1898, %v1901
    %v1904 = vmul.f32 %v1899, %v1901
    %v1905 = vmul.f32 %v1900, %v1901
    %v1906 = vperm.slane %v1805, 1
    %v1907 = vadd.f32 %v1902, %v1906
    %v1908 = vadd.f32 %v1903, %v1906
    %v1909 = vadd.f32 %v1904, %v1906
    %v1910 = vadd.f32 %v1905, %v1906
    %v1911 = vpack.c.bf16 %v1908, %v1907
    %v1912 = vpack.c.bf16 %v1910, %v1909
    %v1913 = vld [vmem:[%s10] sm:$0xf]
    %v1914 = vld [vmem:[%s10 + $0x4] sm:$0xf]
    %v1915 = vld [vmem:[%s10 + $0x8] sm:$0xf]
    %v1916 = vld [vmem:[%s10 + $0xc] sm:$0xf]
    %v1917 = vperm.slane %v1805, 2
    %v1922 = vunpack.c.l.b16 %v1913
    %v1923 = vunpack.c.l.b16 %v1914
    %v1924 = vunpack.c.l.b16 %v1915
    %v1925 = vunpack.c.l.b16 %v1916
    %v1926 = vpack.c.b16 %v1923, %v1922
    %v1927 = vpack.c.b16 %v1925, %v1924
    %v1931 = vsel %vm147, %v1911, 0
    %v1934 = vsel %vm147, %v1912, 0
    %1936 = vmatpush.bf16.msra.mxu0 0
    %1937 = vmatpush.bf16.msra.mxu0 0
    %1938 = vmatpush.bf16.msra.mxu0 0
    %1939 = vmatpush.bf16.msra.mxu0 0
    %1940 = vmatpush.bf16.msra.mxu0 0
    %1941 = vmatpush.bf16.msra.mxu0 0
    %1942 = vmatpush.bf16.msra.mxu0 %v1927
    %1943 = vmatpush.bf16.msra.mxu0 %v1926
    %1944 = vmatmul.bf16.gmra.mxu0 %v1931
    %v1945 = vpop.f32.mrf.mxu0
    %v1946 = vadd.f32 %v1917, %v1945
    %v1947 = vpop.f32.mrf.mxu0
    %v1948 = vadd.f32 %v1917, %v1947
    %1949 = vmatmul.bf16.gmra.mxu0 %v1934
    %v1950 = vpop.f32.mrf.mxu0
    %v1951 = vadd.f32 %v1917, %v1950
    %v1952 = vpop.f32.mrf.mxu0
    %v1953 = vadd.f32 %v1917, %v1952
    %1954 = vdwg.mxu0
    %v1955 = vpack.c.bf16 %v1948, %v1946
    %v1956 = vpack.c.bf16 %v1953, %v1951
    %1959 = vrot.lane.b32.xlu0 %v1955, 96
    %v1960 = vpop.permute.xlu0 %1959
    %1961 = vrot.lane.b32.xlu0 %v1956, 96
    %v1962 = vpop.permute.xlu0 %1961
    %vm1963 = vcmask 64512
    %v1965 = vsel %vm1963, %v1955, 0
    %v1968 = vsel %vm1963, %v1956, 0
    %v1971 = vsel %vm1963, %v1960, 0
    %v1974 = vsel %vm1963, %v1962, 0
    %1976 = vmatpush.bf16.xpose.msra.mxu0 0
    %1977 = vmatpush.bf16.xpose.msra.mxu0 0
    %1978 = vmatpush.bf16.xpose.msra.mxu0 0
    %1979 = vmatpush.bf16.xpose.msra.mxu0 0
    %1980 = vmatpush.bf16.xpose.msra.mxu0 0
    %1981 = vmatpush.bf16.xpose.msra.mxu0 0
    %1982 = vmatpush.bf16.xpose.msra.mxu0 %v1974
    %1983 = vmatpush.bf16.xpose.msra.mxu0 %v1971
    %1984 = vmatmul.bf16.gmra.mxu0 %v1965
    %v1985 = vpop.f32.mrf.mxu0
    %v1986 = vadd.f32 0.0, %v1985
    %v1987 = vpop.f32.mrf.mxu0
    %v1988 = vadd.f32 0.0, %v1987
    %1989 = vmatmul.bf16.gmra.mxu0 %v1968
    %v1990 = vpop.f32.mrf.mxu0
    %v1991 = vadd.f32 0.0, %v1990
    %v1992 = vpop.f32.mrf.mxu0
    %v1993 = vadd.f32 0.0, %v1992
    %1994 = vdwg.mxu0
    %v1995 = vmul.f32 %v1986, 0.35355338
    %v1996 = vmul.f32 %v1988, 0.35355338
    %v1997 = vmul.f32 %v1991, 0.35355338
    %v1998 = vmul.f32 %v1993, 0.35355338
    %v1999 = vadd.f32 %v1995, %v1801
    %v2000 = vadd.f32 %v1996, %v1802
    %v2001 = vadd.f32 %v1997, %v1803
    %v2002 = vadd.f32 %v1998, %v1804
    %v2003 = vsel %vm147, %v1999, -inf
    %2004 = vmax.xlane.f32.xlu0 %v2003
    %v2005 = vpop.xlane.xlu0 %2004
    %v2006 = vsel %vm147, %v2000, -inf
    %2007 = vmax.xlane.f32.xlu0 %v2006
    %v2008 = vpop.xlane.xlu0 %2007
    %v2009 = vsel %vm147, %v2001, -inf
    %2010 = vmax.xlane.f32.xlu0 %v2009
    %v2011 = vpop.xlane.xlu0 %2010
    %v2012 = vsel %vm147, %v2002, -inf
    %2013 = vmax.xlane.f32.xlu0 %v2012
    %v2014 = vpop.xlane.xlu0 %2013
    %v2015 = vsub.f32 %v1999, %v2005
    %v2016 = vsub.f32 %v2000, %v2008
    %v2017 = vsub.f32 %v2001, %v2011
    %v2018 = vsub.f32 %v2002, %v2014
    %v2019 = vmul.f32 %v2015, 1.442695
    %v2020 = vpow.pop %v2019
    %v2021 = vmul.f32 %v2016, 1.442695
    %v2022 = vpow.pop %v2021
    %v2023 = vmul.f32 %v2017, 1.442695
    %v2024 = vpow.pop %v2023
    %v2025 = vmul.f32 %v2018, 1.442695
    %v2026 = vpow.pop %v2025
    %v2027 = vsel %vm147, %v2020, 0.0
    %2028 = vadd.xlane.f32.xlu0 %v2027
    %v2029 = vpop.xlane.xlu0 %2028
    %v2030 = vsel %vm147, %v2022, 0.0
    %2031 = vadd.xlane.f32.xlu0 %v2030
    %v2032 = vpop.xlane.xlu0 %2031
    %v2033 = vsel %vm147, %v2024, 0.0
    %2034 = vadd.xlane.f32.xlu0 %v2033
    %v2035 = vpop.xlane.xlu0 %2034
    %v2036 = vsel %vm147, %v2026, 0.0
    %2037 = vadd.xlane.f32.xlu0 %v2036
    %v2038 = vpop.xlane.xlu0 %2037
    %v2039 = vrcp.pop %v2029
    %v2040 = vrcp.pop %v2032
    %v2041 = vrcp.pop %v2035
    %v2042 = vrcp.pop %v2038
    %v2043 = vmul.f32 %v2020, %v2039
    %v2044 = vmul.f32 %v2022, %v2040
    %v2045 = vmul.f32 %v2024, %v2041
    %v2046 = vmul.f32 %v2026, %v2042
    %v2047 = vpack.c.bf16 %v2044, %v2043
    %v2048 = vpack.c.bf16 %v2046, %v2045
    %2049 = vrot.lane.b32.xlu0 %v1955, 64
    %v2050 = vpop.permute.xlu0 %2049
    %2051 = vrot.lane.b32.xlu0 %v1956, 64
    %v2052 = vpop.permute.xlu0 %2051
    %v2056 = vsel %vm147, %v2047, 0
    %v2059 = vsel %vm147, %v2048, 0
    %2061 = vmatpush.bf16.msra.mxu0 0
    %2062 = vmatpush.bf16.msra.mxu0 0
    %2063 = vmatpush.bf16.msra.mxu0 0
    %2064 = vmatpush.bf16.msra.mxu0 0
    %2065 = vmatpush.bf16.msra.mxu0 0
    %2066 = vmatpush.bf16.msra.mxu0 0
    %2067 = vmatpush.bf16.msra.mxu0 %v2052
    %2068 = vmatpush.bf16.msra.mxu0 %v2050
    %2069 = vmatmul.bf16.gmra.mxu0 %v2056
    %v2070 = vpop.f32.mrf.mxu0
    %v2071 = vadd.f32 0.0, %v2070
    %v2072 = vpop.f32.mrf.mxu0
    %v2073 = vadd.f32 0.0, %v2072
    %2074 = vmatmul.bf16.gmra.mxu0 %v2059
    %v2075 = vpop.f32.mrf.mxu0
    %v2076 = vadd.f32 0.0, %v2075
    %v2077 = vpop.f32.mrf.mxu0
    %v2078 = vadd.f32 0.0, %v2077
    %2079 = vdwg.mxu0
    %2080 = vrot.lane.b32.xlu0 %v1955, 120
    %v2081 = vpop.permute.xlu0 %2080
    %2082 = vrot.lane.b32.xlu0 %v1956, 120
    %v2083 = vpop.permute.xlu0 %2082
    %2084 = vrot.lane.b32.xlu0 %v1955, 88
    %v2085 = vpop.permute.xlu0 %2084
    %2086 = vrot.lane.b32.xlu0 %v1956, 88
    %v2087 = vpop.permute.xlu0 %2086
    %v2089 = vsel %vm1963, %v2081, 0
    %v2092 = vsel %vm1963, %v2083, 0
    %v2095 = vsel %vm1963, %v2085, 0
    %v2098 = vsel %vm1963, %v2087, 0
    %2100 = vmatpush.bf16.xpose.msra.mxu0 0
    %2101 = vmatpush.bf16.xpose.msra.mxu0 0
    %2102 = vmatpush.bf16.xpose.msra.mxu0 0
    %2103 = vmatpush.bf16.xpose.msra.mxu0 0
    %2104 = vmatpush.bf16.xpose.msra.mxu0 0
    %2105 = vmatpush.bf16.xpose.msra.mxu0 0
    %2106 = vmatpush.bf16.xpose.msra.mxu0 %v2098
    %2107 = vmatpush.bf16.xpose.msra.mxu0 %v2095
    %2108 = vmatmul.bf16.gmra.mxu0 %v2089
    %v2109 = vpop.f32.mrf.mxu0
    %v2110 = vadd.f32 0.0, %v2109
    %v2111 = vpop.f32.mrf.mxu0
    %v2112 = vadd.f32 0.0, %v2111
    %2113 = vmatmul.bf16.gmra.mxu0 %v2092
    %v2114 = vpop.f32.mrf.mxu0
    %v2115 = vadd.f32 0.0, %v2114
    %v2116 = vpop.f32.mrf.mxu0
    %v2117 = vadd.f32 0.0, %v2116
    %2118 = vdwg.mxu0
    %v2119 = vmul.f32 %v2110, 0.35355338
    %v2120 = vmul.f32 %v2112, 0.35355338
    %v2121 = vmul.f32 %v2115, 0.35355338
    %v2122 = vmul.f32 %v2117, 0.35355338
    %v2123 = vadd.f32 %v2119, %v1801
    %v2124 = vadd.f32 %v2120, %v1802
    %v2125 = vadd.f32 %v2121, %v1803
    %v2126 = vadd.f32 %v2122, %v1804
    %v2127 = vsel %vm147, %v2123, -inf
    %2128 = vmax.xlane.f32.xlu0 %v2127
    %v2129 = vpop.xlane.xlu0 %2128
    %v2130 = vsel %vm147, %v2124, -inf
    %2131 = vmax.xlane.f32.xlu0 %v2130
    %v2132 = vpop.xlane.xlu0 %2131
    %v2133 = vsel %vm147, %v2125, -inf
    %2134 = vmax.xlane.f32.xlu0 %v2133
    %v2135 = vpop.xlane.xlu0 %2134
    %v2136 = vsel %vm147, %v2126, -inf
    %2137 = vmax.xlane.f32.xlu0 %v2136
    %v2138 = vpop.xlane.xlu0 %2137
    %v2139 = vsub.f32 %v2123, %v2129
    %v2140 = vsub.f32 %v2124, %v2132
    %v2141 = vsub.f32 %v2125, %v2135
    %v2142 = vsub.f32 %v2126, %v2138
    %v2143 = vmul.f32 %v2139, 1.442695
    %v2144 = vpow.pop %v2143
    %v2145 = vmul.f32 %v2140, 1.442695
    %v2146 = vpow.pop %v2145
    %v2147 = vmul.f32 %v2141, 1.442695
    %v2148 = vpow.pop %v2147
    %v2149 = vmul.f32 %v2142, 1.442695
    %v2150 = vpow.pop %v2149
    %v2151 = vsel %vm147, %v2144, 0.0
    %2152 = vadd.xlane.f32.xlu0 %v2151
    %v2153 = vpop.xlane.xlu0 %2152
    %v2154 = vsel %vm147, %v2146, 0.0
    %2155 = vadd.xlane.f32.xlu0 %v2154
    %v2156 = vpop.xlane.xlu0 %2155
    %v2157 = vsel %vm147, %v2148, 0.0
    %2158 = vadd.xlane.f32.xlu0 %v2157
    %v2159 = vpop.xlane.xlu0 %2158
    %v2160 = vsel %vm147, %v2150, 0.0
    %2161 = vadd.xlane.f32.xlu0 %v2160
    %v2162 = vpop.xlane.xlu0 %2161
    %v2163 = vrcp.pop %v2153
    %v2164 = vrcp.pop %v2156
    %v2165 = vrcp.pop %v2159
    %v2166 = vrcp.pop %v2162
    %v2167 = vmul.f32 %v2144, %v2163
    %v2168 = vmul.f32 %v2146, %v2164
    %v2169 = vmul.f32 %v2148, %v2165
    %v2170 = vmul.f32 %v2150, %v2166
    %v2171 = vpack.c.bf16 %v2168, %v2167
    %v2172 = vpack.c.bf16 %v2170, %v2169
    %2173 = vrot.lane.b32.xlu0 %v1955, 56
    %v2174 = vpop.permute.xlu0 %2173
    %2175 = vrot.lane.b32.xlu0 %v1956, 56
    %v2176 = vpop.permute.xlu0 %2175
    %v2180 = vsel %vm147, %v2171, 0
    %v2183 = vsel %vm147, %v2172, 0
    %2185 = vmatpush.bf16.msra.mxu0 0
    %2186 = vmatpush.bf16.msra.mxu0 0
    %2187 = vmatpush.bf16.msra.mxu0 0
    %2188 = vmatpush.bf16.msra.mxu0 0
    %2189 = vmatpush.bf16.msra.mxu0 0
    %2190 = vmatpush.bf16.msra.mxu0 0
    %2191 = vmatpush.bf16.msra.mxu0 %v2176
    %2192 = vmatpush.bf16.msra.mxu0 %v2174
    %2193 = vmatmul.bf16.gmra.mxu0 %v2180
    %v2194 = vpop.f32.mrf.mxu0
    %v2195 = vadd.f32 0.0, %v2194
    %v2196 = vpop.f32.mrf.mxu0
    %v2197 = vadd.f32 0.0, %v2196
    %2198 = vmatmul.bf16.gmra.mxu0 %v2183
    %v2199 = vpop.f32.mrf.mxu0
    %v2200 = vadd.f32 0.0, %v2199
    %v2201 = vpop.f32.mrf.mxu0
    %v2202 = vadd.f32 0.0, %v2201
    %2203 = vdwg.mxu0
    %2204 = vrot.lane.b32.xlu0 %v1955, 112
    %v2205 = vpop.permute.xlu0 %2204
    %2206 = vrot.lane.b32.xlu0 %v1956, 112
    %v2207 = vpop.permute.xlu0 %2206
    %2208 = vrot.lane.b32.xlu0 %v1955, 80
    %v2209 = vpop.permute.xlu0 %2208
    %2210 = vrot.lane.b32.xlu0 %v1956, 80
    %v2211 = vpop.permute.xlu0 %2210
    %v2213 = vsel %vm1963, %v2205, 0
    %v2216 = vsel %vm1963, %v2207, 0
    %v2219 = vsel %vm1963, %v2209, 0
    %v2222 = vsel %vm1963, %v2211, 0
    %2224 = vmatpush.bf16.xpose.msra.mxu0 0
    %2225 = vmatpush.bf16.xpose.msra.mxu0 0
    %2226 = vmatpush.bf16.xpose.msra.mxu0 0
    %2227 = vmatpush.bf16.xpose.msra.mxu0 0
    %2228 = vmatpush.bf16.xpose.msra.mxu0 0
    %2229 = vmatpush.bf16.xpose.msra.mxu0 0
    %2230 = vmatpush.bf16.xpose.msra.mxu0 %v2222
    %2231 = vmatpush.bf16.xpose.msra.mxu0 %v2219
    %2232 = vmatmul.bf16.gmra.mxu0 %v2213
    %v2233 = vpop.f32.mrf.mxu0
    %v2234 = vadd.f32 0.0, %v2233
    %v2235 = vpop.f32.mrf.mxu0
    %v2236 = vadd.f32 0.0, %v2235
    %2237 = vmatmul.bf16.gmra.mxu0 %v2216
    %v2238 = vpop.f32.mrf.mxu0
    %v2239 = vadd.f32 0.0, %v2238
    %v2240 = vpop.f32.mrf.mxu0
    %v2241 = vadd.f32 0.0, %v2240
    %2242 = vdwg.mxu0
    %v2243 = vmul.f32 %v2234, 0.35355338
    %v2244 = vmul.f32 %v2236, 0.35355338
    %v2245 = vmul.f32 %v2239, 0.35355338
    %v2246 = vmul.f32 %v2241, 0.35355338
    %v2247 = vadd.f32 %v2243, %v1801
    %v2248 = vadd.f32 %v2244, %v1802
    %v2249 = vadd.f32 %v2245, %v1803
    %v2250 = vadd.f32 %v2246, %v1804
    %v2251 = vsel %vm147, %v2247, -inf
    %2252 = vmax.xlane.f32.xlu0 %v2251
    %v2253 = vpop.xlane.xlu0 %2252
    %v2254 = vsel %vm147, %v2248, -inf
    %2255 = vmax.xlane.f32.xlu0 %v2254
    %v2256 = vpop.xlane.xlu0 %2255
    %v2257 = vsel %vm147, %v2249, -inf
    %2258 = vmax.xlane.f32.xlu0 %v2257
    %v2259 = vpop.xlane.xlu0 %2258
    %v2260 = vsel %vm147, %v2250, -inf
    %2261 = vmax.xlane.f32.xlu0 %v2260
    %v2262 = vpop.xlane.xlu0 %2261
    %v2263 = vsub.f32 %v2247, %v2253
    %v2264 = vsub.f32 %v2248, %v2256
    %v2265 = vsub.f32 %v2249, %v2259
    %v2266 = vsub.f32 %v2250, %v2262
    %v2267 = vmul.f32 %v2263, 1.442695
    %v2268 = vpow.pop %v2267
    %v2269 = vmul.f32 %v2264, 1.442695
    %v2270 = vpow.pop %v2269
    %v2271 = vmul.f32 %v2265, 1.442695
    %v2272 = vpow.pop %v2271
    %v2273 = vmul.f32 %v2266, 1.442695
    %v2274 = vpow.pop %v2273
    %v2275 = vsel %vm147, %v2268, 0.0
    %2276 = vadd.xlane.f32.xlu0 %v2275
    %v2277 = vpop.xlane.xlu0 %2276
    %v2278 = vsel %vm147, %v2270, 0.0
    %2279 = vadd.xlane.f32.xlu0 %v2278
    %v2280 = vpop.xlane.xlu0 %2279
    %v2281 = vsel %vm147, %v2272, 0.0
    %2282 = vadd.xlane.f32.xlu0 %v2281
    %v2283 = vpop.xlane.xlu0 %2282
    %v2284 = vsel %vm147, %v2274, 0.0
    %2285 = vadd.xlane.f32.xlu0 %v2284
    %v2286 = vpop.xlane.xlu0 %2285
    %v2287 = vrcp.pop %v2277
    %v2288 = vrcp.pop %v2280
    %v2289 = vrcp.pop %v2283
    %v2290 = vrcp.pop %v2286
    %v2291 = vmul.f32 %v2268, %v2287
    %v2292 = vmul.f32 %v2270, %v2288
    %v2293 = vmul.f32 %v2272, %v2289
    %v2294 = vmul.f32 %v2274, %v2290
    %v2295 = vpack.c.bf16 %v2292, %v2291
    %v2296 = vpack.c.bf16 %v2294, %v2293
    %2297 = vrot.lane.b32.xlu0 %v1955, 48
    %v2298 = vpop.permute.xlu0 %2297
    %2299 = vrot.lane.b32.xlu0 %v1956, 48
    %v2300 = vpop.permute.xlu0 %2299
    %v2304 = vsel %vm147, %v2295, 0
    %v2307 = vsel %vm147, %v2296, 0
    %2309 = vmatpush.bf16.msra.mxu0 0
    %2310 = vmatpush.bf16.msra.mxu0 0
    %2311 = vmatpush.bf16.msra.mxu0 0
    %2312 = vmatpush.bf16.msra.mxu0 0
    %2313 = vmatpush.bf16.msra.mxu0 0
    %2314 = vmatpush.bf16.msra.mxu0 0
    %2315 = vmatpush.bf16.msra.mxu0 %v2300
    %2316 = vmatpush.bf16.msra.mxu0 %v2298
    %2317 = vmatmul.bf16.gmra.mxu0 %v2304
    %v2318 = vpop.f32.mrf.mxu0
    %v2319 = vadd.f32 0.0, %v2318
    %v2320 = vpop.f32.mrf.mxu0
    %v2321 = vadd.f32 0.0, %v2320
    %2322 = vmatmul.bf16.gmra.mxu0 %v2307
    %v2323 = vpop.f32.mrf.mxu0
    %v2324 = vadd.f32 0.0, %v2323
    %v2325 = vpop.f32.mrf.mxu0
    %v2326 = vadd.f32 0.0, %v2325
    %2327 = vdwg.mxu0
    %2328 = vrot.lane.b32.xlu0 %v1955, 104
    %v2329 = vpop.permute.xlu0 %2328
    %2330 = vrot.lane.b32.xlu0 %v1956, 104
    %v2331 = vpop.permute.xlu0 %2330
    %2332 = vrot.lane.b32.xlu0 %v1955, 72
    %v2333 = vpop.permute.xlu0 %2332
    %2334 = vrot.lane.b32.xlu0 %v1956, 72
    %v2335 = vpop.permute.xlu0 %2334
    %v2337 = vsel %vm1963, %v2329, 0
    %v2340 = vsel %vm1963, %v2331, 0
    %v2343 = vsel %vm1963, %v2333, 0
    %v2346 = vsel %vm1963, %v2335, 0
    %2348 = vmatpush.bf16.xpose.msra.mxu0 0
    %2349 = vmatpush.bf16.xpose.msra.mxu0 0
    %2350 = vmatpush.bf16.xpose.msra.mxu0 0
    %2351 = vmatpush.bf16.xpose.msra.mxu0 0
    %2352 = vmatpush.bf16.xpose.msra.mxu0 0
    %2353 = vmatpush.bf16.xpose.msra.mxu0 0
    %2354 = vmatpush.bf16.xpose.msra.mxu0 %v2346
    %2355 = vmatpush.bf16.xpose.msra.mxu0 %v2343
    %2356 = vmatmul.bf16.gmra.mxu0 %v2337
    %v2357 = vpop.f32.mrf.mxu0
    %v2358 = vadd.f32 0.0, %v2357
    %v2359 = vpop.f32.mrf.mxu0
    %v2360 = vadd.f32 0.0, %v2359
    %2361 = vmatmul.bf16.gmra.mxu0 %v2340
    %v2362 = vpop.f32.mrf.mxu0
    %v2363 = vadd.f32 0.0, %v2362
    %v2364 = vpop.f32.mrf.mxu0
    %v2365 = vadd.f32 0.0, %v2364
    %2366 = vdwg.mxu0
    %v2367 = vmul.f32 %v2358, 0.35355338
    %v2368 = vmul.f32 %v2360, 0.35355338
    %v2369 = vmul.f32 %v2363, 0.35355338
    %v2370 = vmul.f32 %v2365, 0.35355338
    %v2371 = vadd.f32 %v2367, %v1801
    %v2372 = vadd.f32 %v2368, %v1802
    %v2373 = vadd.f32 %v2369, %v1803
    %v2374 = vadd.f32 %v2370, %v1804
    %v2375 = vsel %vm147, %v2371, -inf
    %2376 = vmax.xlane.f32.xlu0 %v2375
    %v2377 = vpop.xlane.xlu0 %2376
    %v2378 = vsel %vm147, %v2372, -inf
    %2379 = vmax.xlane.f32.xlu0 %v2378
    %v2380 = vpop.xlane.xlu0 %2379
    %v2381 = vsel %vm147, %v2373, -inf
    %2382 = vmax.xlane.f32.xlu0 %v2381
    %v2383 = vpop.xlane.xlu0 %2382
    %v2384 = vsel %vm147, %v2374, -inf
    %2385 = vmax.xlane.f32.xlu0 %v2384
    %v2386 = vpop.xlane.xlu0 %2385
    %v2387 = vsub.f32 %v2371, %v2377
    %v2388 = vsub.f32 %v2372, %v2380
    %v2389 = vsub.f32 %v2373, %v2383
    %v2390 = vsub.f32 %v2374, %v2386
    %v2391 = vmul.f32 %v2387, 1.442695
    %v2392 = vpow.pop %v2391
    %v2393 = vmul.f32 %v2388, 1.442695
    %v2394 = vpow.pop %v2393
    %v2395 = vmul.f32 %v2389, 1.442695
    %v2396 = vpow.pop %v2395
    %v2397 = vmul.f32 %v2390, 1.442695
    %v2398 = vpow.pop %v2397
    %v2399 = vsel %vm147, %v2392, 0.0
    %2400 = vadd.xlane.f32.xlu0 %v2399
    %v2401 = vpop.xlane.xlu0 %2400
    %v2402 = vsel %vm147, %v2394, 0.0
    %2403 = vadd.xlane.f32.xlu0 %v2402
    %v2404 = vpop.xlane.xlu0 %2403
    %v2405 = vsel %vm147, %v2396, 0.0
    %2406 = vadd.xlane.f32.xlu0 %v2405
    %v2407 = vpop.xlane.xlu0 %2406
    %v2408 = vsel %vm147, %v2398, 0.0
    %2409 = vadd.xlane.f32.xlu0 %v2408
    %v2410 = vpop.xlane.xlu0 %2409
    %v2411 = vrcp.pop %v2401
    %v2412 = vrcp.pop %v2404
    %v2413 = vrcp.pop %v2407
    %v2414 = vrcp.pop %v2410
    %v2415 = vmul.f32 %v2392, %v2411
    %v2416 = vmul.f32 %v2394, %v2412
    %v2417 = vmul.f32 %v2396, %v2413
    %v2418 = vmul.f32 %v2398, %v2414
    %v2419 = vpack.c.bf16 %v2416, %v2415
    %v2420 = vpack.c.bf16 %v2418, %v2417
    %2421 = vrot.lane.b32.xlu0 %v1955, 40
    %v2422 = vpop.permute.xlu0 %2421
    %2423 = vrot.lane.b32.xlu0 %v1956, 40
    %v2424 = vpop.permute.xlu0 %2423
    %v2428 = vsel %vm147, %v2419, 0
    %v2431 = vsel %vm147, %v2420, 0
    %2433 = vmatpush.bf16.msra.mxu0 0
    %2434 = vmatpush.bf16.msra.mxu0 0
    %2435 = vmatpush.bf16.msra.mxu0 0
    %2436 = vmatpush.bf16.msra.mxu0 0
    %2437 = vmatpush.bf16.msra.mxu0 0
    %2438 = vmatpush.bf16.msra.mxu0 0
    %2439 = vmatpush.bf16.msra.mxu0 %v2424
    %2440 = vmatpush.bf16.msra.mxu0 %v2422
    %2441 = vmatmul.bf16.gmra.mxu0 %v2428
    %v2442 = vpop.f32.mrf.mxu0
    %v2443 = vadd.f32 0.0, %v2442
    %v2444 = vpop.f32.mrf.mxu0
    %v2445 = vadd.f32 0.0, %v2444
    %2446 = vmatmul.bf16.gmra.mxu0 %v2431
    %v2447 = vpop.f32.mrf.mxu0
    %v2448 = vadd.f32 0.0, %v2447
    %v2449 = vpop.f32.mrf.mxu0
    %v2450 = vadd.f32 0.0, %v2449
    %2451 = vdwg.mxu0
    %2456 = vrot.lane.b32.xlu0 %v2195, 8
    %v2457 = vpop.permute.xlu0 %2456
    %2458 = vrot.lane.b32.xlu0 %v2197, 8
    %v2459 = vpop.permute.xlu0 %2458
    %2460 = vrot.lane.b32.xlu0 %v2200, 8
    %v2461 = vpop.permute.xlu0 %2460
    %2462 = vrot.lane.b32.xlu0 %v2202, 8
    %v2463 = vpop.permute.xlu0 %2462
    %2472 = vrot.lane.b32.xlu0 %v2319, 16
    %v2473 = vpop.permute.xlu0 %2472
    %2474 = vrot.lane.b32.xlu0 %v2321, 16
    %v2475 = vpop.permute.xlu0 %2474
    %2476 = vrot.lane.b32.xlu0 %v2324, 16
    %v2477 = vpop.permute.xlu0 %2476
    %2478 = vrot.lane.b32.xlu0 %v2326, 16
    %v2479 = vpop.permute.xlu0 %2478
    %2488 = vrot.lane.b32.xlu0 %v2443, 24
    %v2489 = vpop.permute.xlu0 %2488
    %2490 = vrot.lane.b32.xlu0 %v2445, 24
    %v2491 = vpop.permute.xlu0 %2490
    %2492 = vrot.lane.b32.xlu0 %v2448, 24
    %v2493 = vpop.permute.xlu0 %2492
    %2494 = vrot.lane.b32.xlu0 %v2450, 24
    %v2495 = vpop.permute.xlu0 %2494
    %v2500 = vsel %vm1963, %v2071, %v2457
    %v2501 = vsel %vm1963, %v2073, %v2459
    %v2502 = vsel %vm1963, %v2076, %v2461
    %v2503 = vsel %vm1963, %v2078, %v2463
    %vm2504 = vcmask 130048
    %v2505 = vsel %vm2504, %v2500, %v2473
    %v2506 = vsel %vm2504, %v2501, %v2475
    %v2507 = vsel %vm2504, %v2502, %v2477
    %v2508 = vsel %vm2504, %v2503, %v2479
    %vm2509 = vcmask 195584
    %v2510 = vsel %vm2509, %v2505, %v2489
    %v2511 = vsel %vm2509, %v2506, %v2491
    %v2512 = vsel %vm2509, %v2507, %v2493
    %v2513 = vsel %vm2509, %v2508, %v2495
    %v2514 = vpack.c.bf16 %v2511, %v2510
    %v2515 = vpack.c.bf16 %v2513, %v2512
    %v2516 = vld [vmem:[%s11] sm:$0xf]
    %v2517 = vld [vmem:[%s11 + $0x4] sm:$0xf]
    %v2518 = vld [vmem:[%s11 + $0x8] sm:$0xf]
    %v2519 = vld [vmem:[%s11 + $0xc] sm:$0xf]
    %v2524 = vunpack.c.l.b16 %v2516
    %v2525 = vunpack.c.l.b16 %v2517
    %v2526 = vunpack.c.l.b16 %v2518
    %v2527 = vunpack.c.l.b16 %v2519
    %v2528 = vpack.c.b16 %v2525, %v2524
    %v2529 = vpack.c.b16 %v2527, %v2526
    %v2533 = vsel %vm147, %v2514, 0
    %v2536 = vsel %vm147, %v2515, 0
    %2538 = vmatpush.bf16.msra.mxu0 0
    %2539 = vmatpush.bf16.msra.mxu0 0
    %2540 = vmatpush.bf16.msra.mxu0 0
    %2541 = vmatpush.bf16.msra.mxu0 0
    %2542 = vmatpush.bf16.msra.mxu0 0
    %2543 = vmatpush.bf16.msra.mxu0 0
    %2544 = vmatpush.bf16.msra.mxu0 %v2529
    %2545 = vmatpush.bf16.msra.mxu0 %v2528
    %2546 = vmatmul.bf16.gmra.mxu0 %v2533
    %v2547 = vpop.f32.mrf.mxu0
    %v2548 = vadd.f32 0.0, %v2547
    %v2549 = vpop.f32.mrf.mxu0
    %v2550 = vadd.f32 0.0, %v2549
    %2551 = vmatmul.bf16.gmra.mxu0 %v2536
    %v2552 = vpop.f32.mrf.mxu0
    %v2553 = vadd.f32 0.0, %v2552
    %v2554 = vpop.f32.mrf.mxu0
    %v2555 = vadd.f32 0.0, %v2554
    %2556 = vdwg.mxu0
    %v2557 = vadd.f32 %v1792, %v2548
    %v2558 = vadd.f32 %v1794, %v2550
    %v2559 = vadd.f32 %v1797, %v2553
    %v2560 = vadd.f32 %v1799, %v2555
    %v2561 = vperm.slane %v1805, 3
    %v2562 = vadd.f32 %v2557, %v2561
    %v2563 = vadd.f32 %v2558, %v2561
    %v2564 = vadd.f32 %v2559, %v2561
    %v2565 = vadd.f32 %v2560, %v2561
    %v2566 = vsel %vm147, %v2562, 0.0
    %2567 = vadd.xlane.f32.xlu0 %v2566
    %v2568 = vpop.xlane.xlu0 %2567
    %v2569 = vsel %vm147, %v2563, 0.0
    %2570 = vadd.xlane.f32.xlu0 %v2569
    %v2571 = vpop.xlane.xlu0 %2570
    %v2572 = vsel %vm147, %v2564, 0.0
    %2573 = vadd.xlane.f32.xlu0 %v2572
    %v2574 = vpop.xlane.xlu0 %2573
    %v2575 = vsel %vm147, %v2565, 0.0
    %2576 = vadd.xlane.f32.xlu0 %v2575
    %v2577 = vpop.xlane.xlu0 %2576
    %v2578 = vmul.f32 %v2568, %v1824
    %v2579 = vmul.f32 %v2571, %v1824
    %v2580 = vmul.f32 %v2574, %v1824
    %v2581 = vmul.f32 %v2577, %v1824
    %v2582 = vsub.f32 %v2562, %v2578
    %v2583 = vsub.f32 %v2563, %v2579
    %v2584 = vsub.f32 %v2564, %v2580
    %v2585 = vsub.f32 %v2565, %v2581
    %v2586 = vmul.f32 %v2582, %v2582
    %v2587 = vmul.f32 %v2583, %v2583
    %v2588 = vmul.f32 %v2584, %v2584
    %v2589 = vmul.f32 %v2585, %v2585
    %v2590 = vsel %vm147, %v2586, 0.0
    %2591 = vadd.xlane.f32.xlu0 %v2590
    %v2592 = vpop.xlane.xlu0 %2591
    %v2593 = vsel %vm147, %v2587, 0.0
    %2594 = vadd.xlane.f32.xlu0 %v2593
    %v2595 = vpop.xlane.xlu0 %2594
    %v2596 = vsel %vm147, %v2588, 0.0
    %2597 = vadd.xlane.f32.xlu0 %v2596
    %v2598 = vpop.xlane.xlu0 %2597
    %v2599 = vsel %vm147, %v2589, 0.0
    %2600 = vadd.xlane.f32.xlu0 %v2599
    %v2601 = vpop.xlane.xlu0 %2600
    %v2602 = vmul.f32 %v2592, %v1824
    %v2603 = vmul.f32 %v2595, %v1824
    %v2604 = vmul.f32 %v2598, %v1824
    %v2605 = vmul.f32 %v2601, %v1824
    %v2606 = vadd.f32 %v2602, 1e-05
    %v2607 = vadd.f32 %v2603, 1e-05
    %v2608 = vadd.f32 %v2604, 1e-05
    %v2609 = vadd.f32 %v2605, 1e-05
    %v2610 = vrsqrt.pop %v2606
    %v2611 = vmul.f32 %v2610, %v2606
    %v2612 = vmul.f32 %v2611, %v2610
    %v2613 = vmul.f32 0.5, %v2612
    %v2614 = vsub.f32 1.5, %v2613
    %v2615 = vmul.f32 %v2610, %v2614
    %vm2616 = vweird.f32 %v2606
    %vm2617 = vweird.f32 %v2610
    %vm2618 = vmor %vm2616, %vm2617
    %v2619 = vsel %vm2618, %v2610, %v2615
    %v2620 = vrsqrt.pop %v2607
    %v2621 = vmul.f32 %v2620, %v2607
    %v2622 = vmul.f32 %v2621, %v2620
    %v2623 = vmul.f32 0.5, %v2622
    %v2624 = vsub.f32 1.5, %v2623
    %v2625 = vmul.f32 %v2620, %v2624
    %vm2626 = vweird.f32 %v2607
    %vm2627 = vweird.f32 %v2620
    %vm2628 = vmor %vm2626, %vm2627
    %v2629 = vsel %vm2628, %v2620, %v2625
    %v2630 = vrsqrt.pop %v2608
    %v2631 = vmul.f32 %v2630, %v2608
    %v2632 = vmul.f32 %v2631, %v2630
    %v2633 = vmul.f32 0.5, %v2632
    %v2634 = vsub.f32 1.5, %v2633
    %v2635 = vmul.f32 %v2630, %v2634
    %vm2636 = vweird.f32 %v2608
    %vm2637 = vweird.f32 %v2630
    %vm2638 = vmor %vm2636, %vm2637
    %v2639 = vsel %vm2638, %v2630, %v2635
    %v2640 = vrsqrt.pop %v2609
    %v2641 = vmul.f32 %v2640, %v2609
    %v2642 = vmul.f32 %v2641, %v2640
    %v2643 = vmul.f32 0.5, %v2642
    %v2644 = vsub.f32 1.5, %v2643
    %v2645 = vmul.f32 %v2640, %v2644
    %vm2646 = vweird.f32 %v2609
    %vm2647 = vweird.f32 %v2640
    %vm2648 = vmor %vm2646, %vm2647
    %v2649 = vsel %vm2648, %v2640, %v2645
    %v2650 = vmul.f32 %v2582, %v2619
    %v2651 = vmul.f32 %v2583, %v2629
    %v2652 = vmul.f32 %v2584, %v2639
    %v2653 = vmul.f32 %v2585, %v2649
    %v2654 = vperm.slane %v1805, 4
    %v2655 = vmul.f32 %v2650, %v2654
    %v2656 = vmul.f32 %v2651, %v2654
    %v2657 = vmul.f32 %v2652, %v2654
    %v2658 = vmul.f32 %v2653, %v2654
    %v2659 = vperm.slane %v1805, 5
    %v2660 = vadd.f32 %v2655, %v2659
    %v2661 = vadd.f32 %v2656, %v2659
    %v2662 = vadd.f32 %v2657, %v2659
    %v2663 = vadd.f32 %v2658, %v2659
    %v2664 = vpack.c.bf16 %v2661, %v2660
    %v2665 = vpack.c.bf16 %v2663, %v2662
    %v2666 = vld [vmem:[%s12] sm:$0xf]
    %v2667 = vld [vmem:[%s12 + $0x4] sm:$0xf]
    %v2668 = vld [vmem:[%s12 + $0x8] sm:$0xf]
    %v2669 = vld [vmem:[%s12 + $0xc] sm:$0xf]
    %v2670 = vperm.slane %v1805, 6
    %v2675 = vunpack.c.l.b16 %v2666
    %v2676 = vunpack.c.l.b16 %v2667
    %v2677 = vunpack.c.l.b16 %v2668
    %v2678 = vunpack.c.l.b16 %v2669
    %v2679 = vpack.c.b16 %v2676, %v2675
    %v2680 = vpack.c.b16 %v2678, %v2677
    %v2684 = vsel %vm147, %v2664, 0
    %v2687 = vsel %vm147, %v2665, 0
    %2689 = vmatpush.bf16.msra.mxu0 0
    %2690 = vmatpush.bf16.msra.mxu0 0
    %2691 = vmatpush.bf16.msra.mxu0 0
    %2692 = vmatpush.bf16.msra.mxu0 0
    %2693 = vmatpush.bf16.msra.mxu0 0
    %2694 = vmatpush.bf16.msra.mxu0 0
    %2695 = vmatpush.bf16.msra.mxu0 %v2680
    %2696 = vmatpush.bf16.msra.mxu0 %v2679
    %2697 = vmatmul.bf16.gmra.mxu0 %v2684
    %v2698 = vpop.f32.mrf.mxu0
    %v2699 = vadd.f32 %v2670, %v2698
    %v2700 = vpop.f32.mrf.mxu0
    %v2701 = vadd.f32 %v2670, %v2700
    %2702 = vmatmul.bf16.gmra.mxu0 %v2687
    %v2703 = vpop.f32.mrf.mxu0
    %v2704 = vadd.f32 %v2670, %v2703
    %v2705 = vpop.f32.mrf.mxu0
    %v2706 = vadd.f32 %v2670, %v2705
    %2707 = vdwg.mxu0
    %v2708 = vmul.f32 %v2699, %v2699
    %v2709 = vmul.f32 %v2701, %v2701
    %v2710 = vmul.f32 %v2704, %v2704
    %v2711 = vmul.f32 %v2706, %v2706
    %v2712 = vmul.f32 %v2699, %v2708
    %v2713 = vmul.f32 %v2701, %v2709
    %v2714 = vmul.f32 %v2704, %v2710
    %v2715 = vmul.f32 %v2706, %v2711
    %v2716 = vmul.f32 %v2712, 0.044715
    %v2717 = vmul.f32 %v2713, 0.044715
    %v2718 = vmul.f32 %v2714, 0.044715
    %v2719 = vmul.f32 %v2715, 0.044715
    %v2720 = vadd.f32 %v2699, %v2716
    %v2721 = vadd.f32 %v2701, %v2717
    %v2722 = vadd.f32 %v2704, %v2718
    %v2723 = vadd.f32 %v2706, %v2719
    %v2724 = vmul.f32 %v2720, 0.7978846
    %v2725 = vmul.f32 %v2721, 0.7978846
    %v2726 = vmul.f32 %v2722, 0.7978846
    %v2727 = vmul.f32 %v2723, 0.7978846
    %v2728 = vtanh.pop %v2724
    %v2729 = vtanh.pop %v2725
    %v2730 = vtanh.pop %v2726
    %v2731 = vtanh.pop %v2727
    %v2732 = vadd.f32 %v2728, 1.0
    %v2733 = vadd.f32 %v2729, 1.0
    %v2734 = vadd.f32 %v2730, 1.0
    %v2735 = vadd.f32 %v2731, 1.0
    %v2736 = vmul.f32 %v2732, 0.5
    %v2737 = vmul.f32 %v2733, 0.5
    %v2738 = vmul.f32 %v2734, 0.5
    %v2739 = vmul.f32 %v2735, 0.5
    %v2740 = vmul.f32 %v2699, %v2736
    %v2741 = vmul.f32 %v2701, %v2737
    %v2742 = vmul.f32 %v2704, %v2738
    %v2743 = vmul.f32 %v2706, %v2739
    %v2744 = vpack.c.bf16 %v2741, %v2740
    %v2745 = vpack.c.bf16 %v2743, %v2742
    %v2746 = vld [vmem:[%s13] sm:$0xf]
    %v2747 = vld [vmem:[%s13 + $0x4] sm:$0xf]
    %v2748 = vld [vmem:[%s13 + $0x8] sm:$0xf]
    %v2749 = vld [vmem:[%s13 + $0xc] sm:$0xf]
    %v2750 = vld [vmem:[%s13 + $0x10] sm:$0xf]
    %v2751 = vld [vmem:[%s13 + $0x14] sm:$0xf]
    %v2752 = vld [vmem:[%s13 + $0x18] sm:$0xf]
    %v2753 = vld [vmem:[%s13 + $0x1c] sm:$0xf]
    %v2754 = vld [vmem:[%s13 + $0x20] sm:$0xf]
    %v2755 = vld [vmem:[%s13 + $0x24] sm:$0xf]
    %v2756 = vld [vmem:[%s13 + $0x28] sm:$0xf]
    %v2757 = vld [vmem:[%s13 + $0x2c] sm:$0xf]
    %v2758 = vld [vmem:[%s13 + $0x30] sm:$0xf]
    %v2759 = vld [vmem:[%s13 + $0x34] sm:$0xf]
    %v2760 = vld [vmem:[%s13 + $0x38] sm:$0xf]
    %v2761 = vld [vmem:[%s13 + $0x3c] sm:$0xf]
    %v2778 = vunpack.c.l.b16 %v2746
    %v2779 = vunpack.c.l.b16 %v2747
    %v2780 = vunpack.c.l.b16 %v2748
    %v2781 = vunpack.c.l.b16 %v2749
    %v2782 = vunpack.c.l.b16 %v2750
    %v2783 = vunpack.c.l.b16 %v2751
    %v2784 = vunpack.c.l.b16 %v2752
    %v2785 = vunpack.c.l.b16 %v2753
    %v2786 = vunpack.c.l.b16 %v2754
    %v2787 = vunpack.c.l.b16 %v2755
    %v2788 = vunpack.c.l.b16 %v2756
    %v2789 = vunpack.c.l.b16 %v2757
    %v2790 = vunpack.c.l.b16 %v2758
    %v2791 = vunpack.c.l.b16 %v2759
    %v2792 = vunpack.c.l.b16 %v2760
    %v2793 = vunpack.c.l.b16 %v2761
    %v2794 = vpack.c.b16 %v2779, %v2778
    %v2795 = vpack.c.b16 %v2781, %v2780
    %v2796 = vpack.c.b16 %v2783, %v2782
    %v2797 = vpack.c.b16 %v2785, %v2784
    %v2798 = vpack.c.b16 %v2787, %v2786
    %v2799 = vpack.c.b16 %v2789, %v2788
    %v2800 = vpack.c.b16 %v2791, %v2790
    %v2801 = vpack.c.b16 %v2793, %v2792
    %2810 = vmatpush.bf16.msra.mxu0 %v2801
    %2811 = vmatpush.bf16.msra.mxu0 %v2800
    %2812 = vmatpush.bf16.msra.mxu0 %v2799
    %2813 = vmatpush.bf16.msra.mxu0 %v2798
    %2814 = vmatpush.bf16.msra.mxu0 %v2797
    %2815 = vmatpush.bf16.msra.mxu0 %v2796
    %2816 = vmatpush.bf16.msra.mxu0 %v2795
    %2817 = vmatpush.bf16.msra.mxu0 %v2794
    %2818 = vmatmul.bf16.gmra.mxu0 %v2744
    %v2819 = vpop.f32.mrf.mxu0
    %v2820 = vadd.f32 0.0, %v2819
    %v2821 = vpop.f32.mrf.mxu0
    %v2822 = vadd.f32 0.0, %v2821
    %2823 = vmatmul.bf16.gmra.mxu0 %v2745
    %v2824 = vpop.f32.mrf.mxu0
    %v2825 = vadd.f32 0.0, %v2824
    %v2826 = vpop.f32.mrf.mxu0
    %v2827 = vadd.f32 0.0, %v2826
    %2828 = vdwg.mxu0
    %v2829 = vadd.f32 %v2562, %v2820
    %v2830 = vadd.f32 %v2563, %v2822
    %v2831 = vadd.f32 %v2564, %v2825
    %v2832 = vadd.f32 %v2565, %v2827
    %v2833 = vperm.slane %v1805, 7
    %v2834 = vadd.f32 %v2829, %v2833
    %v2835 = vadd.f32 %v2830, %v2833
    %v2836 = vadd.f32 %v2831, %v2833
    %v2837 = vadd.f32 %v2832, %v2833
    %s2838 = scalar_lea.vmem %s14, 8
    %v2839 = vld [vmem:[%s2838] sm:$0xff]
    %v2840 = vsel %vm147, %v2834, 0.0
    %2841 = vadd.xlane.f32.xlu0 %v2840
    %v2842 = vpop.xlane.xlu0 %2841
    %v2843 = vsel %vm147, %v2835, 0.0
    %2844 = vadd.xlane.f32.xlu0 %v2843
    %v2845 = vpop.xlane.xlu0 %2844
    %v2846 = vsel %vm147, %v2836, 0.0
    %2847 = vadd.xlane.f32.xlu0 %v2846
    %v2848 = vpop.xlane.xlu0 %2847
    %v2849 = vsel %vm147, %v2837, 0.0
    %2850 = vadd.xlane.f32.xlu0 %v2849
    %v2851 = vpop.xlane.xlu0 %2850
    %v2852 = vmul.f32 %v2842, %v1824
    %v2853 = vmul.f32 %v2845, %v1824
    %v2854 = vmul.f32 %v2848, %v1824
    %v2855 = vmul.f32 %v2851, %v1824
    %v2856 = vsub.f32 %v2834, %v2852
    %v2857 = vsub.f32 %v2835, %v2853
    %v2858 = vsub.f32 %v2836, %v2854
    %v2859 = vsub.f32 %v2837, %v2855
    %v2860 = vmul.f32 %v2856, %v2856
    %v2861 = vmul.f32 %v2857, %v2857
    %v2862 = vmul.f32 %v2858, %v2858
    %v2863 = vmul.f32 %v2859, %v2859
    %v2864 = vsel %vm147, %v2860, 0.0
    %2865 = vadd.xlane.f32.xlu0 %v2864
    %v2866 = vpop.xlane.xlu0 %2865
    %v2867 = vsel %vm147, %v2861, 0.0
    %2868 = vadd.xlane.f32.xlu0 %v2867
    %v2869 = vpop.xlane.xlu0 %2868
    %v2870 = vsel %vm147, %v2862, 0.0
    %2871 = vadd.xlane.f32.xlu0 %v2870
    %v2872 = vpop.xlane.xlu0 %2871
    %v2873 = vsel %vm147, %v2863, 0.0
    %2874 = vadd.xlane.f32.xlu0 %v2873
    %v2875 = vpop.xlane.xlu0 %2874
    %v2876 = vmul.f32 %v2866, %v1824
    %v2877 = vmul.f32 %v2869, %v1824
    %v2878 = vmul.f32 %v2872, %v1824
    %v2879 = vmul.f32 %v2875, %v1824
    %v2880 = vadd.f32 %v2876, 1e-05
    %v2881 = vadd.f32 %v2877, 1e-05
    %v2882 = vadd.f32 %v2878, 1e-05
    %v2883 = vadd.f32 %v2879, 1e-05
    %v2884 = vrsqrt.pop %v2880
    %v2885 = vmul.f32 %v2884, %v2880
    %v2886 = vmul.f32 %v2885, %v2884
    %v2887 = vmul.f32 0.5, %v2886
    %v2888 = vsub.f32 1.5, %v2887
    %v2889 = vmul.f32 %v2884, %v2888
    %vm2890 = vweird.f32 %v2880
    %vm2891 = vweird.f32 %v2884
    %vm2892 = vmor %vm2890, %vm2891
    %v2893 = vsel %vm2892, %v2884, %v2889
    %v2894 = vrsqrt.pop %v2881
    %v2895 = vmul.f32 %v2894, %v2881
    %v2896 = vmul.f32 %v2895, %v2894
    %v2897 = vmul.f32 0.5, %v2896
    %v2898 = vsub.f32 1.5, %v2897
    %v2899 = vmul.f32 %v2894, %v2898
    %vm2900 = vweird.f32 %v2881
    %vm2901 = vweird.f32 %v2894
    %vm2902 = vmor %vm2900, %vm2901
    %v2903 = vsel %vm2902, %v2894, %v2899
    %v2904 = vrsqrt.pop %v2882
    %v2905 = vmul.f32 %v2904, %v2882
    %v2906 = vmul.f32 %v2905, %v2904
    %v2907 = vmul.f32 0.5, %v2906
    %v2908 = vsub.f32 1.5, %v2907
    %v2909 = vmul.f32 %v2904, %v2908
    %vm2910 = vweird.f32 %v2882
    %vm2911 = vweird.f32 %v2904
    %vm2912 = vmor %vm2910, %vm2911
    %v2913 = vsel %vm2912, %v2904, %v2909
    %v2914 = vrsqrt.pop %v2883
    %v2915 = vmul.f32 %v2914, %v2883
    %v2916 = vmul.f32 %v2915, %v2914
    %v2917 = vmul.f32 0.5, %v2916
    %v2918 = vsub.f32 1.5, %v2917
    %v2919 = vmul.f32 %v2914, %v2918
    %vm2920 = vweird.f32 %v2883
    %vm2921 = vweird.f32 %v2914
    %vm2922 = vmor %vm2920, %vm2921
    %v2923 = vsel %vm2922, %v2914, %v2919
    %v2924 = vmul.f32 %v2856, %v2893
    %v2925 = vmul.f32 %v2857, %v2903
    %v2926 = vmul.f32 %v2858, %v2913
    %v2927 = vmul.f32 %v2859, %v2923
    %v2928 = vperm.slane %v2839, 0
    %v2929 = vmul.f32 %v2924, %v2928
    %v2930 = vmul.f32 %v2925, %v2928
    %v2931 = vmul.f32 %v2926, %v2928
    %v2932 = vmul.f32 %v2927, %v2928
    %v2933 = vperm.slane %v2839, 1
    %v2934 = vadd.f32 %v2929, %v2933
    %v2935 = vadd.f32 %v2930, %v2933
    %v2936 = vadd.f32 %v2931, %v2933
    %v2937 = vadd.f32 %v2932, %v2933
    %v2938 = vpack.c.bf16 %v2935, %v2934
    %v2939 = vpack.c.bf16 %v2937, %v2936
    %s2940 = scalar_lea.vmem %s10, 16
    %v2941 = vld [vmem:[%s2940] sm:$0xf]
    %v2942 = vld [vmem:[%s2940 + $0x4] sm:$0xf]
    %v2943 = vld [vmem:[%s2940 + $0x8] sm:$0xf]
    %v2944 = vld [vmem:[%s2940 + $0xc] sm:$0xf]
    %v2945 = vperm.slane %v2839, 2
    %v2950 = vunpack.c.l.b16 %v2941
    %v2951 = vunpack.c.l.b16 %v2942
    %v2952 = vunpack.c.l.b16 %v2943
    %v2953 = vunpack.c.l.b16 %v2944
    %v2954 = vpack.c.b16 %v2951, %v2950
    %v2955 = vpack.c.b16 %v2953, %v2952
    %v2959 = vsel %vm147, %v2938, 0
    %v2962 = vsel %vm147, %v2939, 0
    %2964 = vmatpush.bf16.msra.mxu0 0
    %2965 = vmatpush.bf16.msra.mxu0 0
    %2966 = vmatpush.bf16.msra.mxu0 0
    %2967 = vmatpush.bf16.msra.mxu0 0
    %2968 = vmatpush.bf16.msra.mxu0 0
    %2969 = vmatpush.bf16.msra.mxu0 0
    %2970 = vmatpush.bf16.msra.mxu0 %v2955
    %2971 = vmatpush.bf16.msra.mxu0 %v2954
    %2972 = vmatmul.bf16.gmra.mxu0 %v2959
    %v2973 = vpop.f32.mrf.mxu0
    %v2974 = vadd.f32 %v2945, %v2973
    %v2975 = vpop.f32.mrf.mxu0
    %v2976 = vadd.f32 %v2945, %v2975
    %2977 = vmatmul.bf16.gmra.mxu0 %v2962
    %v2978 = vpop.f32.mrf.mxu0
    %v2979 = vadd.f32 %v2945, %v2978
    %v2980 = vpop.f32.mrf.mxu0
    %v2981 = vadd.f32 %v2945, %v2980
    %2982 = vdwg.mxu0
    %v2983 = vpack.c.bf16 %v2976, %v2974
    %v2984 = vpack.c.bf16 %v2981, %v2979
    %2987 = vrot.lane.b32.xlu0 %v2983, 96
    %v2988 = vpop.permute.xlu0 %2987
    %2989 = vrot.lane.b32.xlu0 %v2984, 96
    %v2990 = vpop.permute.xlu0 %2989
    %v2992 = vsel %vm1963, %v2983, 0
    %v2995 = vsel %vm1963, %v2984, 0
    %v2998 = vsel %vm1963, %v2988, 0
    %v3001 = vsel %vm1963, %v2990, 0
    %3003 = vmatpush.bf16.xpose.msra.mxu0 0
    %3004 = vmatpush.bf16.xpose.msra.mxu0 0
    %3005 = vmatpush.bf16.xpose.msra.mxu0 0
    %3006 = vmatpush.bf16.xpose.msra.mxu0 0
    %3007 = vmatpush.bf16.xpose.msra.mxu0 0
    %3008 = vmatpush.bf16.xpose.msra.mxu0 0
    %3009 = vmatpush.bf16.xpose.msra.mxu0 %v3001
    %3010 = vmatpush.bf16.xpose.msra.mxu0 %v2998
    %3011 = vmatmul.bf16.gmra.mxu0 %v2992
    %v3012 = vpop.f32.mrf.mxu0
    %v3013 = vadd.f32 0.0, %v3012
    %v3014 = vpop.f32.mrf.mxu0
    %v3015 = vadd.f32 0.0, %v3014
    %3016 = vmatmul.bf16.gmra.mxu0 %v2995
    %v3017 = vpop.f32.mrf.mxu0
    %v3018 = vadd.f32 0.0, %v3017
    %v3019 = vpop.f32.mrf.mxu0
    %v3020 = vadd.f32 0.0, %v3019
    %3021 = vdwg.mxu0
    %v3022 = vmul.f32 %v3013, 0.35355338
    %v3023 = vmul.f32 %v3015, 0.35355338
    %v3024 = vmul.f32 %v3018, 0.35355338
    %v3025 = vmul.f32 %v3020, 0.35355338
    %v3026 = vadd.f32 %v3022, %v1801
    %v3027 = vadd.f32 %v3023, %v1802
    %v3028 = vadd.f32 %v3024, %v1803
    %v3029 = vadd.f32 %v3025, %v1804
    %v3030 = vsel %vm147, %v3026, -inf
    %3031 = vmax.xlane.f32.xlu0 %v3030
    %v3032 = vpop.xlane.xlu0 %3031
    %v3033 = vsel %vm147, %v3027, -inf
    %3034 = vmax.xlane.f32.xlu0 %v3033
    %v3035 = vpop.xlane.xlu0 %3034
    %v3036 = vsel %vm147, %v3028, -inf
    %3037 = vmax.xlane.f32.xlu0 %v3036
    %v3038 = vpop.xlane.xlu0 %3037
    %v3039 = vsel %vm147, %v3029, -inf
    %3040 = vmax.xlane.f32.xlu0 %v3039
    %v3041 = vpop.xlane.xlu0 %3040
    %v3042 = vsub.f32 %v3026, %v3032
    %v3043 = vsub.f32 %v3027, %v3035
    %v3044 = vsub.f32 %v3028, %v3038
    %v3045 = vsub.f32 %v3029, %v3041
    %v3046 = vmul.f32 %v3042, 1.442695
    %v3047 = vpow.pop %v3046
    %v3048 = vmul.f32 %v3043, 1.442695
    %v3049 = vpow.pop %v3048
    %v3050 = vmul.f32 %v3044, 1.442695
    %v3051 = vpow.pop %v3050
    %v3052 = vmul.f32 %v3045, 1.442695
    %v3053 = vpow.pop %v3052
    %v3054 = vsel %vm147, %v3047, 0.0
    %3055 = vadd.xlane.f32.xlu0 %v3054
    %v3056 = vpop.xlane.xlu0 %3055
    %v3057 = vsel %vm147, %v3049, 0.0
    %3058 = vadd.xlane.f32.xlu0 %v3057
    %v3059 = vpop.xlane.xlu0 %3058
    %v3060 = vsel %vm147, %v3051, 0.0
    %3061 = vadd.xlane.f32.xlu0 %v3060
    %v3062 = vpop.xlane.xlu0 %3061
    %v3063 = vsel %vm147, %v3053, 0.0
    %3064 = vadd.xlane.f32.xlu0 %v3063
    %v3065 = vpop.xlane.xlu0 %3064
    %v3066 = vrcp.pop %v3056
    %v3067 = vrcp.pop %v3059
    %v3068 = vrcp.pop %v3062
    %v3069 = vrcp.pop %v3065
    %v3070 = vmul.f32 %v3047, %v3066
    %v3071 = vmul.f32 %v3049, %v3067
    %v3072 = vmul.f32 %v3051, %v3068
    %v3073 = vmul.f32 %v3053, %v3069
    %v3074 = vpack.c.bf16 %v3071, %v3070
    %v3075 = vpack.c.bf16 %v3073, %v3072
    %3076 = vrot.lane.b32.xlu0 %v2983, 64
    %v3077 = vpop.permute.xlu0 %3076
    %3078 = vrot.lane.b32.xlu0 %v2984, 64
    %v3079 = vpop.permute.xlu0 %3078
    %v3083 = vsel %vm147, %v3074, 0
    %v3086 = vsel %vm147, %v3075, 0
    %3088 = vmatpush.bf16.msra.mxu0 0
    %3089 = vmatpush.bf16.msra.mxu0 0
    %3090 = vmatpush.bf16.msra.mxu0 0
    %3091 = vmatpush.bf16.msra.mxu0 0
    %3092 = vmatpush.bf16.msra.mxu0 0
    %3093 = vmatpush.bf16.msra.mxu0 0
    %3094 = vmatpush.bf16.msra.mxu0 %v3079
    %3095 = vmatpush.bf16.msra.mxu0 %v3077
    %3096 = vmatmul.bf16.gmra.mxu0 %v3083
    %v3097 = vpop.f32.mrf.mxu0
    %v3098 = vadd.f32 0.0, %v3097
    %v3099 = vpop.f32.mrf.mxu0
    %v3100 = vadd.f32 0.0, %v3099
    %3101 = vmatmul.bf16.gmra.mxu0 %v3086
    %v3102 = vpop.f32.mrf.mxu0
    %v3103 = vadd.f32 0.0, %v3102
    %v3104 = vpop.f32.mrf.mxu0
    %v3105 = vadd.f32 0.0, %v3104
    %3106 = vdwg.mxu0
    %3107 = vrot.lane.b32.xlu0 %v2983, 120
    %v3108 = vpop.permute.xlu0 %3107
    %3109 = vrot.lane.b32.xlu0 %v2984, 120
    %v3110 = vpop.permute.xlu0 %3109
    %3111 = vrot.lane.b32.xlu0 %v2983, 88
    %v3112 = vpop.permute.xlu0 %3111
    %3113 = vrot.lane.b32.xlu0 %v2984, 88
    %v3114 = vpop.permute.xlu0 %3113
    %v3116 = vsel %vm1963, %v3108, 0
    %v3119 = vsel %vm1963, %v3110, 0
    %v3122 = vsel %vm1963, %v3112, 0
    %v3125 = vsel %vm1963, %v3114, 0
    %3127 = vmatpush.bf16.xpose.msra.mxu0 0
    %3128 = vmatpush.bf16.xpose.msra.mxu0 0
    %3129 = vmatpush.bf16.xpose.msra.mxu0 0
    %3130 = vmatpush.bf16.xpose.msra.mxu0 0
    %3131 = vmatpush.bf16.xpose.msra.mxu0 0
    %3132 = vmatpush.bf16.xpose.msra.mxu0 0
    %3133 = vmatpush.bf16.xpose.msra.mxu0 %v3125
    %3134 = vmatpush.bf16.xpose.msra.mxu0 %v3122
    %3135 = vmatmul.bf16.gmra.mxu0 %v3116
    %v3136 = vpop.f32.mrf.mxu0
    %v3137 = vadd.f32 0.0, %v3136
    %v3138 = vpop.f32.mrf.mxu0
    %v3139 = vadd.f32 0.0, %v3138
    %3140 = vmatmul.bf16.gmra.mxu0 %v3119
    %v3141 = vpop.f32.mrf.mxu0
    %v3142 = vadd.f32 0.0, %v3141
    %v3143 = vpop.f32.mrf.mxu0
    %v3144 = vadd.f32 0.0, %v3143
    %3145 = vdwg.mxu0
    %v3146 = vmul.f32 %v3137, 0.35355338
    %v3147 = vmul.f32 %v3139, 0.35355338
    %v3148 = vmul.f32 %v3142, 0.35355338
    %v3149 = vmul.f32 %v3144, 0.35355338
    %v3150 = vadd.f32 %v3146, %v1801
    %v3151 = vadd.f32 %v3147, %v1802
    %v3152 = vadd.f32 %v3148, %v1803
    %v3153 = vadd.f32 %v3149, %v1804
    %v3154 = vsel %vm147, %v3150, -inf
    %3155 = vmax.xlane.f32.xlu0 %v3154
    %v3156 = vpop.xlane.xlu0 %3155
    %v3157 = vsel %vm147, %v3151, -inf
    %3158 = vmax.xlane.f32.xlu0 %v3157
    %v3159 = vpop.xlane.xlu0 %3158
    %v3160 = vsel %vm147, %v3152, -inf
    %3161 = vmax.xlane.f32.xlu0 %v3160
    %v3162 = vpop.xlane.xlu0 %3161
    %v3163 = vsel %vm147, %v3153, -inf
    %3164 = vmax.xlane.f32.xlu0 %v3163
    %v3165 = vpop.xlane.xlu0 %3164
    %v3166 = vsub.f32 %v3150, %v3156
    %v3167 = vsub.f32 %v3151, %v3159
    %v3168 = vsub.f32 %v3152, %v3162
    %v3169 = vsub.f32 %v3153, %v3165
    %v3170 = vmul.f32 %v3166, 1.442695
    %v3171 = vpow.pop %v3170
    %v3172 = vmul.f32 %v3167, 1.442695
    %v3173 = vpow.pop %v3172
    %v3174 = vmul.f32 %v3168, 1.442695
    %v3175 = vpow.pop %v3174
    %v3176 = vmul.f32 %v3169, 1.442695
    %v3177 = vpow.pop %v3176
    %v3178 = vsel %vm147, %v3171, 0.0
    %3179 = vadd.xlane.f32.xlu0 %v3178
    %v3180 = vpop.xlane.xlu0 %3179
    %v3181 = vsel %vm147, %v3173, 0.0
    %3182 = vadd.xlane.f32.xlu0 %v3181
    %v3183 = vpop.xlane.xlu0 %3182
    %v3184 = vsel %vm147, %v3175, 0.0
    %3185 = vadd.xlane.f32.xlu0 %v3184
    %v3186 = vpop.xlane.xlu0 %3185
    %v3187 = vsel %vm147, %v3177, 0.0
    %3188 = vadd.xlane.f32.xlu0 %v3187
    %v3189 = vpop.xlane.xlu0 %3188
    %v3190 = vrcp.pop %v3180
    %v3191 = vrcp.pop %v3183
    %v3192 = vrcp.pop %v3186
    %v3193 = vrcp.pop %v3189
    %v3194 = vmul.f32 %v3171, %v3190
    %v3195 = vmul.f32 %v3173, %v3191
    %v3196 = vmul.f32 %v3175, %v3192
    %v3197 = vmul.f32 %v3177, %v3193
    %v3198 = vpack.c.bf16 %v3195, %v3194
    %v3199 = vpack.c.bf16 %v3197, %v3196
    %3200 = vrot.lane.b32.xlu0 %v2983, 56
    %v3201 = vpop.permute.xlu0 %3200
    %3202 = vrot.lane.b32.xlu0 %v2984, 56
    %v3203 = vpop.permute.xlu0 %3202
    %v3207 = vsel %vm147, %v3198, 0
    %v3210 = vsel %vm147, %v3199, 0
    %3212 = vmatpush.bf16.msra.mxu0 0
    %3213 = vmatpush.bf16.msra.mxu0 0
    %3214 = vmatpush.bf16.msra.mxu0 0
    %3215 = vmatpush.bf16.msra.mxu0 0
    %3216 = vmatpush.bf16.msra.mxu0 0
    %3217 = vmatpush.bf16.msra.mxu0 0
    %3218 = vmatpush.bf16.msra.mxu0 %v3203
    %3219 = vmatpush.bf16.msra.mxu0 %v3201
    %3220 = vmatmul.bf16.gmra.mxu0 %v3207
    %v3221 = vpop.f32.mrf.mxu0
    %v3222 = vadd.f32 0.0, %v3221
    %v3223 = vpop.f32.mrf.mxu0
    %v3224 = vadd.f32 0.0, %v3223
    %3225 = vmatmul.bf16.gmra.mxu0 %v3210
    %v3226 = vpop.f32.mrf.mxu0
    %v3227 = vadd.f32 0.0, %v3226
    %v3228 = vpop.f32.mrf.mxu0
    %v3229 = vadd.f32 0.0, %v3228
    %3230 = vdwg.mxu0
    %3231 = vrot.lane.b32.xlu0 %v2983, 112
    %v3232 = vpop.permute.xlu0 %3231
    %3233 = vrot.lane.b32.xlu0 %v2984, 112
    %v3234 = vpop.permute.xlu0 %3233
    %3235 = vrot.lane.b32.xlu0 %v2983, 80
    %v3236 = vpop.permute.xlu0 %3235
    %3237 = vrot.lane.b32.xlu0 %v2984, 80
    %v3238 = vpop.permute.xlu0 %3237
    %v3240 = vsel %vm1963, %v3232, 0
    %v3243 = vsel %vm1963, %v3234, 0
    %v3246 = vsel %vm1963, %v3236, 0
    %v3249 = vsel %vm1963, %v3238, 0
    %3251 = vmatpush.bf16.xpose.msra.mxu0 0
    %3252 = vmatpush.bf16.xpose.msra.mxu0 0
    %3253 = vmatpush.bf16.xpose.msra.mxu0 0
    %3254 = vmatpush.bf16.xpose.msra.mxu0 0
    %3255 = vmatpush.bf16.xpose.msra.mxu0 0
    %3256 = vmatpush.bf16.xpose.msra.mxu0 0
    %3257 = vmatpush.bf16.xpose.msra.mxu0 %v3249
    %3258 = vmatpush.bf16.xpose.msra.mxu0 %v3246
    %3259 = vmatmul.bf16.gmra.mxu0 %v3240
    %v3260 = vpop.f32.mrf.mxu0
    %v3261 = vadd.f32 0.0, %v3260
    %v3262 = vpop.f32.mrf.mxu0
    %v3263 = vadd.f32 0.0, %v3262
    %3264 = vmatmul.bf16.gmra.mxu0 %v3243
    %v3265 = vpop.f32.mrf.mxu0
    %v3266 = vadd.f32 0.0, %v3265
    %v3267 = vpop.f32.mrf.mxu0
    %v3268 = vadd.f32 0.0, %v3267
    %3269 = vdwg.mxu0
    %v3270 = vmul.f32 %v3261, 0.35355338
    %v3271 = vmul.f32 %v3263, 0.35355338
    %v3272 = vmul.f32 %v3266, 0.35355338
    %v3273 = vmul.f32 %v3268, 0.35355338
    %v3274 = vadd.f32 %v3270, %v1801
    %v3275 = vadd.f32 %v3271, %v1802
    %v3276 = vadd.f32 %v3272, %v1803
    %v3277 = vadd.f32 %v3273, %v1804
    %v3278 = vsel %vm147, %v3274, -inf
    %3279 = vmax.xlane.f32.xlu0 %v3278
    %v3280 = vpop.xlane.xlu0 %3279
    %v3281 = vsel %vm147, %v3275, -inf
    %3282 = vmax.xlane.f32.xlu0 %v3281
    %v3283 = vpop.xlane.xlu0 %3282
    %v3284 = vsel %vm147, %v3276, -inf
    %3285 = vmax.xlane.f32.xlu0 %v3284
    %v3286 = vpop.xlane.xlu0 %3285
    %v3287 = vsel %vm147, %v3277, -inf
    %3288 = vmax.xlane.f32.xlu0 %v3287
    %v3289 = vpop.xlane.xlu0 %3288
    %v3290 = vsub.f32 %v3274, %v3280
    %v3291 = vsub.f32 %v3275, %v3283
    %v3292 = vsub.f32 %v3276, %v3286
    %v3293 = vsub.f32 %v3277, %v3289
    %v3294 = vmul.f32 %v3290, 1.442695
    %v3295 = vpow.pop %v3294
    %v3296 = vmul.f32 %v3291, 1.442695
    %v3297 = vpow.pop %v3296
    %v3298 = vmul.f32 %v3292, 1.442695
    %v3299 = vpow.pop %v3298
    %v3300 = vmul.f32 %v3293, 1.442695
    %v3301 = vpow.pop %v3300
    %v3302 = vsel %vm147, %v3295, 0.0
    %3303 = vadd.xlane.f32.xlu0 %v3302
    %v3304 = vpop.xlane.xlu0 %3303
    %v3305 = vsel %vm147, %v3297, 0.0
    %3306 = vadd.xlane.f32.xlu0 %v3305
    %v3307 = vpop.xlane.xlu0 %3306
    %v3308 = vsel %vm147, %v3299, 0.0
    %3309 = vadd.xlane.f32.xlu0 %v3308
    %v3310 = vpop.xlane.xlu0 %3309
    %v3311 = vsel %vm147, %v3301, 0.0
    %3312 = vadd.xlane.f32.xlu0 %v3311
    %v3313 = vpop.xlane.xlu0 %3312
    %v3314 = vrcp.pop %v3304
    %v3315 = vrcp.pop %v3307
    %v3316 = vrcp.pop %v3310
    %v3317 = vrcp.pop %v3313
    %v3318 = vmul.f32 %v3295, %v3314
    %v3319 = vmul.f32 %v3297, %v3315
    %v3320 = vmul.f32 %v3299, %v3316
    %v3321 = vmul.f32 %v3301, %v3317
    %v3322 = vpack.c.bf16 %v3319, %v3318
    %v3323 = vpack.c.bf16 %v3321, %v3320
    %3324 = vrot.lane.b32.xlu0 %v2983, 48
    %v3325 = vpop.permute.xlu0 %3324
    %3326 = vrot.lane.b32.xlu0 %v2984, 48
    %v3327 = vpop.permute.xlu0 %3326
    %v3331 = vsel %vm147, %v3322, 0
    %v3334 = vsel %vm147, %v3323, 0
    %3336 = vmatpush.bf16.msra.mxu0 0
    %3337 = vmatpush.bf16.msra.mxu0 0
    %3338 = vmatpush.bf16.msra.mxu0 0
    %3339 = vmatpush.bf16.msra.mxu0 0
    %3340 = vmatpush.bf16.msra.mxu0 0
    %3341 = vmatpush.bf16.msra.mxu0 0
    %3342 = vmatpush.bf16.msra.mxu0 %v3327
    %3343 = vmatpush.bf16.msra.mxu0 %v3325
    %3344 = vmatmul.bf16.gmra.mxu0 %v3331
    %v3345 = vpop.f32.mrf.mxu0
    %v3346 = vadd.f32 0.0, %v3345
    %v3347 = vpop.f32.mrf.mxu0
    %v3348 = vadd.f32 0.0, %v3347
    %3349 = vmatmul.bf16.gmra.mxu0 %v3334
    %v3350 = vpop.f32.mrf.mxu0
    %v3351 = vadd.f32 0.0, %v3350
    %v3352 = vpop.f32.mrf.mxu0
    %v3353 = vadd.f32 0.0, %v3352
    %3354 = vdwg.mxu0
    %3355 = vrot.lane.b32.xlu0 %v2983, 104
    %v3356 = vpop.permute.xlu0 %3355
    %3357 = vrot.lane.b32.xlu0 %v2984, 104
    %v3358 = vpop.permute.xlu0 %3357
    %3359 = vrot.lane.b32.xlu0 %v2983, 72
    %v3360 = vpop.permute.xlu0 %3359
    %3361 = vrot.lane.b32.xlu0 %v2984, 72
    %v3362 = vpop.permute.xlu0 %3361
    %v3364 = vsel %vm1963, %v3356, 0
    %v3367 = vsel %vm1963, %v3358, 0
    %v3370 = vsel %vm1963, %v3360, 0
    %v3373 = vsel %vm1963, %v3362, 0
    %3375 = vmatpush.bf16.xpose.msra.mxu0 0
    %3376 = vmatpush.bf16.xpose.msra.mxu0 0
    %3377 = vmatpush.bf16.xpose.msra.mxu0 0
    %3378 = vmatpush.bf16.xpose.msra.mxu0 0
    %3379 = vmatpush.bf16.xpose.msra.mxu0 0
    %3380 = vmatpush.bf16.xpose.msra.mxu0 0
    %3381 = vmatpush.bf16.xpose.msra.mxu0 %v3373
    %3382 = vmatpush.bf16.xpose.msra.mxu0 %v3370
    %3383 = vmatmul.bf16.gmra.mxu0 %v3364
    %v3384 = vpop.f32.mrf.mxu0
    %v3385 = vadd.f32 0.0, %v3384
    %v3386 = vpop.f32.mrf.mxu0
    %v3387 = vadd.f32 0.0, %v3386
    %3388 = vmatmul.bf16.gmra.mxu0 %v3367
    %v3389 = vpop.f32.mrf.mxu0
    %v3390 = vadd.f32 0.0, %v3389
    %v3391 = vpop.f32.mrf.mxu0
    %v3392 = vadd.f32 0.0, %v3391
    %3393 = vdwg.mxu0
    %v3394 = vmul.f32 %v3385, 0.35355338
    %v3395 = vmul.f32 %v3387, 0.35355338
    %v3396 = vmul.f32 %v3390, 0.35355338
    %v3397 = vmul.f32 %v3392, 0.35355338
    %v3398 = vadd.f32 %v3394, %v1801
    %v3399 = vadd.f32 %v3395, %v1802
    %v3400 = vadd.f32 %v3396, %v1803
    %v3401 = vadd.f32 %v3397, %v1804
    %v3402 = vsel %vm147, %v3398, -inf
    %3403 = vmax.xlane.f32.xlu0 %v3402
    %v3404 = vpop.xlane.xlu0 %3403
    %v3405 = vsel %vm147, %v3399, -inf
    %3406 = vmax.xlane.f32.xlu0 %v3405
    %v3407 = vpop.xlane.xlu0 %3406
    %v3408 = vsel %vm147, %v3400, -inf
    %3409 = vmax.xlane.f32.xlu0 %v3408
    %v3410 = vpop.xlane.xlu0 %3409
    %v3411 = vsel %vm147, %v3401, -inf
    %3412 = vmax.xlane.f32.xlu0 %v3411
    %v3413 = vpop.xlane.xlu0 %3412
    %v3414 = vsub.f32 %v3398, %v3404
    %v3415 = vsub.f32 %v3399, %v3407
    %v3416 = vsub.f32 %v3400, %v3410
    %v3417 = vsub.f32 %v3401, %v3413
    %v3418 = vmul.f32 %v3414, 1.442695
    %v3419 = vpow.pop %v3418
    %v3420 = vmul.f32 %v3415, 1.442695
    %v3421 = vpow.pop %v3420
    %v3422 = vmul.f32 %v3416, 1.442695
    %v3423 = vpow.pop %v3422
    %v3424 = vmul.f32 %v3417, 1.442695
    %v3425 = vpow.pop %v3424
    %v3426 = vsel %vm147, %v3419, 0.0
    %3427 = vadd.xlane.f32.xlu0 %v3426
    %v3428 = vpop.xlane.xlu0 %3427
    %v3429 = vsel %vm147, %v3421, 0.0
    %3430 = vadd.xlane.f32.xlu0 %v3429
    %v3431 = vpop.xlane.xlu0 %3430
    %v3432 = vsel %vm147, %v3423, 0.0
    %3433 = vadd.xlane.f32.xlu0 %v3432
    %v3434 = vpop.xlane.xlu0 %3433
    %v3435 = vsel %vm147, %v3425, 0.0
    %3436 = vadd.xlane.f32.xlu0 %v3435
    %v3437 = vpop.xlane.xlu0 %3436
    %v3438 = vrcp.pop %v3428
    %v3439 = vrcp.pop %v3431
    %v3440 = vrcp.pop %v3434
    %v3441 = vrcp.pop %v3437
    %v3442 = vmul.f32 %v3419, %v3438
    %v3443 = vmul.f32 %v3421, %v3439
    %v3444 = vmul.f32 %v3423, %v3440
    %v3445 = vmul.f32 %v3425, %v3441
    %v3446 = vpack.c.bf16 %v3443, %v3442
    %v3447 = vpack.c.bf16 %v3445, %v3444
    %3448 = vrot.lane.b32.xlu0 %v2983, 40
    %v3449 = vpop.permute.xlu0 %3448
    %3450 = vrot.lane.b32.xlu0 %v2984, 40
    %v3451 = vpop.permute.xlu0 %3450
    %v3455 = vsel %vm147, %v3446, 0
    %v3458 = vsel %vm147, %v3447, 0
    %3460 = vmatpush.bf16.msra.mxu0 0
    %3461 = vmatpush.bf16.msra.mxu0 0
    %3462 = vmatpush.bf16.msra.mxu0 0
    %3463 = vmatpush.bf16.msra.mxu0 0
    %3464 = vmatpush.bf16.msra.mxu0 0
    %3465 = vmatpush.bf16.msra.mxu0 0
    %3466 = vmatpush.bf16.msra.mxu0 %v3451
    %3467 = vmatpush.bf16.msra.mxu0 %v3449
    %3468 = vmatmul.bf16.gmra.mxu0 %v3455
    %v3469 = vpop.f32.mrf.mxu0
    %v3470 = vadd.f32 0.0, %v3469
    %v3471 = vpop.f32.mrf.mxu0
    %v3472 = vadd.f32 0.0, %v3471
    %3473 = vmatmul.bf16.gmra.mxu0 %v3458
    %v3474 = vpop.f32.mrf.mxu0
    %v3475 = vadd.f32 0.0, %v3474
    %v3476 = vpop.f32.mrf.mxu0
    %v3477 = vadd.f32 0.0, %v3476
    %3478 = vdwg.mxu0
    %3483 = vrot.lane.b32.xlu0 %v3222, 8
    %v3484 = vpop.permute.xlu0 %3483
    %3485 = vrot.lane.b32.xlu0 %v3224, 8
    %v3486 = vpop.permute.xlu0 %3485
    %3487 = vrot.lane.b32.xlu0 %v3227, 8
    %v3488 = vpop.permute.xlu0 %3487
    %3489 = vrot.lane.b32.xlu0 %v3229, 8
    %v3490 = vpop.permute.xlu0 %3489
    %3499 = vrot.lane.b32.xlu0 %v3346, 16
    %v3500 = vpop.permute.xlu0 %3499
    %3501 = vrot.lane.b32.xlu0 %v3348, 16
    %v3502 = vpop.permute.xlu0 %3501
    %3503 = vrot.lane.b32.xlu0 %v3351, 16
    %v3504 = vpop.permute.xlu0 %3503
    %3505 = vrot.lane.b32.xlu0 %v3353, 16
    %v3506 = vpop.permute.xlu0 %3505
    %3515 = vrot.lane.b32.xlu0 %v3470, 24
    %v3516 = vpop.permute.xlu0 %3515
    %3517 = vrot.lane.b32.xlu0 %v3472, 24
    %v3518 = vpop.permute.xlu0 %3517
    %3519 = vrot.lane.b32.xlu0 %v3475, 24
    %v3520 = vpop.permute.xlu0 %3519
    %3521 = vrot.lane.b32.xlu0 %v3477, 24
    %v3522 = vpop.permute.xlu0 %3521
    %v3527 = vsel %vm1963, %v3098, %v3484
    %v3528 = vsel %vm1963, %v3100, %v3486
    %v3529 = vsel %vm1963, %v3103, %v3488
    %v3530 = vsel %vm1963, %v3105, %v3490
    %v3531 = vsel %vm2504, %v3527, %v3500
    %v3532 = vsel %vm2504, %v3528, %v3502
    %v3533 = vsel %vm2504, %v3529, %v3504
    %v3534 = vsel %vm2504, %v3530, %v3506
    %v3535 = vsel %vm2509, %v3531, %v3516
    %v3536 = vsel %vm2509, %v3532, %v3518
    %v3537 = vsel %vm2509, %v3533, %v3520
    %v3538 = vsel %vm2509, %v3534, %v3522
    %v3539 = vpack.c.bf16 %v3536, %v3535
    %v3540 = vpack.c.bf16 %v3538, %v3537
    %s3541 = scalar_lea.vmem %s11, 16
    %v3542 = vld [vmem:[%s3541] sm:$0xf]
    %v3543 = vld [vmem:[%s3541 + $0x4] sm:$0xf]
    %v3544 = vld [vmem:[%s3541 + $0x8] sm:$0xf]
    %v3545 = vld [vmem:[%s3541 + $0xc] sm:$0xf]
    %v3550 = vunpack.c.l.b16 %v3542
    %v3551 = vunpack.c.l.b16 %v3543
    %v3552 = vunpack.c.l.b16 %v3544
    %v3553 = vunpack.c.l.b16 %v3545
    %v3554 = vpack.c.b16 %v3551, %v3550
    %v3555 = vpack.c.b16 %v3553, %v3552
    %v3559 = vsel %vm147, %v3539, 0
    %v3562 = vsel %vm147, %v3540, 0
    %3564 = vmatpush.bf16.msra.mxu0 0
    %3565 = vmatpush.bf16.msra.mxu0 0
    %3566 = vmatpush.bf16.msra.mxu0 0
    %3567 = vmatpush.bf16.msra.mxu0 0
    %3568 = vmatpush.bf16.msra.mxu0 0
    %3569 = vmatpush.bf16.msra.mxu0 0
    %3570 = vmatpush.bf16.msra.mxu0 %v3555
    %3571 = vmatpush.bf16.msra.mxu0 %v3554
    %3572 = vmatmul.bf16.gmra.mxu0 %v3559
    %v3573 = vpop.f32.mrf.mxu0
    %v3574 = vadd.f32 0.0, %v3573
    %v3575 = vpop.f32.mrf.mxu0
    %v3576 = vadd.f32 0.0, %v3575
    %3577 = vmatmul.bf16.gmra.mxu0 %v3562
    %v3578 = vpop.f32.mrf.mxu0
    %v3579 = vadd.f32 0.0, %v3578
    %v3580 = vpop.f32.mrf.mxu0
    %v3581 = vadd.f32 0.0, %v3580
    %3582 = vdwg.mxu0
    %v3583 = vadd.f32 %v2834, %v3574
    %v3584 = vadd.f32 %v2835, %v3576
    %v3585 = vadd.f32 %v2836, %v3579
    %v3586 = vadd.f32 %v2837, %v3581
    %v3587 = vperm.slane %v2839, 3
    %v3588 = vadd.f32 %v3583, %v3587
    %v3589 = vadd.f32 %v3584, %v3587
    %v3590 = vadd.f32 %v3585, %v3587
    %v3591 = vadd.f32 %v3586, %v3587
    %v3592 = vsel %vm147, %v3588, 0.0
    %3593 = vadd.xlane.f32.xlu0 %v3592
    %v3594 = vpop.xlane.xlu0 %3593
    %v3595 = vsel %vm147, %v3589, 0.0
    %3596 = vadd.xlane.f32.xlu0 %v3595
    %v3597 = vpop.xlane.xlu0 %3596
    %v3598 = vsel %vm147, %v3590, 0.0
    %3599 = vadd.xlane.f32.xlu0 %v3598
    %v3600 = vpop.xlane.xlu0 %3599
    %v3601 = vsel %vm147, %v3591, 0.0
    %3602 = vadd.xlane.f32.xlu0 %v3601
    %v3603 = vpop.xlane.xlu0 %3602
    %v3604 = vmul.f32 %v3594, %v1824
    %v3605 = vmul.f32 %v3597, %v1824
    %v3606 = vmul.f32 %v3600, %v1824
    %v3607 = vmul.f32 %v3603, %v1824
    %v3608 = vsub.f32 %v3588, %v3604
    %v3609 = vsub.f32 %v3589, %v3605
    %v3610 = vsub.f32 %v3590, %v3606
    %v3611 = vsub.f32 %v3591, %v3607
    %v3612 = vmul.f32 %v3608, %v3608
    %v3613 = vmul.f32 %v3609, %v3609
    %v3614 = vmul.f32 %v3610, %v3610
    %v3615 = vmul.f32 %v3611, %v3611
    %v3616 = vsel %vm147, %v3612, 0.0
    %3617 = vadd.xlane.f32.xlu0 %v3616
    %v3618 = vpop.xlane.xlu0 %3617
    %v3619 = vsel %vm147, %v3613, 0.0
    %3620 = vadd.xlane.f32.xlu0 %v3619
    %v3621 = vpop.xlane.xlu0 %3620
    %v3622 = vsel %vm147, %v3614, 0.0
    %3623 = vadd.xlane.f32.xlu0 %v3622
    %v3624 = vpop.xlane.xlu0 %3623
    %v3625 = vsel %vm147, %v3615, 0.0
    %3626 = vadd.xlane.f32.xlu0 %v3625
    %v3627 = vpop.xlane.xlu0 %3626
    %v3628 = vmul.f32 %v3618, %v1824
    %v3629 = vmul.f32 %v3621, %v1824
    %v3630 = vmul.f32 %v3624, %v1824
    %v3631 = vmul.f32 %v3627, %v1824
    %v3632 = vadd.f32 %v3628, 1e-05
    %v3633 = vadd.f32 %v3629, 1e-05
    %v3634 = vadd.f32 %v3630, 1e-05
    %v3635 = vadd.f32 %v3631, 1e-05
    %v3636 = vrsqrt.pop %v3632
    %v3637 = vmul.f32 %v3636, %v3632
    %v3638 = vmul.f32 %v3637, %v3636
    %v3639 = vmul.f32 0.5, %v3638
    %v3640 = vsub.f32 1.5, %v3639
    %v3641 = vmul.f32 %v3636, %v3640
    %vm3642 = vweird.f32 %v3632
    %vm3643 = vweird.f32 %v3636
    %vm3644 = vmor %vm3642, %vm3643
    %v3645 = vsel %vm3644, %v3636, %v3641
    %v3646 = vrsqrt.pop %v3633
    %v3647 = vmul.f32 %v3646, %v3633
    %v3648 = vmul.f32 %v3647, %v3646
    %v3649 = vmul.f32 0.5, %v3648
    %v3650 = vsub.f32 1.5, %v3649
    %v3651 = vmul.f32 %v3646, %v3650
    %vm3652 = vweird.f32 %v3633
    %vm3653 = vweird.f32 %v3646
    %vm3654 = vmor %vm3652, %vm3653
    %v3655 = vsel %vm3654, %v3646, %v3651
    %v3656 = vrsqrt.pop %v3634
    %v3657 = vmul.f32 %v3656, %v3634
    %v3658 = vmul.f32 %v3657, %v3656
    %v3659 = vmul.f32 0.5, %v3658
    %v3660 = vsub.f32 1.5, %v3659
    %v3661 = vmul.f32 %v3656, %v3660
    %vm3662 = vweird.f32 %v3634
    %vm3663 = vweird.f32 %v3656
    %vm3664 = vmor %vm3662, %vm3663
    %v3665 = vsel %vm3664, %v3656, %v3661
    %v3666 = vrsqrt.pop %v3635
    %v3667 = vmul.f32 %v3666, %v3635
    %v3668 = vmul.f32 %v3667, %v3666
    %v3669 = vmul.f32 0.5, %v3668
    %v3670 = vsub.f32 1.5, %v3669
    %v3671 = vmul.f32 %v3666, %v3670
    %vm3672 = vweird.f32 %v3635
    %vm3673 = vweird.f32 %v3666
    %vm3674 = vmor %vm3672, %vm3673
    %v3675 = vsel %vm3674, %v3666, %v3671
    %v3676 = vmul.f32 %v3608, %v3645
    %v3677 = vmul.f32 %v3609, %v3655
    %v3678 = vmul.f32 %v3610, %v3665
    %v3679 = vmul.f32 %v3611, %v3675
    %v3680 = vperm.slane %v2839, 4
    %v3681 = vmul.f32 %v3676, %v3680
    %v3682 = vmul.f32 %v3677, %v3680
    %v3683 = vmul.f32 %v3678, %v3680
    %v3684 = vmul.f32 %v3679, %v3680
    %v3685 = vperm.slane %v2839, 5
    %v3686 = vadd.f32 %v3681, %v3685
    %v3687 = vadd.f32 %v3682, %v3685
    %v3688 = vadd.f32 %v3683, %v3685
    %v3689 = vadd.f32 %v3684, %v3685
    %v3690 = vpack.c.bf16 %v3687, %v3686
    %v3691 = vpack.c.bf16 %v3689, %v3688
    %s3692 = scalar_lea.vmem %s12, 16
    %v3693 = vld [vmem:[%s3692] sm:$0xf]
    %v3694 = vld [vmem:[%s3692 + $0x4] sm:$0xf]
    %v3695 = vld [vmem:[%s3692 + $0x8] sm:$0xf]
    %v3696 = vld [vmem:[%s3692 + $0xc] sm:$0xf]
    %v3697 = vperm.slane %v2839, 6
    %v3702 = vunpack.c.l.b16 %v3693
    %v3703 = vunpack.c.l.b16 %v3694
    %v3704 = vunpack.c.l.b16 %v3695
    %v3705 = vunpack.c.l.b16 %v3696
    %v3706 = vpack.c.b16 %v3703, %v3702
    %v3707 = vpack.c.b16 %v3705, %v3704
    %v3711 = vsel %vm147, %v3690, 0
    %v3714 = vsel %vm147, %v3691, 0
    %3716 = vmatpush.bf16.msra.mxu0 0
    %3717 = vmatpush.bf16.msra.mxu0 0
    %3718 = vmatpush.bf16.msra.mxu0 0
    %3719 = vmatpush.bf16.msra.mxu0 0
    %3720 = vmatpush.bf16.msra.mxu0 0
    %3721 = vmatpush.bf16.msra.mxu0 0
    %3722 = vmatpush.bf16.msra.mxu0 %v3707
    %3723 = vmatpush.bf16.msra.mxu0 %v3706
    %3724 = vmatmul.bf16.gmra.mxu0 %v3711
    %v3725 = vpop.f32.mrf.mxu0
    %v3726 = vadd.f32 %v3697, %v3725
    %v3727 = vpop.f32.mrf.mxu0
    %v3728 = vadd.f32 %v3697, %v3727
    %3729 = vmatmul.bf16.gmra.mxu0 %v3714
    %v3730 = vpop.f32.mrf.mxu0
    %v3731 = vadd.f32 %v3697, %v3730
    %v3732 = vpop.f32.mrf.mxu0
    %v3733 = vadd.f32 %v3697, %v3732
    %3734 = vdwg.mxu0
    %v3735 = vmul.f32 %v3726, %v3726
    %v3736 = vmul.f32 %v3728, %v3728
    %v3737 = vmul.f32 %v3731, %v3731
    %v3738 = vmul.f32 %v3733, %v3733
    %v3739 = vmul.f32 %v3726, %v3735
    %v3740 = vmul.f32 %v3728, %v3736
    %v3741 = vmul.f32 %v3731, %v3737
    %v3742 = vmul.f32 %v3733, %v3738
    %v3743 = vmul.f32 %v3739, 0.044715
    %v3744 = vmul.f32 %v3740, 0.044715
    %v3745 = vmul.f32 %v3741, 0.044715
    %v3746 = vmul.f32 %v3742, 0.044715
    %v3747 = vadd.f32 %v3726, %v3743
    %v3748 = vadd.f32 %v3728, %v3744
    %v3749 = vadd.f32 %v3731, %v3745
    %v3750 = vadd.f32 %v3733, %v3746
    %v3751 = vmul.f32 %v3747, 0.7978846
    %v3752 = vmul.f32 %v3748, 0.7978846
    %v3753 = vmul.f32 %v3749, 0.7978846
    %v3754 = vmul.f32 %v3750, 0.7978846
    %v3755 = vtanh.pop %v3751
    %v3756 = vtanh.pop %v3752
    %v3757 = vtanh.pop %v3753
    %v3758 = vtanh.pop %v3754
    %v3759 = vadd.f32 %v3755, 1.0
    %v3760 = vadd.f32 %v3756, 1.0
    %v3761 = vadd.f32 %v3757, 1.0
    %v3762 = vadd.f32 %v3758, 1.0
    %v3763 = vmul.f32 %v3759, 0.5
    %v3764 = vmul.f32 %v3760, 0.5
    %v3765 = vmul.f32 %v3761, 0.5
    %v3766 = vmul.f32 %v3762, 0.5
    %v3767 = vmul.f32 %v3726, %v3763
    %v3768 = vmul.f32 %v3728, %v3764
    %v3769 = vmul.f32 %v3731, %v3765
    %v3770 = vmul.f32 %v3733, %v3766
    %v3771 = vpack.c.bf16 %v3768, %v3767
    %v3772 = vpack.c.bf16 %v3770, %v3769
    %s3773 = scalar_lea.vmem %s13, 64
    %v3774 = vld [vmem:[%s3773] sm:$0xf]
    %v3775 = vld [vmem:[%s3773 + $0x4] sm:$0xf]
    %v3776 = vld [vmem:[%s3773 + $0x8] sm:$0xf]
    %v3777 = vld [vmem:[%s3773 + $0xc] sm:$0xf]
    %v3778 = vld [vmem:[%s3773 + $0x10] sm:$0xf]
    %v3779 = vld [vmem:[%s3773 + $0x14] sm:$0xf]
    %v3780 = vld [vmem:[%s3773 + $0x18] sm:$0xf]
    %v3781 = vld [vmem:[%s3773 + $0x1c] sm:$0xf]
    %v3782 = vld [vmem:[%s3773 + $0x20] sm:$0xf]
    %v3783 = vld [vmem:[%s3773 + $0x24] sm:$0xf]
    %v3784 = vld [vmem:[%s3773 + $0x28] sm:$0xf]
    %v3785 = vld [vmem:[%s3773 + $0x2c] sm:$0xf]
    %v3786 = vld [vmem:[%s3773 + $0x30] sm:$0xf]
    %v3787 = vld [vmem:[%s3773 + $0x34] sm:$0xf]
    %v3788 = vld [vmem:[%s3773 + $0x38] sm:$0xf]
    %v3789 = vld [vmem:[%s3773 + $0x3c] sm:$0xf]
    %v3806 = vunpack.c.l.b16 %v3774
    %v3807 = vunpack.c.l.b16 %v3775
    %v3808 = vunpack.c.l.b16 %v3776
    %v3809 = vunpack.c.l.b16 %v3777
    %v3810 = vunpack.c.l.b16 %v3778
    %v3811 = vunpack.c.l.b16 %v3779
    %v3812 = vunpack.c.l.b16 %v3780
    %v3813 = vunpack.c.l.b16 %v3781
    %v3814 = vunpack.c.l.b16 %v3782
    %v3815 = vunpack.c.l.b16 %v3783
    %v3816 = vunpack.c.l.b16 %v3784
    %v3817 = vunpack.c.l.b16 %v3785
    %v3818 = vunpack.c.l.b16 %v3786
    %v3819 = vunpack.c.l.b16 %v3787
    %v3820 = vunpack.c.l.b16 %v3788
    %v3821 = vunpack.c.l.b16 %v3789
    %v3822 = vpack.c.b16 %v3807, %v3806
    %v3823 = vpack.c.b16 %v3809, %v3808
    %v3824 = vpack.c.b16 %v3811, %v3810
    %v3825 = vpack.c.b16 %v3813, %v3812
    %v3826 = vpack.c.b16 %v3815, %v3814
    %v3827 = vpack.c.b16 %v3817, %v3816
    %v3828 = vpack.c.b16 %v3819, %v3818
    %v3829 = vpack.c.b16 %v3821, %v3820
    %3838 = vmatpush.bf16.msra.mxu0 %v3829
    %3839 = vmatpush.bf16.msra.mxu0 %v3828
    %3840 = vmatpush.bf16.msra.mxu0 %v3827
    %3841 = vmatpush.bf16.msra.mxu0 %v3826
    %3842 = vmatpush.bf16.msra.mxu0 %v3825
    %3843 = vmatpush.bf16.msra.mxu0 %v3824
    %3844 = vmatpush.bf16.msra.mxu0 %v3823
    %3845 = vmatpush.bf16.msra.mxu0 %v3822
    %3846 = vmatmul.bf16.gmra.mxu0 %v3771
    %v3847 = vpop.f32.mrf.mxu0
    %v3848 = vadd.f32 0.0, %v3847
    %v3849 = vpop.f32.mrf.mxu0
    %v3850 = vadd.f32 0.0, %v3849
    %3851 = vmatmul.bf16.gmra.mxu0 %v3772
    %v3852 = vpop.f32.mrf.mxu0
    %v3853 = vadd.f32 0.0, %v3852
    %v3854 = vpop.f32.mrf.mxu0
    %v3855 = vadd.f32 0.0, %v3854
    %3856 = vdwg.mxu0
    %v3857 = vadd.f32 %v3588, %v3848
    %v3858 = vadd.f32 %v3589, %v3850
    %v3859 = vadd.f32 %v3590, %v3853
    %v3860 = vadd.f32 %v3591, %v3855
    %v3861 = vperm.slane %v2839, 7
    %v3862 = vadd.f32 %v3857, %v3861
    %v3863 = vadd.f32 %v3858, %v3861
    %v3864 = vadd.f32 %v3859, %v3861
    %v3865 = vadd.f32 %v3860, %v3861
    %v3866 = vld [vmem:[%s15] sm:$0x1]
    %v3867 = vld [vmem:[%s15 + $0x1] sm:$0x1]
    %v3868 = vsel %vm147, %v3862, 0.0
    %3869 = vadd.xlane.f32.xlu0 %v3868
    %v3870 = vpop.xlane.xlu0 %3869
    %v3871 = vsel %vm147, %v3863, 0.0
    %3872 = vadd.xlane.f32.xlu0 %v3871
    %v3873 = vpop.xlane.xlu0 %3872
    %v3874 = vsel %vm147, %v3864, 0.0
    %3875 = vadd.xlane.f32.xlu0 %v3874
    %v3876 = vpop.xlane.xlu0 %3875
    %v3877 = vsel %vm147, %v3865, 0.0
    %3878 = vadd.xlane.f32.xlu0 %v3877
    %v3879 = vpop.xlane.xlu0 %3878
    %v3880 = vmul.f32 %v3870, %v1824
    %v3881 = vmul.f32 %v3873, %v1824
    %v3882 = vmul.f32 %v3876, %v1824
    %v3883 = vmul.f32 %v3879, %v1824
    %v3884 = vsub.f32 %v3862, %v3880
    %v3885 = vsub.f32 %v3863, %v3881
    %v3886 = vsub.f32 %v3864, %v3882
    %v3887 = vsub.f32 %v3865, %v3883
    %v3888 = vmul.f32 %v3884, %v3884
    %v3889 = vmul.f32 %v3885, %v3885
    %v3890 = vmul.f32 %v3886, %v3886
    %v3891 = vmul.f32 %v3887, %v3887
    %v3892 = vsel %vm147, %v3888, 0.0
    %3893 = vadd.xlane.f32.xlu0 %v3892
    %v3894 = vpop.xlane.xlu0 %3893
    %v3895 = vsel %vm147, %v3889, 0.0
    %3896 = vadd.xlane.f32.xlu0 %v3895
    %v3897 = vpop.xlane.xlu0 %3896
    %v3898 = vsel %vm147, %v3890, 0.0
    %3899 = vadd.xlane.f32.xlu0 %v3898
    %v3900 = vpop.xlane.xlu0 %3899
    %v3901 = vsel %vm147, %v3891, 0.0
    %3902 = vadd.xlane.f32.xlu0 %v3901
    %v3903 = vpop.xlane.xlu0 %3902
    %v3904 = vmul.f32 %v3894, %v1824
    %v3905 = vmul.f32 %v3897, %v1824
    %v3906 = vmul.f32 %v3900, %v1824
    %v3907 = vmul.f32 %v3903, %v1824
    %v3908 = vadd.f32 %v3904, 1e-05
    %v3909 = vadd.f32 %v3905, 1e-05
    %v3910 = vadd.f32 %v3906, 1e-05
    %v3911 = vadd.f32 %v3907, 1e-05
    %v3912 = vrsqrt.pop %v3908
    %v3913 = vmul.f32 %v3912, %v3908
    %v3914 = vmul.f32 %v3913, %v3912
    %v3915 = vmul.f32 0.5, %v3914
    %v3916 = vsub.f32 1.5, %v3915
    %v3917 = vmul.f32 %v3912, %v3916
    %vm3918 = vweird.f32 %v3908
    %vm3919 = vweird.f32 %v3912
    %vm3920 = vmor %vm3918, %vm3919
    %v3921 = vsel %vm3920, %v3912, %v3917
    %v3922 = vrsqrt.pop %v3909
    %v3923 = vmul.f32 %v3922, %v3909
    %v3924 = vmul.f32 %v3923, %v3922
    %v3925 = vmul.f32 0.5, %v3924
    %v3926 = vsub.f32 1.5, %v3925
    %v3927 = vmul.f32 %v3922, %v3926
    %vm3928 = vweird.f32 %v3909
    %vm3929 = vweird.f32 %v3922
    %vm3930 = vmor %vm3928, %vm3929
    %v3931 = vsel %vm3930, %v3922, %v3927
    %v3932 = vrsqrt.pop %v3910
    %v3933 = vmul.f32 %v3932, %v3910
    %v3934 = vmul.f32 %v3933, %v3932
    %v3935 = vmul.f32 0.5, %v3934
    %v3936 = vsub.f32 1.5, %v3935
    %v3937 = vmul.f32 %v3932, %v3936
    %vm3938 = vweird.f32 %v3910
    %vm3939 = vweird.f32 %v3932
    %vm3940 = vmor %vm3938, %vm3939
    %v3941 = vsel %vm3940, %v3932, %v3937
    %v3942 = vrsqrt.pop %v3911
    %v3943 = vmul.f32 %v3942, %v3911
    %v3944 = vmul.f32 %v3943, %v3942
    %v3945 = vmul.f32 0.5, %v3944
    %v3946 = vsub.f32 1.5, %v3945
    %v3947 = vmul.f32 %v3942, %v3946
    %vm3948 = vweird.f32 %v3911
    %vm3949 = vweird.f32 %v3942
    %vm3950 = vmor %vm3948, %vm3949
    %v3951 = vsel %vm3950, %v3942, %v3947
    %v3952 = vmul.f32 %v3884, %v3921
    %v3953 = vmul.f32 %v3885, %v3931
    %v3954 = vmul.f32 %v3886, %v3941
    %v3955 = vmul.f32 %v3887, %v3951
    %v3956 = vperm.slane %v3866, 0
    %v3957 = vmul.f32 %v3952, %v3956
    %v3958 = vmul.f32 %v3953, %v3956
    %v3959 = vmul.f32 %v3954, %v3956
    %v3960 = vmul.f32 %v3955, %v3956
    %v3961 = vperm.slane %v3867, 0
    %v3962 = vadd.f32 %v3957, %v3961
    %v3963 = vadd.f32 %v3958, %v3961
    %v3964 = vadd.f32 %v3959, %v3961
    %v3965 = vadd.f32 %v3960, %v3961
    %v3966 = vpack.c.bf16 %v3963, %v3962
    %v3967 = vpack.c.bf16 %v3965, %v3964
    %v3968 = vld [vmem:[%s16] sm:$0xff]
    %v3969 = vld [vmem:[%s16 + $0x8] sm:$0xff]
    %v3970 = vld [vmem:[%s16 + $0x10] sm:$0xff]
    %v3971 = vld [vmem:[%s16 + $0x18] sm:$0xff]
    %v3972 = vld [vmem:[%s16 + $0x20] sm:$0xf]
    %v3973 = vld [vmem:[%s16 + $0x24] sm:$0xff]
    %v3974 = vld [vmem:[%s16 + $0x2c] sm:$0xff]
    %v3975 = vld [vmem:[%s16 + $0x34] sm:$0xff]
    %v3976 = vld [vmem:[%s16 + $0x3c] sm:$0xff]
    %v3977 = vld [vmem:[%s16 + $0x44] sm:$0xf]
    %v3978 = vld [vmem:[%s16 + $0x48] sm:$0xff]
    %v3979 = vld [vmem:[%s16 + $0x50] sm:$0xff]
    %v3980 = vld [vmem:[%s16 + $0x58] sm:$0xff]
    %v3981 = vld [vmem:[%s16 + $0x60] sm:$0xff]
    %v3982 = vld [vmem:[%s16 + $0x68] sm:$0xf]
    %v3983 = vld [vmem:[%s16 + $0x6c] sm:$0xff]
    %v3984 = vld [vmem:[%s16 + $0x74] sm:$0xff]
    %v3985 = vld [vmem:[%s16 + $0x7c] sm:$0xff]
    %v3986 = vld [vmem:[%s16 + $0x84] sm:$0xff]
    %v3987 = vld [vmem:[%s16 + $0x8c] sm:$0xf]
    %v3988 = vld [vmem:[%s17] sm:$0xff]
    %v3989 = vld [vmem:[%s17 + $0x8] sm:$0x1]
    %v3992 = vperm.slane %v3988, 0
    %v3993 = vperm.slane %v3988, 1
    %v3994 = vperm.slane %v3988, 2
    %v3995 = vperm.slane %v3988, 3
    %v3996 = vperm.slane %v3988, 4
    %v3997 = vperm.slane %v3988, 5
    %v3998 = vperm.slane %v3988, 6
    %v3999 = vperm.slane %v3988, 7
    %v4000 = vperm.slane %v3989, 0
    %v4030 = vunpack.c.l.b16 %v3968
    %v4031 = vunpack.c.h.b16 %v3968
    %v4032 = vunpack.c.l.b16 %v3969
    %v4033 = vunpack.c.h.b16 %v3969
    %v4034 = vunpack.c.l.b16 %v3970
    %v4035 = vunpack.c.h.b16 %v3970
    %v4036 = vunpack.c.l.b16 %v3971
    %v4037 = vunpack.c.h.b16 %v3971
    %v4038 = vunpack.c.l.b16 %v3972
    %v4039 = vunpack.c.l.b16 %v3973
    %v4040 = vunpack.c.h.b16 %v3973
    %v4041 = vunpack.c.l.b16 %v3974
    %v4042 = vunpack.c.h.b16 %v3974
    %v4043 = vunpack.c.l.b16 %v3975
    %v4044 = vunpack.c.h.b16 %v3975
    %v4045 = vunpack.c.l.b16 %v3976
    %v4046 = vunpack.c.h.b16 %v3976
    %v4047 = vunpack.c.l.b16 %v3977
    %v4048 = vunpack.c.l.b16 %v3978
    %v4049 = vunpack.c.h.b16 %v3978
    %v4050 = vunpack.c.l.b16 %v3979
    %v4051 = vunpack.c.h.b16 %v3979
    %v4052 = vunpack.c.l.b16 %v3980
    %v4053 = vunpack.c.h.b16 %v3980
    %v4054 = vunpack.c.l.b16 %v3981
    %v4055 = vunpack.c.h.b16 %v3981
    %v4056 = vunpack.c.l.b16 %v3982
    %v4057 = vunpack.c.l.b16 %v3983
    %v4058 = vunpack.c.h.b16 %v3983
    %v4059 = vunpack.c.l.b16 %v3984
    %v4060 = vunpack.c.h.b16 %v3984
    %v4061 = vunpack.c.l.b16 %v3985
    %v4062 = vunpack.c.h.b16 %v3985
    %v4063 = vunpack.c.l.b16 %v3986
    %v4064 = vunpack.c.h.b16 %v3986
    %v4065 = vunpack.c.l.b16 %v3987
    %v4066 = vpack.c.b16 %v4039, %v4030
    %v4067 = vpack.c.b16 %v4040, %v4031
    %v4068 = vpack.c.b16 %v4041, %v4032
    %v4069 = vpack.c.b16 %v4042, %v4033
    %v4070 = vpack.c.b16 %v4043, %v4034
    %v4071 = vpack.c.b16 %v4044, %v4035
    %v4072 = vpack.c.b16 %v4045, %v4036
    %v4073 = vpack.c.b16 %v4046, %v4037
    %v4074 = vpack.c.b16 %v4047, %v4038
    %v4075 = vpack.c.b16 %v4057, %v4048
    %v4076 = vpack.c.b16 %v4058, %v4049
    %v4077 = vpack.c.b16 %v4059, %v4050
    %v4078 = vpack.c.b16 %v4060, %v4051
    %v4079 = vpack.c.b16 %v4061, %v4052
    %v4080 = vpack.c.b16 %v4062, %v4053
    %v4081 = vpack.c.b16 %v4063, %v4054
    %v4082 = vpack.c.b16 %v4064, %v4055
    %v4083 = vpack.c.b16 %v4065, %v4056
    %v4103 = vsel %vm147, %v3966, 0
    %v4106 = vsel %vm147, %v3967, 0
    %4108 = vmatpush.bf16.msra.mxu0 0
    %4109 = vmatpush.bf16.msra.mxu0 0
    %4110 = vmatpush.bf16.msra.mxu0 0
    %4111 = vmatpush.bf16.msra.mxu0 0
    %4112 = vmatpush.bf16.msra.mxu0 0
    %4113 = vmatpush.bf16.msra.mxu0 0
    %4114 = vmatpush.bf16.msra.mxu0 %v4075
    %4115 = vmatpush.bf16.msra.mxu0 %v4066
    %4116 = vmatmul.bf16.gmra.mxu0 %v4103
    %v4117 = vpop.f32.mrf.mxu0
    %v4118 = vadd.f32 %v3992, %v4117
    %v4119 = vpop.f32.mrf.mxu0
    %v4120 = vadd.f32 %v3992, %v4119
    %4121 = vmatmul.bf16.gmra.mxu0 %v4106
    %v4122 = vpop.f32.mrf.mxu0
    %v4123 = vadd.f32 %v3992, %v4122
    %v4124 = vpop.f32.mrf.mxu0
    %v4125 = vadd.f32 %v3992, %v4124
    %4126 = vdwg.mxu0
    %4127 = vmatpush.bf16.msra.mxu0 0
    %4128 = vmatpush.bf16.msra.mxu0 0
    %4129 = vmatpush.bf16.msra.mxu0 0
    %4130 = vmatpush.bf16.msra.mxu0 0
    %4131 = vmatpush.bf16.msra.mxu0 0
    %4132 = vmatpush.bf16.msra.mxu0 0
    %4133 = vmatpush.bf16.msra.mxu0 %v4076
    %4134 = vmatpush.bf16.msra.mxu0 %v4067
    %4135 = vmatmul.bf16.gmra.mxu0 %v4103
    %v4136 = vpop.f32.mrf.mxu0
    %v4137 = vadd.f32 %v3993, %v4136
    %v4138 = vpop.f32.mrf.mxu0
    %v4139 = vadd.f32 %v3993, %v4138
    %4140 = vmatmul.bf16.gmra.mxu0 %v4106
    %v4141 = vpop.f32.mrf.mxu0
    %v4142 = vadd.f32 %v3993, %v4141
    %v4143 = vpop.f32.mrf.mxu0
    %v4144 = vadd.f32 %v3993, %v4143
    %4145 = vdwg.mxu0
    %4146 = vmatpush.bf16.msra.mxu0 0
    %4147 = vmatpush.bf16.msra.mxu0 0
    %4148 = vmatpush.bf16.msra.mxu0 0
    %4149 = vmatpush.bf16.msra.mxu0 0
    %4150 = vmatpush.bf16.msra.mxu0 0
    %4151 = vmatpush.bf16.msra.mxu0 0
    %4152 = vmatpush.bf16.msra.mxu0 %v4077
    %4153 = vmatpush.bf16.msra.mxu0 %v4068
    %4154 = vmatmul.bf16.gmra.mxu0 %v4103
    %v4155 = vpop.f32.mrf.mxu0
    %v4156 = vadd.f32 %v3994, %v4155
    %v4157 = vpop.f32.mrf.mxu0
    %v4158 = vadd.f32 %v3994, %v4157
    %4159 = vmatmul.bf16.gmra.mxu0 %v4106
    %v4160 = vpop.f32.mrf.mxu0
    %v4161 = vadd.f32 %v3994, %v4160
    %v4162 = vpop.f32.mrf.mxu0
    %v4163 = vadd.f32 %v3994, %v4162
    %4164 = vdwg.mxu0
    %4165 = vmatpush.bf16.msra.mxu0 0
    %4166 = vmatpush.bf16.msra.mxu0 0
    %4167 = vmatpush.bf16.msra.mxu0 0
    %4168 = vmatpush.bf16.msra.mxu0 0
    %4169 = vmatpush.bf16.msra.mxu0 0
    %4170 = vmatpush.bf16.msra.mxu0 0
    %4171 = vmatpush.bf16.msra.mxu0 %v4078
    %4172 = vmatpush.bf16.msra.mxu0 %v4069
    %4173 = vmatmul.bf16.gmra.mxu0 %v4103
    %v4174 = vpop.f32.mrf.mxu0
    %v4175 = vadd.f32 %v3995, %v4174
    %v4176 = vpop.f32.mrf.mxu0
    %v4177 = vadd.f32 %v3995, %v4176
    %4178 = vmatmul.bf16.gmra.mxu0 %v4106
    %v4179 = vpop.f32.mrf.mxu0
    %v4180 = vadd.f32 %v3995, %v4179
    %v4181 = vpop.f32.mrf.mxu0
    %v4182 = vadd.f32 %v3995, %v4181
    %4183 = vdwg.mxu0
    %4184 = vmatpush.bf16.msra.mxu0 0
    %4185 = vmatpush.bf16.msra.mxu0 0
    %4186 = vmatpush.bf16.msra.mxu0 0
    %4187 = vmatpush.bf16.msra.mxu0 0
    %4188 = vmatpush.bf16.msra.mxu0 0
    %4189 = vmatpush.bf16.msra.mxu0 0
    %4190 = vmatpush.bf16.msra.mxu0 %v4079
    %4191 = vmatpush.bf16.msra.mxu0 %v4070
    %4192 = vmatmul.bf16.gmra.mxu0 %v4103
    %v4193 = vpop.f32.mrf.mxu0
    %v4194 = vadd.f32 %v3996, %v4193
    %v4195 = vpop.f32.mrf.mxu0
    %v4196 = vadd.f32 %v3996, %v4195
    %4197 = vmatmul.bf16.gmra.mxu0 %v4106
    %v4198 = vpop.f32.mrf.mxu0
    %v4199 = vadd.f32 %v3996, %v4198
    %v4200 = vpop.f32.mrf.mxu0
    %v4201 = vadd.f32 %v3996, %v4200
    %4202 = vdwg.mxu0
    %4203 = vmatpush.bf16.msra.mxu0 0
    %4204 = vmatpush.bf16.msra.mxu0 0
    %4205 = vmatpush.bf16.msra.mxu0 0
    %4206 = vmatpush.bf16.msra.mxu0 0
    %4207 = vmatpush.bf16.msra.mxu0 0
    %4208 = vmatpush.bf16.msra.mxu0 0
    %4209 = vmatpush.bf16.msra.mxu0 %v4080
    %4210 = vmatpush.bf16.msra.mxu0 %v4071
    %4211 = vmatmul.bf16.gmra.mxu0 %v4103
    %v4212 = vpop.f32.mrf.mxu0
    %v4213 = vadd.f32 %v3997, %v4212
    %v4214 = vpop.f32.mrf.mxu0
    %v4215 = vadd.f32 %v3997, %v4214
    %4216 = vmatmul.bf16.gmra.mxu0 %v4106
    %v4217 = vpop.f32.mrf.mxu0
    %v4218 = vadd.f32 %v3997, %v4217
    %v4219 = vpop.f32.mrf.mxu0
    %v4220 = vadd.f32 %v3997, %v4219
    %4221 = vdwg.mxu0
    %4222 = vmatpush.bf16.msra.mxu0 0
    %4223 = vmatpush.bf16.msra.mxu0 0
    %4224 = vmatpush.bf16.msra.mxu0 0
    %4225 = vmatpush.bf16.msra.mxu0 0
    %4226 = vmatpush.bf16.msra.mxu0 0
    %4227 = vmatpush.bf16.msra.mxu0 0
    %4228 = vmatpush.bf16.msra.mxu0 %v4081
    %4229 = vmatpush.bf16.msra.mxu0 %v4072
    %4230 = vmatmul.bf16.gmra.mxu0 %v4103
    %v4231 = vpop.f32.mrf.mxu0
    %v4232 = vadd.f32 %v3998, %v4231
    %v4233 = vpop.f32.mrf.mxu0
    %v4234 = vadd.f32 %v3998, %v4233
    %4235 = vmatmul.bf16.gmra.mxu0 %v4106
    %v4236 = vpop.f32.mrf.mxu0
    %v4237 = vadd.f32 %v3998, %v4236
    %v4238 = vpop.f32.mrf.mxu0
    %v4239 = vadd.f32 %v3998, %v4238
    %4240 = vdwg.mxu0
    %4241 = vmatpush.bf16.msra.mxu0 0
    %4242 = vmatpush.bf16.msra.mxu0 0
    %4243 = vmatpush.bf16.msra.mxu0 0
    %4244 = vmatpush.bf16.msra.mxu0 0
    %4245 = vmatpush.bf16.msra.mxu0 0
    %4246 = vmatpush.bf16.msra.mxu0 0
    %4247 = vmatpush.bf16.msra.mxu0 %v4082
    %4248 = vmatpush.bf16.msra.mxu0 %v4073
    %4249 = vmatmul.bf16.gmra.mxu0 %v4103
    %v4250 = vpop.f32.mrf.mxu0
    %v4251 = vadd.f32 %v3999, %v4250
    %v4252 = vpop.f32.mrf.mxu0
    %v4253 = vadd.f32 %v3999, %v4252
    %4254 = vmatmul.bf16.gmra.mxu0 %v4106
    %v4255 = vpop.f32.mrf.mxu0
    %v4256 = vadd.f32 %v3999, %v4255
    %v4257 = vpop.f32.mrf.mxu0
    %v4258 = vadd.f32 %v3999, %v4257
    %4259 = vdwg.mxu0
    %4260 = vmatpush.bf16.msra.mxu0 0
    %4261 = vmatpush.bf16.msra.mxu0 0
    %4262 = vmatpush.bf16.msra.mxu0 0
    %4263 = vmatpush.bf16.msra.mxu0 0
    %4264 = vmatpush.bf16.msra.mxu0 0
    %4265 = vmatpush.bf16.msra.mxu0 0
    %4266 = vmatpush.bf16.msra.mxu0 %v4083
    %4267 = vmatpush.bf16.msra.mxu0 %v4074
    %4268 = vmatmul.bf16.gmra.mxu0 %v4103
    %v4269 = vpop.f32.mrf.mxu0
    %v4270 = vadd.f32 %v4000, %v4269
    %v4271 = vpop.f32.mrf.mxu0
    %v4272 = vadd.f32 %v4000, %v4271
    %4273 = vmatmul.bf16.gmra.mxu0 %v4106
    %v4274 = vpop.f32.mrf.mxu0
    %v4275 = vadd.f32 %v4000, %v4274
    %v4276 = vpop.f32.mrf.mxu0
    %v4277 = vadd.f32 %v4000, %v4276
    %4278 = vdwg.mxu0
    %4279 = vst [vmem:[#allocation3] sm:$0xff] %v4118
    %4280 = vst [vmem:[#allocation3 + $0x8] sm:$0xff] %v4137
    %4281 = vst [vmem:[#allocation3 + $0x10] sm:$0xff] %v4156
    %4282 = vst [vmem:[#allocation3 + $0x18] sm:$0xff] %v4175
    %4283 = vst [vmem:[#allocation3 + $0x20] sm:$0xff] %v4194
    %4284 = vst [vmem:[#allocation3 + $0x28] sm:$0xff] %v4213
    %4285 = vst [vmem:[#allocation3 + $0x30] sm:$0xff] %v4232
    %4286 = vst [vmem:[#allocation3 + $0x38] sm:$0xff] %v4251
    %4287 = vst [vmem:[#allocation3 + $0x40] sm:$0xff] %v4270
    %4288 = vst [vmem:[#allocation3 + $0x48] sm:$0xff] %v4120
    %4289 = vst [vmem:[#allocation3 + $0x50] sm:$0xff] %v4139
    %4290 = vst [vmem:[#allocation3 + $0x58] sm:$0xff] %v4158
    %4291 = vst [vmem:[#allocation3 + $0x60] sm:$0xff] %v4177
    %4292 = vst [vmem:[#allocation3 + $0x68] sm:$0xff] %v4196
    %4293 = vst [vmem:[#allocation3 + $0x70] sm:$0xff] %v4215
    %4294 = vst [vmem:[#allocation3 + $0x78] sm:$0xff] %v4234
    %4295 = vst [vmem:[#allocation3 + $0x80] sm:$0xff] %v4253
    %4296 = vst [vmem:[#allocation3 + $0x88] sm:$0xff] %v4272
    %4297 = vst [vmem:[#allocation3 + $0x90] sm:$0xff] %v4123
    %4298 = vst [vmem:[#allocation3 + $0x98] sm:$0xff] %v4142
    %4299 = vst [vmem:[#allocation3 + $0xa0] sm:$0xff] %v4161
    %4300 = vst [vmem:[#allocation3 + $0xa8] sm:$0xff] %v4180
    %4301 = vst [vmem:[#allocation3 + $0xb0] sm:$0xff] %v4199
    %4302 = vst [vmem:[#allocation3 + $0xb8] sm:$0xff] %v4218
    %4303 = vst [vmem:[#allocation3 + $0xc0] sm:$0xff] %v4237
    %4304 = vst [vmem:[#allocation3 + $0xc8] sm:$0xff] %v4256
    %4305 = vst [vmem:[#allocation3 + $0xd0] sm:$0xff] %v4275
    %4306 = vst [vmem:[#allocation3 + $0xd8] sm:$0xff] %v4125
    %4307 = vst [vmem:[#allocation3 + $0xe0] sm:$0xff] %v4144
    %4308 = vst [vmem:[#allocation3 + $0xe8] sm:$0xff] %v4163
    %4309 = vst [vmem:[#allocation3 + $0xf0] sm:$0xff] %v4182
    %4310 = vst [vmem:[#allocation3 + $0xf8] sm:$0xff] %v4201
    %4311 = vst [vmem:[#allocation3 + $0x100] sm:$0xff] %v4220
    %4312 = vst [vmem:[#allocation3 + $0x108] sm:$0xff] %v4239
    %4313 = vst [vmem:[#allocation3 + $0x110] sm:$0xff] %v4258
    %4314 = vst [vmem:[#allocation3 + $0x118] sm:$0xff] %v4277
    // Predicated region
    $region74: #{maskgit_forward.3} parent=1 // pred_check
      _
    $region75: #{maskgit_forward.3} parent=1 // pred_check_branch
      %4316 = sbr.rel (0) target = $region77
    $region76: #{maskgit_forward.3} parent=1 // pred_region
      _
    $region77: #{maskgit_forward.3} parent=1 // pred_fallthru
      _
    // Predicated region
    $region78: #{maskgit_forward.3} parent=1 // pred_check
      _
    $region79: #{maskgit_forward.3} parent=1 // pred_check_branch
      %4318 = sbr.rel (0) target = $region81
    $region80: #{maskgit_forward.3} parent=1 // pred_region
      %4320 = vsyncadd [#allocation4], 0
      %s4321 = sshll.u32 [#allocation3], 4
      %s4322 = int_to_ptr.vmem [resolvable:$true] %s4321
      %s4323 = sshll.u32 %s19, 4
      %s4324 = int_to_ptr.hbm [resolvable:$true] %s4323
      %4329 = dma.vmem_to_hbm [thread:$0]  %s4322, 4608, %s4324, [#allocation4], 1152, 1152, 72
    $region81: #{maskgit_forward.3} parent=1 // pred_fallthru
      _
    // Predicated region
    $region82: #{maskgit_forward.3} parent=1 // pred_check
      _
    $region83: #{maskgit_forward.3} parent=1 // pred_check_branch
      %4331 = sbr.rel (0) target = $region85
    $region84: #{maskgit_forward.3} parent=1 // pred_region
      _
    $region85: #{maskgit_forward.3} parent=1 // pred_fallthru
      _
    // Predicated region
    $region86: #{maskgit_forward.3} parent=1 // pred_check
      _
    $region87: #{maskgit_forward.3} parent=1 // pred_check_branch
      %4333 = sbr.rel (0) target = $region89
    $region88: #{maskgit_forward.3} parent=1 // pred_region
      %4335 = dma.done [#allocation4], 4608
    $region89: #{maskgit_forward.3} parent=1 // pred_fallthru
      _
    %4336 = vsyncpa [#allocation4], 1

</llo_original>
